<compile_context>
chip_gen: v7x
topology: tpu7x:2x2x1
jax: 0.10.0
libtpu: 0.0.40
codegen_flags: <defaults>
</compile_context>

<pallas_src>
import math
import itertools
import numpy as np
import jax
import jax.numpy as jnp
from jax.experimental import pallas as pl
from jax.experimental.pallas import tpu as pltpu

EPS = 1e-6


# ---------------------------------------------------------------------------
# Clifford algebra tables (compile-time constants), Cl(3,0) Euclidean.
# Blade order: (1, e1, e2, e3, e12, e13, e23, e123); grades [0,1,1,1,2,2,2,3].
# ---------------------------------------------------------------------------
def build_algebra(metric=(1.0, 1.0, 1.0)):
    d = len(metric)
    blades = [()]
    for g in range(1, d + 1):
        blades += list(itertools.combinations(range(d), g))
    nb = len(blades)
    index = {b: i for i, b in enumerate(blades)}

    def blade_mul(a, b):
        arr = list(a) + list(b)
        swaps = 0
        for p in range(len(arr)):
            for q in range(len(arr) - 1):
                if arr[q] > arr[q + 1]:
                    arr[q], arr[q + 1] = arr[q + 1], arr[q]
                    swaps += 1
        coef = (-1.0) ** swaps
        out, p = [], 0
        while p < len(arr):
            if p + 1 < len(arr) and arr[p] == arr[p + 1]:
                coef *= metric[arr[p]]
                p += 2
            else:
                out.append(arr[p])
                p += 1
        return tuple(out), coef

    # cayley[i, j, k]: coefficient of e_j in e_i * e_k  (einsum '...i,ijk,...k->...j')
    cayley = np.zeros((nb, nb, nb), np.float32)
    for i, bi in enumerate(blades):
        for k, bk in enumerate(blades):
            bj, c = blade_mul(bi, bk)
            cayley[i, index[bj], k] += c

    grade_of = np.array([len(b) for b in blades])
    subspaces = np.array([int(np.sum(grade_of == g)) for g in range(d + 1)])
    starts = np.concatenate([[0], np.cumsum(subspaces)])
    gslices = [slice(int(starts[g]), int(starts[g + 1])) for g in range(d + 1)]

    n_sub = d + 1
    paths = np.zeros((n_sub, n_sub, n_sub), bool)
    for gi in range(n_sub):
        for gj in range(n_sub):
            for gk in range(n_sub):
                paths[gi, gj, gk] = np.any(
                    cayley[gslices[gi], gslices[gj], gslices[gk]] != 0)
    return dict(dim=d, n_blades=nb, cayley=cayley, grade_of=grade_of,
                subspaces=subspaces, paths=paths)


ALG = build_algebra()
GRADE_OF = ALG["grade_of"]                       # (8,)  blade -> grade
CAYLEY = ALG["cayley"]                           # (8, 8, 8)
PATHS = ALG["paths"]                             # (4, 4, 4) bool
N_PATHS = int(PATHS.sum())


# ---------------------------------------------------------------------------
# Parameters (deterministic init, matching the torch module's reset_parameters).
# Matmul weights are rounded through bf16 once at init so the bf16 kernel
# weights and the f32 reference use bit-identical values.
# ---------------------------------------------------------------------------
def init_block_params(key, in_f, out_f):
    k = jax.random.split(key, 4)

    def rnd_bf16(x):
        return x.astype(jnp.bfloat16).astype(jnp.float32)

    return dict(
        # MVLinear(in_f -> out_f), subspaces=True, bias=True (bias init zeros)
        w1=rnd_bf16(jax.random.normal(k[0], (out_f, in_f, 4)) / math.sqrt(in_f)),
        b1=jnp.zeros((out_f,), jnp.float32),
        # MVSiLU(out_f): a = ones, b = zeros, shape (channels, dim+1)
        a_silu=jnp.ones((out_f, 4), jnp.float32),
        b_silu=jnp.zeros((out_f, 4), jnp.float32),
        # SGP.linear_right (no bias) / NormalizationLayer (a = 0) / linear_left (bias)
        wr=rnd_bf16(jax.random.normal(k[1], (out_f, out_f, 4)) / math.sqrt(out_f)),
        a_nrm=jnp.zeros((out_f, 4), jnp.float32),
        wl=rnd_bf16(jax.random.normal(k[2], (out_f, out_f, 4)) / math.sqrt(out_f)),
        bl=jnp.zeros((out_f,), jnp.float32),
        # SGP geometric-product weight, std = 1/sqrt(dim+1)
        w_gp=rnd_bf16(jax.random.normal(k[3], (out_f, N_PATHS)) * (1.0 / math.sqrt(4.0))),
        # MVLayerNorm
        a_ln=jnp.ones((out_f,), jnp.float32),
    )


def expand_block_params(p):
    """Expand grade-parameterised torch-layout params into flat blade-major,
    matmul-ready kernel operands (all structural matrices built host-side)."""
    N = p["a_ln"].shape[0]                       # out_features
    g = GRADE_OF
    eyeN = np.eye(N, dtype=np.float32)

    # ---- MVLinear weights -> block-diagonal (8*in, 8*out) matrices ----------
    # flat layout: feature index = blade*channels + channel
    def block_diag(w):
        wnp = np.asarray(w, np.float32)          # (out, in, 4)
        fo, fi = wnp.shape[0], wnp.shape[1]
        wb = np.zeros((8 * fi, 8 * fo), np.float32)
        for i in range(8):
            wb[i * fi:(i + 1) * fi, i * fo:(i + 1) * fo] = wnp[:, :, g[i]].T
        return wb

    w1_bd = block_diag(p["w1"])
    wr_bd = block_diag(p["wr"])
    wl_bd = block_diag(p["wl"])

    # ---- structural 0/1 matrices (grade gather / blade broadcast / reduce) --
    onehot = np.zeros((8, 4), np.float32)
    onehot[np.arange(8), g] = 1.0
    Gq = np.kron(onehot, eyeN)                                 # (8N,4N): per-grade sum of squared blades
    G123 = np.kron(onehot * (g >= 1)[:, None].astype(np.float32), eyeN)
    G0 = np.kron((np.arange(8)[:, None] == 0).astype(np.float32) *
                 (np.arange(4)[None, :] == 0).astype(np.float32), eyeN)  # scalar blade -> grade-0 slot
    E = np.ascontiguousarray(Gq.T)                             # (4N,8N): grade values -> their blades
    Rsum = np.kron(np.ones((8, 1), np.float32), eyeN)          # (8N, N): sum over all blades

    # ---- geometric-product operands -----------------------------------------
    #   H_big = h @ T : H_big[:, (i*8+j)*N+n] = h[:, i*N+n]
    #   R_big = r @ A : R_big[:, (i*8+j)*N+n] = sum_k C[i,j,k] W[n,gi,gj,gk] r[:, k*N+n]
    #   gp    = (H_big*R_big) @ S : sums over i  ->  gp[:, j*N+n]
    w_full = np.zeros((N, 4, 4, 4), np.float32)
    w_full[:, PATHS] = np.asarray(p["w_gp"], np.float32)
    T = np.kron(np.kron(np.eye(8, dtype=np.float32), np.ones((1, 8), np.float32)), eyeN)
    S = np.kron(np.kron(np.ones((8, 1), np.float32), np.eye(8, dtype=np.float32)), eyeN)
    A = np.zeros((8 * N, 64 * N), np.float32)
    for i in range(8):
        for j in range(8):
            col = (i * 8 + j) * N
            for k in range(8):
                c = float(CAYLEY[i, j, k])
                if c != 0.0:
                    A[k * N:(k + 1) * N, col:col + N] += np.diag(
                        c * w_full[:, g[i], g[j], g[k]])

    # fuse linear_right | linear_left | blade-broadcast into one matmul RHS
    w2 = np.concatenate([wr_bd, wl_bd, T], axis=1)             # (8N, 80N)

    def scalar_embed(b):      # bias on the scalar blade only -> (1, 8N)
        out = np.zeros((1, 8 * N), np.float32)
        out[0, :N] = np.asarray(b, np.float32)
        return jnp.asarray(out)

    def grade_flat(v):        # (channels, 4) -> (1, 4N) grade-major flat
        return jnp.asarray(np.asarray(v, np.float32).T.reshape(1, 4 * N))

    return dict(
        w1_bd=jnp.asarray(w1_bd, jnp.bfloat16),                # real weights: bf16
        b1=scalar_embed(p["b1"]),
        a4=grade_flat(p["a_silu"]),
        b4=grade_flat(p["b_silu"]),
        G0=jnp.asarray(G0), G123=jnp.asarray(G123), E=jnp.asarray(E),
        w2=jnp.asarray(w2, jnp.bfloat16),
        sa4=grade_flat(jax.nn.sigmoid(p["a_nrm"])),
        Gq=jnp.asarray(Gq),
        bl=scalar_embed(p["bl"]),
        A=jnp.asarray(A, jnp.bfloat16),
        S=jnp.asarray(S),
        R=jnp.asarray(Rsum),
        a_ln=jnp.asarray(np.tile(np.asarray(p["a_ln"], np.float32)[None, :], (1, 8))),
    )


# ---------------------------------------------------------------------------
# Pallas kernel: one fused CEMLP block on flat blade-major multivectors.
# ---------------------------------------------------------------------------
def make_block_kernel(N, inv_sqrt2):
    F = 8 * N

    def kernel(x_ref, w1_ref, b1_ref, a4_ref, b4_ref, g0_ref, g123_ref,
               e_ref, w2_ref, sa4_ref, gq_ref, bl_ref, abig_ref, s_ref,
               rsum_ref, aln_ref, o_ref):
        f32, bf16 = jnp.float32, jnp.bfloat16

        def sas(q):           # smooth_abs_sqrt: (q^2 + 1e-16)^(1/4)
            return jnp.sqrt(jnp.sqrt(q * q + 1e-16))

        x = x_ref[...]                                               # (TB, 8M) f32

        # ---- MVLinear: all 8 blades in ONE block-diagonal matmul ------------
        h = jnp.dot(x.astype(bf16), w1_ref[...],
                    preferred_element_type=f32) + b1_ref[...]        # (TB, 8N)

        # ---- MVSiLU: per-grade invariants & gates (4 groups, not 8) ---------
        hsq = h * h
        inv4 = (jnp.dot(h, g0_ref[...], preferred_element_type=f32) +
                jnp.dot(hsq, g123_ref[...], preferred_element_type=f32))     # (TB, 4N)
        gate4 = jax.nn.sigmoid(a4_ref[...] * inv4 + b4_ref[...])
        gate = jnp.dot(gate4, e_ref[...], preferred_element_type=f32)        # (TB, 8N)
        h = gate * h

        # ---- SGP: fused [linear_right | linear_left | blade-broadcast] ------
        hrl = jnp.dot(h.astype(bf16), w2_ref[...],
                      preferred_element_type=f32)                    # (TB, 80N)
        r_raw = hrl[:, :F]
        left = hrl[:, F:2 * F] + bl_ref[...]
        h_big = hrl[:, 2 * F:]                                       # (TB, 64N)

        # NormalizationLayer on r: per-grade sas norms, blade-broadcast denom
        q4 = jnp.dot(r_raw * r_raw, gq_ref[...], preferred_element_type=f32)  # (TB, 4N)
        d4 = sa4_ref[...] * (sas(q4) - 1.0) + (1.0 + EPS)
        den = jnp.dot(d4, e_ref[...], preferred_element_type=f32)    # (TB, 8N)
        r = r_raw * pl.reciprocal(den, approx=True)

        # geometric product: gp[:, jN+n] = sum_{i,k} C[i,j,k] W[n,..] h_i r_k
        # = (h broadcast over j)  *  (cayley/weight-mixed r), reduced over i.
        r_big = jnp.dot(r.astype(bf16), abig_ref[...],
                        preferred_element_type=f32)                  # (TB, 64N)
        gp = jnp.dot(h_big * r_big, s_ref[...],
                     preferred_element_type=f32)                     # (TB, 8N)
        y = (left + gp) * inv_sqrt2

        # ---- MVLayerNorm -----------------------------------------------------
        qall = jnp.dot(y * y, rsum_ref[...], preferred_element_type=f32)      # (TB, N)
        nm = jnp.mean(sas(qall), axis=-1, keepdims=True) + EPS                # (TB, 1)
        o_ref[...] = (aln_ref[...] * y *
                      pl.reciprocal(nm, approx=True)).astype(o_ref.dtype)

    return kernel


def _round_up(x, m):
    return ((x + m - 1) // m) * m


def cemlp_block_pallas(x_flat, ep, tb=None):
    """One fused CEMLP block.  x_flat: (B, 8*in_f) blade-major -> (B, 8*out_f)."""
    B, f_in = x_flat.shape
    F = ep["w1_bd"].shape[1]                     # 8 * out_features
    N = F // 8

    # Largest reasonable batch tile; single grid step for small batches.
    # (For large B, 256-row tiles give a multi-step grid -> friendlier to the
    #  two v7x TensorCores via the "parallel" dimension semantics below.)
    if tb is None:
        tb = _round_up(B, 8) if B <= 512 else 256
    Bp = _round_up(B, tb)                        # pad instead of dropping a tail
    x_pad = jnp.pad(x_flat, ((0, Bp - B), (0, 0))) if Bp != B else x_flat

    operands = (x_pad, ep["w1_bd"], ep["b1"], ep["a4"], ep["b4"], ep["G0"],
                ep["G123"], ep["E"], ep["w2"], ep["sa4"], ep["Gq"], ep["bl"],
                ep["A"], ep["S"], ep["R"], ep["a_ln"])

    def full_spec(a):
        nd = a.ndim
        return pl.BlockSpec(a.shape, lambda b, _nd=nd: (0,) * _nd)

    in_specs = [pl.BlockSpec((tb, f_in), lambda b: (b, 0))]
    in_specs += [full_spec(a) for a in operands[1:]]

    out = pl.pallas_call(
        make_block_kernel(N, 1.0 / math.sqrt(2.0)),
        out_shape=jax.ShapeDtypeStruct((Bp, F), jnp.float32),
        grid=(Bp // tb,),
        in_specs=in_specs,
        out_specs=pl.BlockSpec((tb, F), lambda b: (b, 0)),
        compiler_params=pltpu.CompilerParams(
            dimension_semantics=("parallel",)),
    )(*operands)
    return out[:B] if Bp != B else out


# Boundary-only layout conversions (kept out of the per-block path).
def mv_to_flat(x_bci):                 # (B, C, 8) -> (B, 8C), blade-major
    B = x_bci.shape[0]
    return jnp.transpose(x_bci, (0, 2, 1)).reshape(B, -1)


def flat_to_mv(x_flat, channels):      # (B, 8C) -> (B, C, 8)
    B = x_flat.shape[0]
    return jnp.transpose(x_flat.reshape(B, 8, channels), (0, 2, 1))


# ---------------------------------------------------------------------------
# Pure-JAX reference (torch semantics, (B, C, 8) layout) for validation
# ---------------------------------------------------------------------------
def _sas(q):
    return jnp.sqrt(jnp.sqrt(q * q + 1e-16))


def mvlinear_ref(x, w, bias):
    we = w[:, :, GRADE_OF]                                           # (N, M, 8)
    y = jnp.einsum("bmi,nmi->bni", x, we)
    if bias is not None:
        emb = jnp.zeros((1, w.shape[0], 8), jnp.float32).at[:, :, 0].set(bias)
        y = y + emb
    return y


def mvsilu_ref(x, a, b):
    q1 = jnp.sum(x[..., 1:4] ** 2, -1, keepdims=True)
    q2 = jnp.sum(x[..., 4:7] ** 2, -1, keepdims=True)
    q3 = x[..., 7:8] ** 2
    inv = jnp.concatenate([x[..., 0:1], q1, q2, q3], -1)
    val = a[None] * inv + b[None]
    return jax.nn.sigmoid(val[..., GRADE_OF]) * x


def norm_layer_ref(x, a):
    q0 = x[..., 0:1] ** 2
    q1 = jnp.sum(x[..., 1:4] ** 2, -1, keepdims=True)
    q2 = jnp.sum(x[..., 4:7] ** 2, -1, keepdims=True)
    q3 = x[..., 7:8] ** 2
    norms = jnp.concatenate([_sas(q0), _sas(q1), _sas(q2), _sas(q3)], -1)
    norms = jax.nn.sigmoid(a)[None] * (norms - 1.0) + 1.0
    return x / (norms[..., GRADE_OF] + EPS)


def sgp_ref(x, p):
    r = norm_layer_ref(mvlinear_ref(x, p["wr"], None), p["a_nrm"])
    left = mvlinear_ref(x, p["wl"], p["bl"])
    N = p["a_ln"].shape[0]
    w_full = np.zeros((N, 4, 4, 4), np.float32)
    w_full[:, PATHS] = np.asarray(p["w_gp"])
    Wg = CAYLEY[None] * w_full[:, GRADE_OF][:, :, GRADE_OF][:, :, :, GRADE_OF]
    gp = jnp.einsum("bni,nijk,bnk->bnj", x, jnp.asarray(Wg), r)
    return (left + gp) / math.sqrt(2.0)


def mvln_ref(x, a):
    nrm = _sas(jnp.sum(x ** 2, -1, keepdims=True))
    nm = jnp.mean(nrm, axis=1, keepdims=True) + EPS
    return a[None, :, None] * x / nm


def block_ref(x, p):
    h = mvlinear_ref(x, p["w1"], p["b1"])
    h = mvsilu_ref(h, p["a_silu"], p["b_silu"])
    h = sgp_ref(h, p)
    return mvln_ref(h, p["a_ln"])


# ---------------------------------------------------------------------------
if __name__ == "__main__":
    key = jax.random.PRNGKey(0)
    B, in_f, hidden_f, out_f = 16, 4, 8, 4          # n_layers = 2
    kx, k1, k2 = jax.random.split(key, 3)
    x = jax.random.normal(kx, (B, in_f, 8), jnp.float32)

    p1 = init_block_params(k1, in_f, hidden_f)
    p2 = init_block_params(k2, hidden_f, out_f)
    ep1 = expand_block_params(p1)
    ep2 = expand_block_params(p2)

    @jax.jit
    def cemlp_pallas(xin):
        h = mv_to_flat(xin)                # layout change only at the boundary
        h = cemlp_block_pallas(h, ep1)
        h = cemlp_block_pallas(h, ep2)
        return flat_to_mv(h, out_f)

    y = jax.block_until_ready(cemlp_pallas(x))
    y_ref = jax.block_until_ready(block_ref(block_ref(x, p1), p2))

    err = float(jnp.max(jnp.abs(y - y_ref)))
    ref_scale = float(jnp.max(jnp.abs(y_ref)))

    assert y.shape == (B, out_f, 8)
    assert np.isfinite(np.asarray(y)).all()
    # bf16 matmul inputs + approx reciprocals vs. the f32 reference
    assert err <= 5e-2 * max(1.0, ref_scale), f"err={err}, ref_scale={ref_scale}"
    print("KERNEL_OK")
</pallas_src>

<mosaic_0001>
module attributes {stable_mosaic.version = 11 : i64} {
  func.func @kernel(%arg0: i32, %arg1: memref<16x32xf32, #tpu.memory_space<vmem>>, %arg2: memref<32x64xbf16, #tpu.memory_space<vmem>>, %arg3: memref<1x64xf32, #tpu.memory_space<vmem>>, %arg4: memref<1x32xf32, #tpu.memory_space<vmem>>, %arg5: memref<1x32xf32, #tpu.memory_space<vmem>>, %arg6: memref<64x32xf32, #tpu.memory_space<vmem>>, %arg7: memref<64x32xf32, #tpu.memory_space<vmem>>, %arg8: memref<32x64xf32, #tpu.memory_space<vmem>>, %arg9: memref<64x640xbf16, #tpu.memory_space<vmem>>, %arg10: memref<1x32xf32, #tpu.memory_space<vmem>>, %arg11: memref<64x32xf32, #tpu.memory_space<vmem>>, %arg12: memref<1x64xf32, #tpu.memory_space<vmem>>, %arg13: memref<64x512xbf16, #tpu.memory_space<vmem>>, %arg14: memref<512x64xf32, #tpu.memory_space<vmem>>, %arg15: memref<64x8xf32, #tpu.memory_space<vmem>>, %arg16: memref<1x64xf32, #tpu.memory_space<vmem>>, %arg17: memref<16x64xf32, #tpu.memory_space<vmem>>) attributes {dimension_semantics = [#tpu.dimension_semantics<parallel>], iteration_bounds = array<i64: 1>, scalar_prefetch = 0 : i64, scratch_operands = 0 : i64, tpu.core_type = #tpu.core_type<tc>, window_params = [{transform_indices = @transform_0, window_bounds = array<i64: 16, 32>}, {pipeline_mode = #tpu.pipeline_mode<synchronous>, transform_indices = @transform_1, window_bounds = array<i64: 32, 64>}, {pipeline_mode = #tpu.pipeline_mode<synchronous>, transform_indices = @transform_2, window_bounds = array<i64: 1, 64>}, {pipeline_mode = #tpu.pipeline_mode<synchronous>, transform_indices = @transform_3, window_bounds = array<i64: 1, 32>}, {pipeline_mode = #tpu.pipeline_mode<synchronous>, transform_indices = @transform_4, window_bounds = array<i64: 1, 32>}, {pipeline_mode = #tpu.pipeline_mode<synchronous>, transform_indices = @transform_5, window_bounds = array<i64: 64, 32>}, {pipeline_mode = #tpu.pipeline_mode<synchronous>, transform_indices = @transform_6, window_bounds = array<i64: 64, 32>}, {pipeline_mode = #tpu.pipeline_mode<synchronous>, transform_indices = @transform_7, window_bounds = array<i64: 32, 64>}, {pipeline_mode = #tpu.pipeline_mode<synchronous>, transform_indices = @transform_8, window_bounds = array<i64: 64, 640>}, {pipeline_mode = #tpu.pipeline_mode<synchronous>, transform_indices = @transform_9, window_bounds = array<i64: 1, 32>}, {pipeline_mode = #tpu.pipeline_mode<synchronous>, transform_indices = @transform_10, window_bounds = array<i64: 64, 32>}, {pipeline_mode = #tpu.pipeline_mode<synchronous>, transform_indices = @transform_11, window_bounds = array<i64: 1, 64>}, {pipeline_mode = #tpu.pipeline_mode<synchronous>, transform_indices = @transform_12, window_bounds = array<i64: 64, 512>}, {pipeline_mode = #tpu.pipeline_mode<synchronous>, transform_indices = @transform_13, window_bounds = array<i64: 512, 64>}, {pipeline_mode = #tpu.pipeline_mode<synchronous>, transform_indices = @transform_14, window_bounds = array<i64: 64, 8>}, {pipeline_mode = #tpu.pipeline_mode<synchronous>, transform_indices = @transform_15, window_bounds = array<i64: 1, 64>}, {transform_indices = @transform_16, window_bounds = array<i64: 16, 64>}]} {
    %c0 = arith.constant 0 : index
    %c0_0 = arith.constant 0 : index
    %0 = vector.load %arg1[%c0, %c0_0] : memref<16x32xf32, #tpu.memory_space<vmem>>, vector<16x32xf32>
    %1 = arith.truncf %0 : vector<16x32xf32> to vector<16x32xbf16>
    %c0_1 = arith.constant 0 : index
    %c0_2 = arith.constant 0 : index
    %2 = vector.load %arg2[%c0_1, %c0_2] : memref<32x64xbf16, #tpu.memory_space<vmem>>, vector<32x64xbf16>
    %cst = arith.constant dense<0.000000e+00> : vector<16x64xf32>
    %3 = tpu.matmul %1, %2, %cst {dimension_numbers = #tpu.dot_dimension_numbers<[1], [0], [0], [1], [0, 0, 1, 1], [], []>} : vector<16x32xbf16>, vector<32x64xbf16>, vector<16x64xf32> -> vector<16x64xf32>
    %c0_3 = arith.constant 0 : index
    %c0_4 = arith.constant 0 : index
    %4 = vector.load %arg3[%c0_3, %c0_4] : memref<1x64xf32, #tpu.memory_space<vmem>>, vector<1x64xf32>
    %5 = vector.broadcast %4 : vector<1x64xf32> to vector<16x64xf32>
    %6 = arith.addf %3, %5 : vector<16x64xf32>
    %7 = arith.mulf %6, %6 : vector<16x64xf32>
    %c0_5 = arith.constant 0 : index
    %c0_6 = arith.constant 0 : index
    %8 = vector.load %arg6[%c0_5, %c0_6] : memref<64x32xf32, #tpu.memory_space<vmem>>, vector<64x32xf32>
    %cst_7 = arith.constant dense<0.000000e+00> : vector<16x32xf32>
    %9 = tpu.matmul %6, %8, %cst_7 {dimension_numbers = #tpu.dot_dimension_numbers<[1], [0], [0], [1], [0, 0, 1, 1], [], []>} : vector<16x64xf32>, vector<64x32xf32>, vector<16x32xf32> -> vector<16x32xf32>
    %c0_8 = arith.constant 0 : index
    %c0_9 = arith.constant 0 : index
    %10 = vector.load %arg7[%c0_8, %c0_9] : memref<64x32xf32, #tpu.memory_space<vmem>>, vector<64x32xf32>
    %cst_10 = arith.constant dense<0.000000e+00> : vector<16x32xf32>
    %11 = tpu.matmul %7, %10, %cst_10 {dimension_numbers = #tpu.dot_dimension_numbers<[1], [0], [0], [1], [0, 0, 1, 1], [], []>} : vector<16x64xf32>, vector<64x32xf32>, vector<16x32xf32> -> vector<16x32xf32>
    %12 = arith.addf %9, %11 : vector<16x32xf32>
    %c0_11 = arith.constant 0 : index
    %c0_12 = arith.constant 0 : index
    %13 = vector.load %arg4[%c0_11, %c0_12] : memref<1x32xf32, #tpu.memory_space<vmem>>, vector<1x32xf32>
    %14 = vector.broadcast %13 : vector<1x32xf32> to vector<16x32xf32>
    %15 = arith.mulf %14, %12 : vector<16x32xf32>
    %c0_13 = arith.constant 0 : index
    %c0_14 = arith.constant 0 : index
    %16 = vector.load %arg5[%c0_13, %c0_14] : memref<1x32xf32, #tpu.memory_space<vmem>>, vector<1x32xf32>
    %17 = vector.broadcast %16 : vector<1x32xf32> to vector<16x32xf32>
    %18 = arith.addf %15, %17 : vector<16x32xf32>
    %19 = arith.negf %18 : vector<16x32xf32>
    %20 = math.exp %19 : vector<16x32xf32>
    %cst_15 = arith.constant 1.000000e+00 : f32
    %21 = vector.broadcast %cst_15 : f32 to vector<16x32xf32>
    %22 = arith.addf %21, %20 : vector<16x32xf32>
    %23 = arith.divf %21, %22 : vector<16x32xf32>
    %c0_16 = arith.constant 0 : index
    %c0_17 = arith.constant 0 : index
    %24 = vector.load %arg8[%c0_16, %c0_17] : memref<32x64xf32, #tpu.memory_space<vmem>>, vector<32x64xf32>
    %cst_18 = arith.constant dense<0.000000e+00> : vector<16x64xf32>
    %25 = tpu.matmul %23, %24, %cst_18 {dimension_numbers = #tpu.dot_dimension_numbers<[1], [0], [0], [1], [0, 0, 1, 1], [], []>} : vector<16x32xf32>, vector<32x64xf32>, vector<16x64xf32> -> vector<16x64xf32>
    %26 = arith.mulf %25, %6 : vector<16x64xf32>
    %27 = arith.truncf %26 : vector<16x64xf32> to vector<16x64xbf16>
    %c0_19 = arith.constant 0 : index
    %c0_20 = arith.constant 0 : index
    %28 = vector.load %arg9[%c0_19, %c0_20] : memref<64x640xbf16, #tpu.memory_space<vmem>>, vector<64x640xbf16>
    %cst_21 = arith.constant dense<0.000000e+00> : vector<16x640xf32>
    %29 = tpu.matmul %27, %28, %cst_21 {dimension_numbers = #tpu.dot_dimension_numbers<[1], [0], [0], [1], [0, 0, 1, 1], [], []>} : vector<16x64xbf16>, vector<64x640xbf16>, vector<16x640xf32> -> vector<16x640xf32>
    %30 = vector.extract_strided_slice %29 {offsets = [0, 0], sizes = [16, 64], strides = [1, 1]} : vector<16x640xf32> to vector<16x64xf32>
    %31 = vector.extract_strided_slice %29 {offsets = [0, 64], sizes = [16, 64], strides = [1, 1]} : vector<16x640xf32> to vector<16x64xf32>
    %c0_22 = arith.constant 0 : index
    %c0_23 = arith.constant 0 : index
    %32 = vector.load %arg12[%c0_22, %c0_23] : memref<1x64xf32, #tpu.memory_space<vmem>>, vector<1x64xf32>
    %33 = vector.broadcast %32 : vector<1x64xf32> to vector<16x64xf32>
    %34 = arith.addf %31, %33 : vector<16x64xf32>
    %35 = vector.extract_strided_slice %29 {offsets = [0, 128], sizes = [16, 512], strides = [1, 1]} : vector<16x640xf32> to vector<16x512xf32>
    %36 = arith.mulf %30, %30 : vector<16x64xf32>
    %c0_24 = arith.constant 0 : index
    %c0_25 = arith.constant 0 : index
    %37 = vector.load %arg11[%c0_24, %c0_25] : memref<64x32xf32, #tpu.memory_space<vmem>>, vector<64x32xf32>
    %cst_26 = arith.constant dense<0.000000e+00> : vector<16x32xf32>
    %38 = tpu.matmul %36, %37, %cst_26 {dimension_numbers = #tpu.dot_dimension_numbers<[1], [0], [0], [1], [0, 0, 1, 1], [], []>} : vector<16x64xf32>, vector<64x32xf32>, vector<16x32xf32> -> vector<16x32xf32>
    %c0_27 = arith.constant 0 : index
    %c0_28 = arith.constant 0 : index
    %39 = vector.load %arg10[%c0_27, %c0_28] : memref<1x32xf32, #tpu.memory_space<vmem>>, vector<1x32xf32>
    %40 = arith.mulf %38, %38 : vector<16x32xf32>
    %cst_29 = arith.constant 1.000000e-16 : f32
    %41 = vector.broadcast %cst_29 : f32 to vector<16x32xf32>
    %42 = arith.addf %40, %41 : vector<16x32xf32>
    %43 = math.sqrt %42 : vector<16x32xf32>
    %44 = math.sqrt %43 : vector<16x32xf32>
    %cst_30 = arith.constant 1.000000e+00 : f32
    %45 = vector.broadcast %cst_30 : f32 to vector<16x32xf32>
    %46 = arith.subf %44, %45 : vector<16x32xf32>
    %47 = vector.broadcast %39 : vector<1x32xf32> to vector<16x32xf32>
    %48 = arith.mulf %47, %46 : vector<16x32xf32>
    %cst_31 = arith.constant 1.00000095 : f32
    %49 = vector.broadcast %cst_31 : f32 to vector<16x32xf32>
    %50 = arith.addf %48, %49 : vector<16x32xf32>
    %c0_32 = arith.constant 0 : index
    %c0_33 = arith.constant 0 : index
    %51 = vector.load %arg8[%c0_32, %c0_33] : memref<32x64xf32, #tpu.memory_space<vmem>>, vector<32x64xf32>
    %cst_34 = arith.constant dense<0.000000e+00> : vector<16x64xf32>
    %52 = tpu.matmul %50, %51, %cst_34 {dimension_numbers = #tpu.dot_dimension_numbers<[1], [0], [0], [1], [0, 0, 1, 1], [], []>} : vector<16x32xf32>, vector<32x64xf32>, vector<16x64xf32> -> vector<16x64xf32>
    %53 = tpu.reciprocal %52 {approx = true} : vector<16x64xf32> -> vector<16x64xf32>
    %54 = arith.mulf %30, %53 : vector<16x64xf32>
    %55 = arith.truncf %54 : vector<16x64xf32> to vector<16x64xbf16>
    %c0_35 = arith.constant 0 : index
    %c0_36 = arith.constant 0 : index
    %56 = vector.load %arg13[%c0_35, %c0_36] : memref<64x512xbf16, #tpu.memory_space<vmem>>, vector<64x512xbf16>
    %cst_37 = arith.constant dense<0.000000e+00> : vector<16x512xf32>
    %57 = tpu.matmul %55, %56, %cst_37 {dimension_numbers = #tpu.dot_dimension_numbers<[1], [0], [0], [1], [0, 0, 1, 1], [], []>} : vector<16x64xbf16>, vector<64x512xbf16>, vector<16x512xf32> -> vector<16x512xf32>
    %58 = arith.mulf %35, %57 : vector<16x512xf32>
    %c0_38 = arith.constant 0 : index
    %c0_39 = arith.constant 0 : index
    %59 = vector.load %arg14[%c0_38, %c0_39] : memref<512x64xf32, #tpu.memory_space<vmem>>, vector<512x64xf32>
    %cst_40 = arith.constant dense<0.000000e+00> : vector<16x64xf32>
    %60 = tpu.matmul %58, %59, %cst_40 {dimension_numbers = #tpu.dot_dimension_numbers<[1], [0], [0], [1], [0, 0, 1, 1], [], []>} : vector<16x512xf32>, vector<512x64xf32>, vector<16x64xf32> -> vector<16x64xf32>
    %61 = arith.addf %34, %60 : vector<16x64xf32>
    %cst_41 = arith.constant 0.707106769 : f32
    %62 = vector.broadcast %cst_41 : f32 to vector<16x64xf32>
    %63 = arith.mulf %61, %62 : vector<16x64xf32>
    %64 = arith.mulf %63, %63 : vector<16x64xf32>
    %c0_42 = arith.constant 0 : index
    %c0_43 = arith.constant 0 : index
    %65 = vector.load %arg15[%c0_42, %c0_43] : memref<64x8xf32, #tpu.memory_space<vmem>>, vector<64x8xf32>
    %cst_44 = arith.constant dense<0.000000e+00> : vector<16x8xf32>
    %66 = tpu.matmul %64, %65, %cst_44 {dimension_numbers = #tpu.dot_dimension_numbers<[1], [0], [0], [1], [0, 0, 1, 1], [], []>} : vector<16x64xf32>, vector<64x8xf32>, vector<16x8xf32> -> vector<16x8xf32>
    %67 = arith.mulf %66, %66 : vector<16x8xf32>
    %cst_45 = arith.constant 1.000000e-16 : f32
    %68 = vector.broadcast %cst_45 : f32 to vector<16x8xf32>
    %69 = arith.addf %67, %68 : vector<16x8xf32>
    %70 = math.sqrt %69 : vector<16x8xf32>
    %71 = math.sqrt %70 : vector<16x8xf32>
    %cst_46 = arith.constant dense<0.000000e+00> : vector<16xf32>
    %72 = vector.multi_reduction <add>, %71, %cst_46 [1] : vector<16x8xf32> to vector<16xf32>
    %73 = vector.shape_cast %72 : vector<16xf32> to vector<16x1xf32>
    %cst_47 = arith.constant 8.000000e+00 : f32
    %74 = vector.broadcast %cst_47 : f32 to vector<16x1xf32>
    %75 = arith.divf %73, %74 : vector<16x1xf32>
    %cst_48 = arith.constant 9.99999997E-7 : f32
    %76 = vector.broadcast %cst_48 : f32 to vector<16x1xf32>
    %77 = arith.addf %75, %76 : vector<16x1xf32>
    %c0_49 = arith.constant 0 : index
    %c0_50 = arith.constant 0 : index
    %78 = vector.load %arg16[%c0_49, %c0_50] : memref<1x64xf32, #tpu.memory_space<vmem>>, vector<1x64xf32>
    %79 = vector.broadcast %78 : vector<1x64xf32> to vector<16x64xf32>
    %80 = arith.mulf %79, %63 : vector<16x64xf32>
    %81 = tpu.reciprocal %77 {approx = true} : vector<16x1xf32> -> vector<16x1xf32>
    %82 = vector.broadcast %81 : vector<16x1xf32> to vector<16x64xf32>
    %83 = arith.mulf %80, %82 : vector<16x64xf32>
    %c0_51 = arith.constant 0 : index
    %c0_52 = arith.constant 0 : index
    %84 = vector.load %arg17[%c0_51, %c0_52] : memref<16x64xf32, #tpu.memory_space<vmem>>, vector<16x64xf32>
    tpu.vector_store %arg17[%c0_51, %c0_52], %83 {strides = array<i32>} : memref<16x64xf32, #tpu.memory_space<vmem>>, vector<16x64xf32>,
    return
  }
  func.func @transform_0(%arg0: i32) -> (i32, i32) {
    %c0_i32 = arith.constant 0 : i32
    %c0_i32_0 = arith.constant 0 : i32
    return %arg0, %c0_i32 : i32, i32
  }
  func.func @transform_1(%arg0: i32) -> (i32, i32) {
    %c0_i32 = arith.constant 0 : i32
    %c0_i32_0 = arith.constant 0 : i32
    %c0_i32_1 = arith.constant 0 : i32
    return %c0_i32, %c0_i32_0 : i32, i32
  }
  func.func @transform_2(%arg0: i32) -> (i32, i32) {
    %c0_i32 = arith.constant 0 : i32
    %c0_i32_0 = arith.constant 0 : i32
    %c0_i32_1 = arith.constant 0 : i32
    return %c0_i32, %c0_i32_0 : i32, i32
  }
  func.func @transform_3(%arg0: i32) -> (i32, i32) {
    %c0_i32 = arith.constant 0 : i32
    %c0_i32_0 = arith.constant 0 : i32
    %c0_i32_1 = arith.constant 0 : i32
    return %c0_i32, %c0_i32_0 : i32, i32
  }
  func.func @transform_4(%arg0: i32) -> (i32, i32) {
    %c0_i32 = arith.constant 0 : i32
    %c0_i32_0 = arith.constant 0 : i32
    %c0_i32_1 = arith.constant 0 : i32
    return %c0_i32, %c0_i32_0 : i32, i32
  }
  func.func @transform_5(%arg0: i32) -> (i32, i32) {
    %c0_i32 = arith.constant 0 : i32
    %c0_i32_0 = arith.constant 0 : i32
    %c0_i32_1 = arith.constant 0 : i32
    return %c0_i32, %c0_i32_0 : i32, i32
  }
  func.func @transform_6(%arg0: i32) -> (i32, i32) {
    %c0_i32 = arith.constant 0 : i32
    %c0_i32_0 = arith.constant 0 : i32
    %c0_i32_1 = arith.constant 0 : i32
    return %c0_i32, %c0_i32_0 : i32, i32
  }
  func.func @transform_7(%arg0: i32) -> (i32, i32) {
    %c0_i32 = arith.constant 0 : i32
    %c0_i32_0 = arith.constant 0 : i32
    %c0_i32_1 = arith.constant 0 : i32
    return %c0_i32, %c0_i32_0 : i32, i32
  }
  func.func @transform_8(%arg0: i32) -> (i32, i32) {
    %c0_i32 = arith.constant 0 : i32
    %c0_i32_0 = arith.constant 0 : i32
    %c0_i32_1 = arith.constant 0 : i32
    return %c0_i32, %c0_i32_0 : i32, i32
  }
  func.func @transform_9(%arg0: i32) -> (i32, i32) {
    %c0_i32 = arith.constant 0 : i32
    %c0_i32_0 = arith.constant 0 : i32
    %c0_i32_1 = arith.constant 0 : i32
    return %c0_i32, %c0_i32_0 : i32, i32
  }
  func.func @transform_10(%arg0: i32) -> (i32, i32) {
    %c0_i32 = arith.constant 0 : i32
    %c0_i32_0 = arith.constant 0 : i32
    %c0_i32_1 = arith.constant 0 : i32
    return %c0_i32, %c0_i32_0 : i32, i32
  }
  func.func @transform_11(%arg0: i32) -> (i32, i32) {
    %c0_i32 = arith.constant 0 : i32
    %c0_i32_0 = arith.constant 0 : i32
    %c0_i32_1 = arith.constant 0 : i32
    return %c0_i32, %c0_i32_0 : i32, i32
  }
  func.func @transform_12(%arg0: i32) -> (i32, i32) {
    %c0_i32 = arith.constant 0 : i32
    %c0_i32_0 = arith.constant 0 : i32
    %c0_i32_1 = arith.constant 0 : i32
    return %c0_i32, %c0_i32_0 : i32, i32
  }
  func.func @transform_13(%arg0: i32) -> (i32, i32) {
    %c0_i32 = arith.constant 0 : i32
    %c0_i32_0 = arith.constant 0 : i32
    %c0_i32_1 = arith.constant 0 : i32
    return %c0_i32, %c0_i32_0 : i32, i32
  }
  func.func @transform_14(%arg0: i32) -> (i32, i32) {
    %c0_i32 = arith.constant 0 : i32
    %c0_i32_0 = arith.constant 0 : i32
    %c0_i32_1 = arith.constant 0 : i32
    return %c0_i32, %c0_i32_0 : i32, i32
  }
  func.func @transform_15(%arg0: i32) -> (i32, i32) {
    %c0_i32 = arith.constant 0 : i32
    %c0_i32_0 = arith.constant 0 : i32
    %c0_i32_1 = arith.constant 0 : i32
    return %c0_i32, %c0_i32_0 : i32, i32
  }
  func.func @transform_16(%arg0: i32) -> (i32, i32) {
    %c0_i32 = arith.constant 0 : i32
    %c0_i32_0 = arith.constant 0 : i32
    return %arg0, %c0_i32 : i32, i32
  }
}

module attributes {stable_mosaic.version = 11 : i64} {
  func.func @kernel(%arg0: i32, %arg1: memref<16x64xf32, #tpu.memory_space<vmem>>, %arg2: memref<64x32xbf16, #tpu.memory_space<vmem>>, %arg3: memref<1x32xf32, #tpu.memory_space<vmem>>, %arg4: memref<1x16xf32, #tpu.memory_space<vmem>>, %arg5: memref<1x16xf32, #tpu.memory_space<vmem>>, %arg6: memref<32x16xf32, #tpu.memory_space<vmem>>, %arg7: memref<32x16xf32, #tpu.memory_space<vmem>>, %arg8: memref<16x32xf32, #tpu.memory_space<vmem>>, %arg9: memref<32x320xbf16, #tpu.memory_space<vmem>>, %arg10: memref<1x16xf32, #tpu.memory_space<vmem>>, %arg11: memref<32x16xf32, #tpu.memory_space<vmem>>, %arg12: memref<1x32xf32, #tpu.memory_space<vmem>>, %arg13: memref<32x256xbf16, #tpu.memory_space<vmem>>, %arg14: memref<256x32xf32, #tpu.memory_space<vmem>>, %arg15: memref<32x4xf32, #tpu.memory_space<vmem>>, %arg16: memref<1x32xf32, #tpu.memory_space<vmem>>, %arg17: memref<16x32xf32, #tpu.memory_space<vmem>>) attributes {dimension_semantics = [#tpu.dimension_semantics<parallel>], iteration_bounds = array<i64: 1>, scalar_prefetch = 0 : i64, scratch_operands = 0 : i64, tpu.core_type = #tpu.core_type<tc>, window_params = [{transform_indices = @transform_0, window_bounds = array<i64: 16, 64>}, {pipeline_mode = #tpu.pipeline_mode<synchronous>, transform_indices = @transform_1, window_bounds = array<i64: 64, 32>}, {pipeline_mode = #tpu.pipeline_mode<synchronous>, transform_indices = @transform_2, window_bounds = array<i64: 1, 32>}, {pipeline_mode = #tpu.pipeline_mode<synchronous>, transform_indices = @transform_3, window_bounds = array<i64: 1, 16>}, {pipeline_mode = #tpu.pipeline_mode<synchronous>, transform_indices = @transform_4, window_bounds = array<i64: 1, 16>}, {pipeline_mode = #tpu.pipeline_mode<synchronous>, transform_indices = @transform_5, window_bounds = array<i64: 32, 16>}, {pipeline_mode = #tpu.pipeline_mode<synchronous>, transform_indices = @transform_6, window_bounds = array<i64: 32, 16>}, {pipeline_mode = #tpu.pipeline_mode<synchronous>, transform_indices = @transform_7, window_bounds = array<i64: 16, 32>}, {pipeline_mode = #tpu.pipeline_mode<synchronous>, transform_indices = @transform_8, window_bounds = array<i64: 32, 320>}, {pipeline_mode = #tpu.pipeline_mode<synchronous>, transform_indices = @transform_9, window_bounds = array<i64: 1, 16>}, {pipeline_mode = #tpu.pipeline_mode<synchronous>, transform_indices = @transform_10, window_bounds = array<i64: 32, 16>}, {pipeline_mode = #tpu.pipeline_mode<synchronous>, transform_indices = @transform_11, window_bounds = array<i64: 1, 32>}, {pipeline_mode = #tpu.pipeline_mode<synchronous>, transform_indices = @transform_12, window_bounds = array<i64: 32, 256>}, {pipeline_mode = #tpu.pipeline_mode<synchronous>, transform_indices = @transform_13, window_bounds = array<i64: 256, 32>}, {pipeline_mode = #tpu.pipeline_mode<synchronous>, transform_indices = @transform_14, window_bounds = array<i64: 32, 4>}, {pipeline_mode = #tpu.pipeline_mode<synchronous>, transform_indices = @transform_15, window_bounds = array<i64: 1, 32>}, {transform_indices = @transform_16, window_bounds = array<i64: 16, 32>}]} {
    %c0 = arith.constant 0 : index
    %c0_0 = arith.constant 0 : index
    %0 = vector.load %arg1[%c0, %c0_0] : memref<16x64xf32, #tpu.memory_space<vmem>>, vector<16x64xf32>
    %1 = arith.truncf %0 : vector<16x64xf32> to vector<16x64xbf16>
    %c0_1 = arith.constant 0 : index
    %c0_2 = arith.constant 0 : index
    %2 = vector.load %arg2[%c0_1, %c0_2] : memref<64x32xbf16, #tpu.memory_space<vmem>>, vector<64x32xbf16>
    %cst = arith.constant dense<0.000000e+00> : vector<16x32xf32>
    %3 = tpu.matmul %1, %2, %cst {dimension_numbers = #tpu.dot_dimension_numbers<[1], [0], [0], [1], [0, 0, 1, 1], [], []>} : vector<16x64xbf16>, vector<64x32xbf16>, vector<16x32xf32> -> vector<16x32xf32>
    %c0_3 = arith.constant 0 : index
    %c0_4 = arith.constant 0 : index
    %4 = vector.load %arg3[%c0_3, %c0_4] : memref<1x32xf32, #tpu.memory_space<vmem>>, vector<1x32xf32>
    %5 = vector.broadcast %4 : vector<1x32xf32> to vector<16x32xf32>
    %6 = arith.addf %3, %5 : vector<16x32xf32>
    %7 = arith.mulf %6, %6 : vector<16x32xf32>
    %c0_5 = arith.constant 0 : index
    %c0_6 = arith.constant 0 : index
    %8 = vector.load %arg6[%c0_5, %c0_6] : memref<32x16xf32, #tpu.memory_space<vmem>>, vector<32x16xf32>
    %cst_7 = arith.constant dense<0.000000e+00> : vector<16x16xf32>
    %9 = tpu.matmul %6, %8, %cst_7 {dimension_numbers = #tpu.dot_dimension_numbers<[1], [0], [0], [1], [0, 0, 1, 1], [], []>} : vector<16x32xf32>, vector<32x16xf32>, vector<16x16xf32> -> vector<16x16xf32>
    %c0_8 = arith.constant 0 : index
    %c0_9 = arith.constant 0 : index
    %10 = vector.load %arg7[%c0_8, %c0_9] : memref<32x16xf32, #tpu.memory_space<vmem>>, vector<32x16xf32>
    %cst_10 = arith.constant dense<0.000000e+00> : vector<16x16xf32>
    %11 = tpu.matmul %7, %10, %cst_10 {dimension_numbers = #tpu.dot_dimension_numbers<[1], [0], [0], [1], [0, 0, 1, 1], [], []>} : vector<16x32xf32>, vector<32x16xf32>, vector<16x16xf32> -> vector<16x16xf32>
    %12 = arith.addf %9, %11 : vector<16x16xf32>
    %c0_11 = arith.constant 0 : index
    %c0_12 = arith.constant 0 : index
    %13 = vector.load %arg4[%c0_11, %c0_12] : memref<1x16xf32, #tpu.memory_space<vmem>>, vector<1x16xf32>
    %14 = vector.broadcast %13 : vector<1x16xf32> to vector<16x16xf32>
    %15 = arith.mulf %14, %12 : vector<16x16xf32>
    %c0_13 = arith.constant 0 : index
    %c0_14 = arith.constant 0 : index
    %16 = vector.load %arg5[%c0_13, %c0_14] : memref<1x16xf32, #tpu.memory_space<vmem>>, vector<1x16xf32>
    %17 = vector.broadcast %16 : vector<1x16xf32> to vector<16x16xf32>
    %18 = arith.addf %15, %17 : vector<16x16xf32>
    %19 = arith.negf %18 : vector<16x16xf32>
    %20 = math.exp %19 : vector<16x16xf32>
    %cst_15 = arith.constant 1.000000e+00 : f32
    %21 = vector.broadcast %cst_15 : f32 to vector<16x16xf32>
    %22 = arith.addf %21, %20 : vector<16x16xf32>
    %23 = arith.divf %21, %22 : vector<16x16xf32>
    %c0_16 = arith.constant 0 : index
    %c0_17 = arith.constant 0 : index
    %24 = vector.load %arg8[%c0_16, %c0_17] : memref<16x32xf32, #tpu.memory_space<vmem>>, vector<16x32xf32>
    %cst_18 = arith.constant dense<0.000000e+00> : vector<16x32xf32>
    %25 = tpu.matmul %23, %24, %cst_18 {dimension_numbers = #tpu.dot_dimension_numbers<[1], [0], [0], [1], [0, 0, 1, 1], [], []>} : vector<16x16xf32>, vector<16x32xf32>, vector<16x32xf32> -> vector<16x32xf32>
    %26 = arith.mulf %25, %6 : vector<16x32xf32>
    %27 = arith.truncf %26 : vector<16x32xf32> to vector<16x32xbf16>
    %c0_19 = arith.constant 0 : index
    %c0_20 = arith.constant 0 : index
    %28 = vector.load %arg9[%c0_19, %c0_20] : memref<32x320xbf16, #tpu.memory_space<vmem>>, vector<32x320xbf16>
    %cst_21 = arith.constant dense<0.000000e+00> : vector<16x320xf32>
    %29 = tpu.matmul %27, %28, %cst_21 {dimension_numbers = #tpu.dot_dimension_numbers<[1], [0], [0], [1], [0, 0, 1, 1], [], []>} : vector<16x32xbf16>, vector<32x320xbf16>, vector<16x320xf32> -> vector<16x320xf32>
    %30 = vector.extract_strided_slice %29 {offsets = [0, 0], sizes = [16, 32], strides = [1, 1]} : vector<16x320xf32> to vector<16x32xf32>
    %31 = vector.extract_strided_slice %29 {offsets = [0, 32], sizes = [16, 32], strides = [1, 1]} : vector<16x320xf32> to vector<16x32xf32>
    %c0_22 = arith.constant 0 : index
    %c0_23 = arith.constant 0 : index
    %32 = vector.load %arg12[%c0_22, %c0_23] : memref<1x32xf32, #tpu.memory_space<vmem>>, vector<1x32xf32>
    %33 = vector.broadcast %32 : vector<1x32xf32> to vector<16x32xf32>
    %34 = arith.addf %31, %33 : vector<16x32xf32>
    %35 = vector.extract_strided_slice %29 {offsets = [0, 64], sizes = [16, 256], strides = [1, 1]} : vector<16x320xf32> to vector<16x256xf32>
    %36 = arith.mulf %30, %30 : vector<16x32xf32>
    %c0_24 = arith.constant 0 : index
    %c0_25 = arith.constant 0 : index
    %37 = vector.load %arg11[%c0_24, %c0_25] : memref<32x16xf32, #tpu.memory_space<vmem>>, vector<32x16xf32>
    %cst_26 = arith.constant dense<0.000000e+00> : vector<16x16xf32>
    %38 = tpu.matmul %36, %37, %cst_26 {dimension_numbers = #tpu.dot_dimension_numbers<[1], [0], [0], [1], [0, 0, 1, 1], [], []>} : vector<16x32xf32>, vector<32x16xf32>, vector<16x16xf32> -> vector<16x16xf32>
    %c0_27 = arith.constant 0 : index
    %c0_28 = arith.constant 0 : index
    %39 = vector.load %arg10[%c0_27, %c0_28] : memref<1x16xf32, #tpu.memory_space<vmem>>, vector<1x16xf32>
    %40 = arith.mulf %38, %38 : vector<16x16xf32>
    %cst_29 = arith.constant 1.000000e-16 : f32
    %41 = vector.broadcast %cst_29 : f32 to vector<16x16xf32>
    %42 = arith.addf %40, %41 : vector<16x16xf32>
    %43 = math.sqrt %42 : vector<16x16xf32>
    %44 = math.sqrt %43 : vector<16x16xf32>
    %cst_30 = arith.constant 1.000000e+00 : f32
    %45 = vector.broadcast %cst_30 : f32 to vector<16x16xf32>
    %46 = arith.subf %44, %45 : vector<16x16xf32>
    %47 = vector.broadcast %39 : vector<1x16xf32> to vector<16x16xf32>
    %48 = arith.mulf %47, %46 : vector<16x16xf32>
    %cst_31 = arith.constant 1.00000095 : f32
    %49 = vector.broadcast %cst_31 : f32 to vector<16x16xf32>
    %50 = arith.addf %48, %49 : vector<16x16xf32>
    %c0_32 = arith.constant 0 : index
    %c0_33 = arith.constant 0 : index
    %51 = vector.load %arg8[%c0_32, %c0_33] : memref<16x32xf32, #tpu.memory_space<vmem>>, vector<16x32xf32>
    %cst_34 = arith.constant dense<0.000000e+00> : vector<16x32xf32>
    %52 = tpu.matmul %50, %51, %cst_34 {dimension_numbers = #tpu.dot_dimension_numbers<[1], [0], [0], [1], [0, 0, 1, 1], [], []>} : vector<16x16xf32>, vector<16x32xf32>, vector<16x32xf32> -> vector<16x32xf32>
    %53 = tpu.reciprocal %52 {approx = true} : vector<16x32xf32> -> vector<16x32xf32>
    %54 = arith.mulf %30, %53 : vector<16x32xf32>
    %55 = arith.truncf %54 : vector<16x32xf32> to vector<16x32xbf16>
    %c0_35 = arith.constant 0 : index
    %c0_36 = arith.constant 0 : index
    %56 = vector.load %arg13[%c0_35, %c0_36] : memref<32x256xbf16, #tpu.memory_space<vmem>>, vector<32x256xbf16>
    %cst_37 = arith.constant dense<0.000000e+00> : vector<16x256xf32>
    %57 = tpu.matmul %55, %56, %cst_37 {dimension_numbers = #tpu.dot_dimension_numbers<[1], [0], [0], [1], [0, 0, 1, 1], [], []>} : vector<16x32xbf16>, vector<32x256xbf16>, vector<16x256xf32> -> vector<16x256xf32>
    %58 = arith.mulf %35, %57 : vector<16x256xf32>
    %c0_38 = arith.constant 0 : index
    %c0_39 = arith.constant 0 : index
    %59 = vector.load %arg14[%c0_38, %c0_39] : memref<256x32xf32, #tpu.memory_space<vmem>>, vector<256x32xf32>
    %cst_40 = arith.constant dense<0.000000e+00> : vector<16x32xf32>
    %60 = tpu.matmul %58, %59, %cst_40 {dimension_numbers = #tpu.dot_dimension_numbers<[1], [0], [0], [1], [0, 0, 1, 1], [], []>} : vector<16x256xf32>, vector<256x32xf32>, vector<16x32xf32> -> vector<16x32xf32>
    %61 = arith.addf %34, %60 : vector<16x32xf32>
    %cst_41 = arith.constant 0.707106769 : f32
    %62 = vector.broadcast %cst_41 : f32 to vector<16x32xf32>
    %63 = arith.mulf %61, %62 : vector<16x32xf32>
    %64 = arith.mulf %63, %63 : vector<16x32xf32>
    %c0_42 = arith.constant 0 : index
    %c0_43 = arith.constant 0 : index
    %65 = vector.load %arg15[%c0_42, %c0_43] : memref<32x4xf32, #tpu.memory_space<vmem>>, vector<32x4xf32>
    %cst_44 = arith.constant dense<0.000000e+00> : vector<16x4xf32>
    %66 = tpu.matmul %64, %65, %cst_44 {dimension_numbers = #tpu.dot_dimension_numbers<[1], [0], [0], [1], [0, 0, 1, 1], [], []>} : vector<16x32xf32>, vector<32x4xf32>, vector<16x4xf32> -> vector<16x4xf32>
    %67 = arith.mulf %66, %66 : vector<16x4xf32>
    %cst_45 = arith.constant 1.000000e-16 : f32
    %68 = vector.broadcast %cst_45 : f32 to vector<16x4xf32>
    %69 = arith.addf %67, %68 : vector<16x4xf32>
    %70 = math.sqrt %69 : vector<16x4xf32>
    %71 = math.sqrt %70 : vector<16x4xf32>
    %cst_46 = arith.constant dense<0.000000e+00> : vector<16xf32>
    %72 = vector.multi_reduction <add>, %71, %cst_46 [1] : vector<16x4xf32> to vector<16xf32>
    %73 = vector.shape_cast %72 : vector<16xf32> to vector<16x1xf32>
    %cst_47 = arith.constant 4.000000e+00 : f32
    %74 = vector.broadcast %cst_47 : f32 to vector<16x1xf32>
    %75 = arith.divf %73, %74 : vector<16x1xf32>
    %cst_48 = arith.constant 9.99999997E-7 : f32
    %76 = vector.broadcast %cst_48 : f32 to vector<16x1xf32>
    %77 = arith.addf %75, %76 : vector<16x1xf32>
    %c0_49 = arith.constant 0 : index
    %c0_50 = arith.constant 0 : index
    %78 = vector.load %arg16[%c0_49, %c0_50] : memref<1x32xf32, #tpu.memory_space<vmem>>, vector<1x32xf32>
    %79 = vector.broadcast %78 : vector<1x32xf32> to vector<16x32xf32>
    %80 = arith.mulf %79, %63 : vector<16x32xf32>
    %81 = tpu.reciprocal %77 {approx = true} : vector<16x1xf32> -> vector<16x1xf32>
    %82 = vector.broadcast %81 : vector<16x1xf32> to vector<16x32xf32>
    %83 = arith.mulf %80, %82 : vector<16x32xf32>
    %c0_51 = arith.constant 0 : index
    %c0_52 = arith.constant 0 : index
    %84 = vector.load %arg17[%c0_51, %c0_52] : memref<16x32xf32, #tpu.memory_space<vmem>>, vector<16x32xf32>
    tpu.vector_store %arg17[%c0_51, %c0_52], %83 {strides = array<i32>} : memref<16x32xf32, #tpu.memory_space<vmem>>, vector<16x32xf32>,
    return
  }
  func.func @transform_0(%arg0: i32) -> (i32, i32) {
    %c0_i32 = arith.constant 0 : i32
    %c0_i32_0 = arith.constant 0 : i32
    return %arg0, %c0_i32 : i32, i32
  }
  func.func @transform_1(%arg0: i32) -> (i32, i32) {
    %c0_i32 = arith.constant 0 : i32
    %c0_i32_0 = arith.constant 0 : i32
    %c0_i32_1 = arith.constant 0 : i32
    return %c0_i32, %c0_i32_0 : i32, i32
  }
  func.func @transform_2(%arg0: i32) -> (i32, i32) {
    %c0_i32 = arith.constant 0 : i32
    %c0_i32_0 = arith.constant 0 : i32
    %c0_i32_1 = arith.constant 0 : i32
    return %c0_i32, %c0_i32_0 : i32, i32
  }
  func.func @transform_3(%arg0: i32) -> (i32, i32) {
    %c0_i32 = arith.constant 0 : i32
    %c0_i32_0 = arith.constant 0 : i32
    %c0_i32_1 = arith.constant 0 : i32
    return %c0_i32, %c0_i32_0 : i32, i32
  }
  func.func @transform_4(%arg0: i32) -> (i32, i32) {
    %c0_i32 = arith.constant 0 : i32
    %c0_i32_0 = arith.constant 0 : i32
    %c0_i32_1 = arith.constant 0 : i32
    return %c0_i32, %c0_i32_0 : i32, i32
  }
  func.func @transform_5(%arg0: i32) -> (i32, i32) {
    %c0_i32 = arith.constant 0 : i32
    %c0_i32_0 = arith.constant 0 : i32
    %c0_i32_1 = arith.constant 0 : i32
    return %c0_i32, %c0_i32_0 : i32, i32
  }
  func.func @transform_6(%arg0: i32) -> (i32, i32) {
    %c0_i32 = arith.constant 0 : i32
    %c0_i32_0 = arith.constant 0 : i32
    %c0_i32_1 = arith.constant 0 : i32
    return %c0_i32, %c0_i32_0 : i32, i32
  }
  func.func @transform_7(%arg0: i32) -> (i32, i32) {
    %c0_i32 = arith.constant 0 : i32
    %c0_i32_0 = arith.constant 0 : i32
    %c0_i32_1 = arith.constant 0 : i32
    return %c0_i32, %c0_i32_0 : i32, i32
  }
  func.func @transform_8(%arg0: i32) -> (i32, i32) {
    %c0_i32 = arith.constant 0 : i32
    %c0_i32_0 = arith.constant 0 : i32
    %c0_i32_1 = arith.constant 0 : i32
    return %c0_i32, %c0_i32_0 : i32, i32
  }
  func.func @transform_9(%arg0: i32) -> (i32, i32) {
    %c0_i32 = arith.constant 0 : i32
    %c0_i32_0 = arith.constant 0 : i32
    %c0_i32_1 = arith.constant 0 : i32
    return %c0_i32, %c0_i32_0 : i32, i32
  }
  func.func @transform_10(%arg0: i32) -> (i32, i32) {
    %c0_i32 = arith.constant 0 : i32
    %c0_i32_0 = arith.constant 0 : i32
    %c0_i32_1 = arith.constant 0 : i32
    return %c0_i32, %c0_i32_0 : i32, i32
  }
  func.func @transform_11(%arg0: i32) -> (i32, i32) {
    %c0_i32 = arith.constant 0 : i32
    %c0_i32_0 = arith.constant 0 : i32
    %c0_i32_1 = arith.constant 0 : i32
    return %c0_i32, %c0_i32_0 : i32, i32
  }
  func.func @transform_12(%arg0: i32) -> (i32, i32) {
    %c0_i32 = arith.constant 0 : i32
    %c0_i32_0 = arith.constant 0 : i32
    %c0_i32_1 = arith.constant 0 : i32
    return %c0_i32, %c0_i32_0 : i32, i32
  }
  func.func @transform_13(%arg0: i32) -> (i32, i32) {
    %c0_i32 = arith.constant 0 : i32
    %c0_i32_0 = arith.constant 0 : i32
    %c0_i32_1 = arith.constant 0 : i32
    return %c0_i32, %c0_i32_0 : i32, i32
  }
  func.func @transform_14(%arg0: i32) -> (i32, i32) {
    %c0_i32 = arith.constant 0 : i32
    %c0_i32_0 = arith.constant 0 : i32
    %c0_i32_1 = arith.constant 0 : i32
    return %c0_i32, %c0_i32_0 : i32, i32
  }
  func.func @transform_15(%arg0: i32) -> (i32, i32) {
    %c0_i32 = arith.constant 0 : i32
    %c0_i32_0 = arith.constant 0 : i32
    %c0_i32_1 = arith.constant 0 : i32
    return %c0_i32, %c0_i32_0 : i32, i32
  }
  func.func @transform_16(%arg0: i32) -> (i32, i32) {
    %c0_i32 = arith.constant 0 : i32
    %c0_i32_0 = arith.constant 0 : i32
    return %arg0, %c0_i32 : i32, i32
  }
}

</mosaic_0001>

<llo_original>
// kernel: cemlp_pallas.3
$region0: #{cemlp_pallas.3}
  #allocation0 [shape = 'u32[]', space=smem, size = 0x4, offset = 0x4, fixed_abs, tag = 'smem constant byte address 0x4 - core index']
  #allocation1 [shape = 'u32[144,128]{1,0:T(1,128)}', space=vmem, size = 0x12000, scoped, tag = 'internal scratch']
  %s0 = inlined_call_operand.vmem [shape: f32[16,64], index: 0, kind: input, shape index: {}]
  %s1 = inlined_call_operand.vmem [shape: bf16[64,32], index: 1, kind: input, shape index: {}]
  %s2 = inlined_call_operand.vmem [shape: f32[1,32], index: 2, kind: input, shape index: {}, may-alias: {2,11}]
  %s3 = inlined_call_operand.vmem [shape: f32[1,16], index: 3, kind: input, shape index: {}]
  %s4 = inlined_call_operand.vmem [shape: f32[1,16], index: 4, kind: input, shape index: {}]
  %s5 = inlined_call_operand.vmem [shape: f32[32,16], index: 5, kind: input, shape index: {}]
  %s6 = inlined_call_operand.vmem [shape: f32[32,16], index: 6, kind: input, shape index: {}]
  %s7 = inlined_call_operand.vmem [shape: f32[16,32], index: 7, kind: input, shape index: {}]
  %s8 = inlined_call_operand.vmem [shape: bf16[32,320], index: 8, kind: input, shape index: {}]
  %s9 = inlined_call_operand.vmem [shape: f32[1,16], index: 9, kind: input, shape index: {}]
  %s10 = inlined_call_operand.vmem [shape: f32[32,16], index: 10, kind: input, shape index: {}]
  %s11 = inlined_call_operand.vmem [shape: f32[1,32], index: 11, kind: input, shape index: {}, may-alias: {2,11}]
  %s12 = inlined_call_operand.vmem [shape: bf16[32,256], index: 12, kind: input, shape index: {}]
  %s13 = inlined_call_operand.vmem [shape: f32[256,32], index: 13, kind: input, shape index: {}]
  %s14 = inlined_call_operand.vmem [shape: f32[32,4], index: 14, kind: input, shape index: {}]
  %s15 = inlined_call_operand.vmem [shape: f32[1,32], index: 15, kind: input, shape index: {}]
  %s16 = inlined_call_operand.vmem [shape: f32[16,32], index: 16, kind: output, shape index: {}]
  %s17 = sld [smem:[#allocation0]]
  $region74: #{cemlp_pallas.3} parent=0
    _
  %s19 = ssub.s32 1, %s17
  %s20 = scalar_select 0, %s19, %s17
  // Predicated region
  $region2: #{cemlp_pallas.3} parent=0 // pred_check
    _
  $region3: #{cemlp_pallas.3} parent=0 // pred_check_branch
    %22 = sbr.rel (0) target = $region5
  $region4: #{cemlp_pallas.3} parent=0 // pred_region
    _
  $region5: #{cemlp_pallas.3} parent=0 // pred_fallthru
    _
  // Predicated region
  $region6: #{cemlp_pallas.3} parent=0 // pred_check
    _
  $region7: #{cemlp_pallas.3} parent=0 // pred_check_branch
    %24 = sbr.rel (0) target = $region9
  $region8: #{cemlp_pallas.3} parent=0 // pred_region
    _
  $region9: #{cemlp_pallas.3} parent=0 // pred_fallthru
    _
  // Predicated region
  $region10: #{cemlp_pallas.3} parent=0 // pred_check
    _
  $region11: #{cemlp_pallas.3} parent=0 // pred_check_branch
    %26 = sbr.rel (0) target = $region13
  $region12: #{cemlp_pallas.3} parent=0 // pred_region
    _
  $region13: #{cemlp_pallas.3} parent=0 // pred_fallthru
    _
  // Predicated region
  $region14: #{cemlp_pallas.3} parent=0 // pred_check
    _
  $region15: #{cemlp_pallas.3} parent=0 // pred_check_branch
    %28 = sbr.rel (0) target = $region17
  $region16: #{cemlp_pallas.3} parent=0 // pred_region
    _
  $region17: #{cemlp_pallas.3} parent=0 // pred_fallthru
    _
  // Predicated region
  $region18: #{cemlp_pallas.3} parent=0 // pred_check
    _
  $region19: #{cemlp_pallas.3} parent=0 // pred_check_branch
    %30 = sbr.rel (0) target = $region21
  $region20: #{cemlp_pallas.3} parent=0 // pred_region
    _
  $region21: #{cemlp_pallas.3} parent=0 // pred_fallthru
    _
  // Predicated region
  $region22: #{cemlp_pallas.3} parent=0 // pred_check
    _
  $region23: #{cemlp_pallas.3} parent=0 // pred_check_branch
    %32 = sbr.rel (0) target = $region25
  $region24: #{cemlp_pallas.3} parent=0 // pred_region
    _
  $region25: #{cemlp_pallas.3} parent=0 // pred_fallthru
    _
  // Predicated region
  $region26: #{cemlp_pallas.3} parent=0 // pred_check
    _
  $region27: #{cemlp_pallas.3} parent=0 // pred_check_branch
    %34 = sbr.rel (0) target = $region29
  $region28: #{cemlp_pallas.3} parent=0 // pred_region
    _
  $region29: #{cemlp_pallas.3} parent=0 // pred_fallthru
    _
  // Predicated region
  $region30: #{cemlp_pallas.3} parent=0 // pred_check
    _
  $region31: #{cemlp_pallas.3} parent=0 // pred_check_branch
    %36 = sbr.rel (0) target = $region33
  $region32: #{cemlp_pallas.3} parent=0 // pred_region
    _
  $region33: #{cemlp_pallas.3} parent=0 // pred_fallthru
    _
  // Predicated region
  $region34: #{cemlp_pallas.3} parent=0 // pred_check
    _
  $region35: #{cemlp_pallas.3} parent=0 // pred_check_branch
    %38 = sbr.rel (0) target = $region37
  $region36: #{cemlp_pallas.3} parent=0 // pred_region
    _
  $region37: #{cemlp_pallas.3} parent=0 // pred_fallthru
    _
  // Predicated region
  $region38: #{cemlp_pallas.3} parent=0 // pred_check
    _
  $region39: #{cemlp_pallas.3} parent=0 // pred_check_branch
    %40 = sbr.rel (0) target = $region41
  $region40: #{cemlp_pallas.3} parent=0 // pred_region
    _
  $region41: #{cemlp_pallas.3} parent=0 // pred_fallthru
    _
  // Predicated region
  $region42: #{cemlp_pallas.3} parent=0 // pred_check
    _
  $region43: #{cemlp_pallas.3} parent=0 // pred_check_branch
    %42 = sbr.rel (0) target = $region45
  $region44: #{cemlp_pallas.3} parent=0 // pred_region
    _
  $region45: #{cemlp_pallas.3} parent=0 // pred_fallthru
    _
  // Predicated region
  $region46: #{cemlp_pallas.3} parent=0 // pred_check
    _
  $region47: #{cemlp_pallas.3} parent=0 // pred_check_branch
    %44 = sbr.rel (0) target = $region49
  $region48: #{cemlp_pallas.3} parent=0 // pred_region
    _
  $region49: #{cemlp_pallas.3} parent=0 // pred_fallthru
    _
  // Predicated region
  $region50: #{cemlp_pallas.3} parent=0 // pred_check
    _
  $region51: #{cemlp_pallas.3} parent=0 // pred_check_branch
    %46 = sbr.rel (0) target = $region53
  $region52: #{cemlp_pallas.3} parent=0 // pred_region
    _
  $region53: #{cemlp_pallas.3} parent=0 // pred_fallthru
    _
  // Predicated region
  $region54: #{cemlp_pallas.3} parent=0 // pred_check
    _
  $region55: #{cemlp_pallas.3} parent=0 // pred_check_branch
    %48 = sbr.rel (0) target = $region57
  $region56: #{cemlp_pallas.3} parent=0 // pred_region
    _
  $region57: #{cemlp_pallas.3} parent=0 // pred_fallthru
    _
  // Predicated region
  $region58: #{cemlp_pallas.3} parent=0 // pred_check
    _
  $region59: #{cemlp_pallas.3} parent=0 // pred_check_branch
    %50 = sbr.rel (0) target = $region61
  $region60: #{cemlp_pallas.3} parent=0 // pred_region
    _
  $region61: #{cemlp_pallas.3} parent=0 // pred_fallthru
    _
  // Predicated region
  $region62: #{cemlp_pallas.3} parent=0 // pred_check
    _
  $region63: #{cemlp_pallas.3} parent=0 // pred_check_branch
    %52 = sbr.rel (0) target = $region65
  $region64: #{cemlp_pallas.3} parent=0 // pred_region
    _
  $region65: #{cemlp_pallas.3} parent=0 // pred_fallthru
    _
  %v54 = vld [vmem:[%s0] sm:$0xff]
  %v55 = vld [vmem:[%s0 + $0x8] sm:$0xff]
  %v56 = vpack.c.bf16 %v55, %v54
  %v57 = vld [vmem:[%s1] sm:$0xf]
  %v58 = vld [vmem:[%s1 + $0x4] sm:$0xf]
  %v59 = vld [vmem:[%s1 + $0x8] sm:$0xf]
  %v60 = vld [vmem:[%s1 + $0xc] sm:$0xf]
  %v61 = vld [vmem:[%s1 + $0x10] sm:$0xf]
  %v62 = vld [vmem:[%s1 + $0x14] sm:$0xf]
  %v63 = vld [vmem:[%s1 + $0x18] sm:$0xf]
  %v64 = vld [vmem:[%s1 + $0x1c] sm:$0xf]
  %v65 = vld [vmem:[%s2] sm:$0x1]
  %v67 = vlaneseq
  %v68 = vshrl.u32 %v67, 7
  %v69 = vsub.s32 0, %v68
  %v70 = vrot.slane %v65, %v69
  %v80 = vunpack.c.l.b16 %v57
  %v81 = vunpack.c.l.b16 %v58
  %v82 = vunpack.c.l.b16 %v59
  %v83 = vunpack.c.l.b16 %v60
  %v84 = vunpack.c.l.b16 %v61
  %v85 = vunpack.c.l.b16 %v62
  %v86 = vunpack.c.l.b16 %v63
  %v87 = vunpack.c.l.b16 %v64
  %v88 = vpack.c.b16 %v81, %v80
  %v89 = vpack.c.b16 %v83, %v82
  %v90 = vpack.c.b16 %v85, %v84
  %v91 = vpack.c.b16 %v87, %v86
  %vm96 = vcmask 523264
  %v98 = vsel %vm96, %v56, 0
  %100 = vmatprep.subr.bf16.mxu0 0
  %101 = vmatpush1.bf16.msra.mxu0 %v88
  %102 = vmatprep.subr.bf16.mxu0 0
  %103 = vmatpush1.bf16.msra.mxu0 %v89
  %104 = vmatprep.subr.bf16.mxu0 0
  %105 = vmatpush1.bf16.msra.mxu0 %v90
  %106 = vmatprep.subr.bf16.mxu0 0
  %107 = vmatpush1.bf16.msra.mxu0 %v91
  %108 = vmatprep.subr.bf16.mxu0 0
  %109 = vmatpush1.bf16.msra.mxu0 0
  %110 = vmatprep.subr.bf16.mxu0 0
  %111 = vmatpush1.bf16.msra.mxu0 0
  %112 = vmatprep.subr.bf16.mxu0 0
  %113 = vmatpush1.bf16.msra.mxu0 0
  %114 = vmatprep.subr.bf16.mxu0 0
  %115 = vmatpush1.bf16.msra.mxu0 0
  %116 = vmatprep.subr.bf16.mxu0 0
  %117 = vmatpush1.bf16.msra.mxu0 0
  %118 = vmatprep.subr.bf16.mxu0 0
  %119 = vmatpush1.bf16.msra.mxu0 0
  %120 = vmatprep.subr.bf16.mxu0 0
  %121 = vmatpush1.bf16.msra.mxu0 0
  %122 = vmatprep.subr.bf16.mxu0 0
  %123 = vmatpush1.bf16.msra.mxu0 0
  %124 = vmatprep.subr.bf16.mxu0 0
  %125 = vmatpush1.bf16.msra.mxu0 0
  %126 = vmatprep.subr.bf16.mxu0 0
  %127 = vmatpush1.bf16.msra.mxu0 0
  %128 = vmatprep.subr.bf16.mxu0 0
  %129 = vmatpush1.bf16.msra.mxu0 0
  %130 = vmatprep.subr.bf16.mxu0 0
  %131 = vmatpush1.bf16.msra.mxu0 0
  %132 = vmatprep.mubr.bf16.mxu0 0
  %133 = vmatmul.mubr.bf16.gmra.mrb[0].mxu0 %v98
  %v134 = vpop.f32.mrb[0].mxu0
  %v135 = vadd.f32 %v70, %v134
  %v136 = vpop.f32.mrb[0].mxu0
  %v137 = vpop.f32.mrb[0].mxu0
  %v138 = vadd.f32 %v70, %v137
  %v139 = vpop.f32.mrb[0].mxu0
  %140 = vdwg.mxu0
  %v141 = vmul.f32 %v135, %v135
  %v142 = vmul.f32 %v138, %v138
  %v143 = vld [vmem:[%s5] sm:$0xff]
  %v144 = vld [vmem:[%s5 + $0x8] sm:$0xff]
  %v145 = vld [vmem:[%s5 + $0x10] sm:$0xff]
  %v146 = vld [vmem:[%s5 + $0x18] sm:$0xff]
  %v147 = vld [vmem:[%s6] sm:$0xff]
  %v148 = vld [vmem:[%s6 + $0x8] sm:$0xff]
  %v149 = vld [vmem:[%s6 + $0x10] sm:$0xff]
  %v150 = vld [vmem:[%s6 + $0x18] sm:$0xff]
  %vm151 = vcmask 261120
  %v153 = vsel %vm151, %v141, 0
  %v156 = vsel %vm151, %v142, 0
  %158 = vmatprep.subr.mxu0 0.0
  %159 = vmatpush1.msra.mxu0 %v147
  %160 = vmatprep.subr.mxu0 0.0
  %161 = vmatpush1.msra.mxu0 %v148
  %162 = vmatprep.subr.mxu0 0.0
  %163 = vmatpush1.msra.mxu0 %v149
  %164 = vmatprep.subr.mxu0 0.0
  %165 = vmatpush1.msra.mxu0 %v150
  %166 = vmatprep.subr.mxu0 0.0
  %167 = vmatpush1.msra.mxu0 0.0
  %168 = vmatprep.subr.mxu0 0.0
  %169 = vmatpush1.msra.mxu0 0.0
  %170 = vmatprep.subr.mxu0 0.0
  %171 = vmatpush1.msra.mxu0 0.0
  %172 = vmatprep.subr.mxu0 0.0
  %173 = vmatpush1.msra.mxu0 0.0
  %174 = vmatprep.subr.mxu0 0.0
  %175 = vmatpush1.msra.mxu0 0.0
  %176 = vmatprep.subr.mxu0 0.0
  %177 = vmatpush1.msra.mxu0 0.0
  %178 = vmatprep.subr.mxu0 0.0
  %179 = vmatpush1.msra.mxu0 0.0
  %180 = vmatprep.subr.mxu0 0.0
  %181 = vmatpush1.msra.mxu0 0.0
  %182 = vmatprep.subr.mxu0 0.0
  %183 = vmatpush1.msra.mxu0 0.0
  %184 = vmatprep.subr.mxu0 0.0
  %185 = vmatpush1.msra.mxu0 0.0
  %186 = vmatprep.subr.mxu0 0.0
  %187 = vmatpush1.msra.mxu0 0.0
  %188 = vmatprep.subr.mxu0 0.0
  %189 = vmatpush1.msra.mxu0 0.0
  %190 = vmatprep.subr.mxu0 0.0
  %191 = vmatpush1.msra.mxu0 0.0
  %192 = vmatprep.subr.mxu0 0.0
  %193 = vmatpush1.msra.mxu0 0.0
  %194 = vmatprep.subr.mxu0 0.0
  %195 = vmatpush1.msra.mxu0 0.0
  %196 = vmatprep.subr.mxu0 0.0
  %197 = vmatpush1.msra.mxu0 0.0
  %198 = vmatprep.subr.mxu0 0.0
  %199 = vmatpush1.msra.mxu0 0.0
  %200 = vmatprep.subr.mxu0 0.0
  %201 = vmatpush1.msra.mxu0 0.0
  %202 = vmatprep.subr.mxu0 0.0
  %203 = vmatpush1.msra.mxu0 0.0
  %204 = vmatprep.subr.mxu0 0.0
  %205 = vmatpush1.msra.mxu0 0.0
  %206 = vmatprep.subr.mxu0 0.0
  %207 = vmatpush1.msra.mxu0 0.0
  %208 = vmatprep.subr.mxu0 0.0
  %209 = vmatpush1.msra.mxu0 0.0
  %210 = vmatprep.subr.mxu0 0.0
  %211 = vmatpush1.msra.mxu0 0.0
  %212 = vmatprep.subr.mxu0 0.0
  %213 = vmatpush1.msra.mxu0 0.0
  %214 = vmatprep.subr.mxu0 0.0
  %215 = vmatpush1.msra.mxu0 0.0
  %216 = vmatprep.subr.mxu0 0.0
  %217 = vmatpush1.msra.mxu0 0.0
  %218 = vmatprep.subr.mxu0 0.0
  %219 = vmatpush1.msra.mxu0 0.0
  %220 = vmatprep.subr.mxu0 0.0
  %221 = vmatpush1.msra.mxu0 0.0
  %222 = vmatprep.mubr.f32.mxu0 0.0
  %223 = vmatmul.mubr.f32.gmra.mrb[0].mxu0 %v153
  %v224 = vpop.f32.mrb[0].mxu0
  %v225 = vadd.f32 0.0, %v224
  %v226 = vpop.f32.mrb[0].mxu0
  %227 = vmatprep.mubr.f32.mxu0 0.0
  %228 = vmatmul.mubr.f32.gmra.mrb[0].mxu0 %v156
  %v229 = vpop.f32.mrb[0].mxu0
  %v230 = vadd.f32 0.0, %v229
  %v231 = vpop.f32.mrb[0].mxu0
  %232 = vdwg.mxu0
  %v234 = vsel %vm151, %v135, 0
  %v237 = vsel %vm151, %v138, 0
  %239 = vmatprep.subr.mxu0 0.0
  %240 = vmatpush1.msra.mxu0 %v143
  %241 = vmatprep.subr.mxu0 0.0
  %242 = vmatpush1.msra.mxu0 %v144
  %243 = vmatprep.subr.mxu0 0.0
  %244 = vmatpush1.msra.mxu0 %v145
  %245 = vmatprep.subr.mxu0 0.0
  %246 = vmatpush1.msra.mxu0 %v146
  %247 = vmatprep.subr.mxu0 0.0
  %248 = vmatpush1.msra.mxu0 0.0
  %249 = vmatprep.subr.mxu0 0.0
  %250 = vmatpush1.msra.mxu0 0.0
  %251 = vmatprep.subr.mxu0 0.0
  %252 = vmatpush1.msra.mxu0 0.0
  %253 = vmatprep.subr.mxu0 0.0
  %254 = vmatpush1.msra.mxu0 0.0
  %255 = vmatprep.subr.mxu0 0.0
  %256 = vmatpush1.msra.mxu0 0.0
  %257 = vmatprep.subr.mxu0 0.0
  %258 = vmatpush1.msra.mxu0 0.0
  %259 = vmatprep.subr.mxu0 0.0
  %260 = vmatpush1.msra.mxu0 0.0
  %261 = vmatprep.subr.mxu0 0.0
  %262 = vmatpush1.msra.mxu0 0.0
  %263 = vmatprep.subr.mxu0 0.0
  %264 = vmatpush1.msra.mxu0 0.0
  %265 = vmatprep.subr.mxu0 0.0
  %266 = vmatpush1.msra.mxu0 0.0
  %267 = vmatprep.subr.mxu0 0.0
  %268 = vmatpush1.msra.mxu0 0.0
  %269 = vmatprep.subr.mxu0 0.0
  %270 = vmatpush1.msra.mxu0 0.0
  %271 = vmatprep.subr.mxu0 0.0
  %272 = vmatpush1.msra.mxu0 0.0
  %273 = vmatprep.subr.mxu0 0.0
  %274 = vmatpush1.msra.mxu0 0.0
  %275 = vmatprep.subr.mxu0 0.0
  %276 = vmatpush1.msra.mxu0 0.0
  %277 = vmatprep.subr.mxu0 0.0
  %278 = vmatpush1.msra.mxu0 0.0
  %279 = vmatprep.subr.mxu0 0.0
  %280 = vmatpush1.msra.mxu0 0.0
  %281 = vmatprep.subr.mxu0 0.0
  %282 = vmatpush1.msra.mxu0 0.0
  %283 = vmatprep.subr.mxu0 0.0
  %284 = vmatpush1.msra.mxu0 0.0
  %285 = vmatprep.subr.mxu0 0.0
  %286 = vmatpush1.msra.mxu0 0.0
  %287 = vmatprep.subr.mxu0 0.0
  %288 = vmatpush1.msra.mxu0 0.0
  %289 = vmatprep.subr.mxu0 0.0
  %290 = vmatpush1.msra.mxu0 0.0
  %291 = vmatprep.subr.mxu0 0.0
  %292 = vmatpush1.msra.mxu0 0.0
  %293 = vmatprep.subr.mxu0 0.0
  %294 = vmatpush1.msra.mxu0 0.0
  %295 = vmatprep.subr.mxu0 0.0
  %296 = vmatpush1.msra.mxu0 0.0
  %297 = vmatprep.subr.mxu0 0.0
  %298 = vmatpush1.msra.mxu0 0.0
  %299 = vmatprep.subr.mxu0 0.0
  %300 = vmatpush1.msra.mxu0 0.0
  %301 = vmatprep.subr.mxu0 0.0
  %302 = vmatpush1.msra.mxu0 0.0
  %303 = vmatprep.mubr.f32.mxu0 0.0
  %304 = vmatmul.mubr.f32.gmra.mrb[0].mxu0 %v234
  %v305 = vpop.f32.mrb[0].mxu0
  %v306 = vadd.f32 %v225, %v305
  %v307 = vpop.f32.mrb[0].mxu0
  %308 = vmatprep.mubr.f32.mxu0 0.0
  %309 = vmatmul.mubr.f32.gmra.mrb[0].mxu0 %v237
  %v310 = vpop.f32.mrb[0].mxu0
  %v311 = vadd.f32 %v230, %v310
  %v312 = vpop.f32.mrb[0].mxu0
  %313 = vdwg.mxu0
  %v314 = vld [vmem:[%s3] sm:$0x1]
  %v316 = vlaneseq
  %v317 = vshrl.u32 %v316, 7
  %v318 = vsub.s32 0, %v317
  %v319 = vrot.slane %v314, %v318
  %v321 = vmul.f32 %v319, %v306
  %v322 = vmul.f32 %v319, %v311
  %v323 = vld [vmem:[%s4] sm:$0x1]
  %v325 = vlaneseq
  %v326 = vshrl.u32 %v325, 7
  %v327 = vsub.s32 0, %v326
  %v328 = vrot.slane %v323, %v327
  %v330 = vadd.f32 %v321, %v328
  %v331 = vadd.f32 %v322, %v328
  %v332 = vxor.u32 %v330, 2147483648
  %v333 = vxor.u32 %v331, 2147483648
  %v334 = vmul.f32 %v332, 1.442695
  %v335 = vpow.pop %v334
  %v336 = vmul.f32 %v333, 1.442695
  %v337 = vpow.pop %v336
  %v338 = vadd.f32 %v335, 1.0
  %v339 = vadd.f32 %v337, 1.0
  %v340 = vrcp.pop %v338
  %v341 = vmul.f32 1.0, %v340
  %v342 = vrcp.pop %v339
  %v343 = vmul.f32 1.0, %v342
  %v344 = vld [vmem:[%s7] sm:$0xff]
  %v345 = vld [vmem:[%s7 + $0x8] sm:$0xff]
  %vm346 = vcmask 130048
  %v348 = vsel %vm346, %v341, 0
  %v351 = vsel %vm346, %v343, 0
  %353 = vmatprep.subr.mxu0 0.0
  %354 = vmatpush1.msra.mxu0 %v344
  %355 = vmatprep.subr.mxu0 0.0
  %356 = vmatpush1.msra.mxu0 %v345
  %357 = vmatprep.subr.mxu0 0.0
  %358 = vmatpush1.msra.mxu0 0.0
  %359 = vmatprep.subr.mxu0 0.0
  %360 = vmatpush1.msra.mxu0 0.0
  %361 = vmatprep.subr.mxu0 0.0
  %362 = vmatpush1.msra.mxu0 0.0
  %363 = vmatprep.subr.mxu0 0.0
  %364 = vmatpush1.msra.mxu0 0.0
  %365 = vmatprep.subr.mxu0 0.0
  %366 = vmatpush1.msra.mxu0 0.0
  %367 = vmatprep.subr.mxu0 0.0
  %368 = vmatpush1.msra.mxu0 0.0
  %369 = vmatprep.subr.mxu0 0.0
  %370 = vmatpush1.msra.mxu0 0.0
  %371 = vmatprep.subr.mxu0 0.0
  %372 = vmatpush1.msra.mxu0 0.0
  %373 = vmatprep.subr.mxu0 0.0
  %374 = vmatpush1.msra.mxu0 0.0
  %375 = vmatprep.subr.mxu0 0.0
  %376 = vmatpush1.msra.mxu0 0.0
  %377 = vmatprep.subr.mxu0 0.0
  %378 = vmatpush1.msra.mxu0 0.0
  %379 = vmatprep.subr.mxu0 0.0
  %380 = vmatpush1.msra.mxu0 0.0
  %381 = vmatprep.subr.mxu0 0.0
  %382 = vmatpush1.msra.mxu0 0.0
  %383 = vmatprep.subr.mxu0 0.0
  %384 = vmatpush1.msra.mxu0 0.0
  %385 = vmatprep.subr.mxu0 0.0
  %386 = vmatpush1.msra.mxu0 0.0
  %387 = vmatprep.subr.mxu0 0.0
  %388 = vmatpush1.msra.mxu0 0.0
  %389 = vmatprep.subr.mxu0 0.0
  %390 = vmatpush1.msra.mxu0 0.0
  %391 = vmatprep.subr.mxu0 0.0
  %392 = vmatpush1.msra.mxu0 0.0
  %393 = vmatprep.subr.mxu0 0.0
  %394 = vmatpush1.msra.mxu0 0.0
  %395 = vmatprep.subr.mxu0 0.0
  %396 = vmatpush1.msra.mxu0 0.0
  %397 = vmatprep.subr.mxu0 0.0
  %398 = vmatpush1.msra.mxu0 0.0
  %399 = vmatprep.subr.mxu0 0.0
  %400 = vmatpush1.msra.mxu0 0.0
  %401 = vmatprep.subr.mxu0 0.0
  %402 = vmatpush1.msra.mxu0 0.0
  %403 = vmatprep.subr.mxu0 0.0
  %404 = vmatpush1.msra.mxu0 0.0
  %405 = vmatprep.subr.mxu0 0.0
  %406 = vmatpush1.msra.mxu0 0.0
  %407 = vmatprep.subr.mxu0 0.0
  %408 = vmatpush1.msra.mxu0 0.0
  %409 = vmatprep.subr.mxu0 0.0
  %410 = vmatpush1.msra.mxu0 0.0
  %411 = vmatprep.subr.mxu0 0.0
  %412 = vmatpush1.msra.mxu0 0.0
  %413 = vmatprep.subr.mxu0 0.0
  %414 = vmatpush1.msra.mxu0 0.0
  %415 = vmatprep.subr.mxu0 0.0
  %416 = vmatpush1.msra.mxu0 0.0
  %417 = vmatprep.mubr.f32.mxu0 0.0
  %418 = vmatmul.mubr.f32.gmra.mrb[0].mxu0 %v348
  %v419 = vpop.f32.mrb[0].mxu0
  %v420 = vadd.f32 0.0, %v419
  %v421 = vpop.f32.mrb[0].mxu0
  %422 = vmatprep.mubr.f32.mxu0 0.0
  %423 = vmatmul.mubr.f32.gmra.mrb[0].mxu0 %v351
  %v424 = vpop.f32.mrb[0].mxu0
  %v425 = vadd.f32 0.0, %v424
  %v426 = vpop.f32.mrb[0].mxu0
  %427 = vdwg.mxu0
  %v428 = vmul.f32 %v420, %v135
  %v429 = vmul.f32 %v425, %v138
  %v430 = vpack.c.bf16 %v429, %v428
  %v431 = vld [vmem:[%s8] sm:$0xff]
  %v432 = vld [vmem:[%s8 + $0x8] sm:$0xf]
  %v433 = vld [vmem:[%s8 + $0xc] sm:$0xff]
  %v434 = vld [vmem:[%s8 + $0x14] sm:$0xf]
  %v435 = vld [vmem:[%s8 + $0x18] sm:$0xff]
  %v436 = vld [vmem:[%s8 + $0x20] sm:$0xf]
  %v437 = vld [vmem:[%s8 + $0x24] sm:$0xff]
  %v438 = vld [vmem:[%s8 + $0x2c] sm:$0xf]
  %v447 = vunpack.c.l.b16 %v431
  %v448 = vunpack.c.h.b16 %v431
  %v449 = vunpack.c.l.b16 %v432
  %v450 = vunpack.c.l.b16 %v433
  %v451 = vunpack.c.h.b16 %v433
  %v452 = vunpack.c.l.b16 %v434
  %v453 = vunpack.c.l.b16 %v435
  %v454 = vunpack.c.h.b16 %v435
  %v455 = vunpack.c.l.b16 %v436
  %v456 = vunpack.c.l.b16 %v437
  %v457 = vunpack.c.h.b16 %v437
  %v458 = vunpack.c.l.b16 %v438
  %v459 = vpack.c.b16 %v450, %v447
  %v460 = vpack.c.b16 %v451, %v448
  %v461 = vpack.c.b16 %v452, %v449
  %v462 = vpack.c.b16 %v456, %v453
  %v463 = vpack.c.b16 %v457, %v454
  %v464 = vpack.c.b16 %v458, %v455
  %v472 = vsel %vm151, %v430, 0
  %474 = vmatprep.subr.bf16.mxu0 %v460
  %475 = vmatpush1.bf16.msra.mxu0 %v459
  %476 = vmatprep.subr.bf16.mxu0 %v463
  %477 = vmatpush1.bf16.msra.mxu0 %v462
  %478 = vmatprep.subr.bf16.mxu0 0
  %479 = vmatpush1.bf16.msra.mxu0 0
  %480 = vmatprep.subr.bf16.mxu0 0
  %481 = vmatpush1.bf16.msra.mxu0 0
  %482 = vmatprep.subr.bf16.mxu0 0
  %483 = vmatpush1.bf16.msra.mxu0 0
  %484 = vmatprep.subr.bf16.mxu0 0
  %485 = vmatpush1.bf16.msra.mxu0 0
  %486 = vmatprep.subr.bf16.mxu0 0
  %487 = vmatpush1.bf16.msra.mxu0 0
  %488 = vmatprep.subr.bf16.mxu0 0
  %489 = vmatpush1.bf16.msra.mxu0 0
  %490 = vmatprep.subr.bf16.mxu0 0
  %491 = vmatpush1.bf16.msra.mxu0 0
  %492 = vmatprep.subr.bf16.mxu0 0
  %493 = vmatpush1.bf16.msra.mxu0 0
  %494 = vmatprep.subr.bf16.mxu0 0
  %495 = vmatpush1.bf16.msra.mxu0 0
  %496 = vmatprep.subr.bf16.mxu0 0
  %497 = vmatpush1.bf16.msra.mxu0 0
  %498 = vmatprep.subr.bf16.mxu0 0
  %499 = vmatpush1.bf16.msra.mxu0 0
  %500 = vmatprep.subr.bf16.mxu0 0
  %501 = vmatpush1.bf16.msra.mxu0 0
  %502 = vmatprep.subr.bf16.mxu0 0
  %503 = vmatpush1.bf16.msra.mxu0 0
  %504 = vmatprep.subr.bf16.mxu0 0
  %505 = vmatpush1.bf16.msra.mxu0 0
  %506 = vmatprep.mubr.bf16.mxu0 0
  %507 = vmatmul.mubr.bf16.gmra.mrb[0].mxu0 %v472
  %v508 = vpop.f32.mrb[0].mxu0
  %v509 = vadd.f32 0.0, %v508
  %v510 = vpop.f32.mrb[0].mxu0
  %v511 = vadd.f32 0.0, %v510
  %v512 = vpop.f32.mrb[0].mxu0
  %v513 = vadd.f32 0.0, %v512
  %v514 = vpop.f32.mrb[0].mxu0
  %v515 = vadd.f32 0.0, %v514
  %516 = vdwg.mxu0
  %517 = vmatprep.subr.bf16.mxu0 0
  %518 = vmatpush1.bf16.msra.mxu0 %v461
  %519 = vmatprep.subr.bf16.mxu0 0
  %520 = vmatpush1.bf16.msra.mxu0 %v464
  %521 = vmatprep.subr.bf16.mxu0 0
  %522 = vmatpush1.bf16.msra.mxu0 0
  %523 = vmatprep.subr.bf16.mxu0 0
  %524 = vmatpush1.bf16.msra.mxu0 0
  %525 = vmatprep.subr.bf16.mxu0 0
  %526 = vmatpush1.bf16.msra.mxu0 0
  %527 = vmatprep.subr.bf16.mxu0 0
  %528 = vmatpush1.bf16.msra.mxu0 0
  %529 = vmatprep.subr.bf16.mxu0 0
  %530 = vmatpush1.bf16.msra.mxu0 0
  %531 = vmatprep.subr.bf16.mxu0 0
  %532 = vmatpush1.bf16.msra.mxu0 0
  %533 = vmatprep.subr.bf16.mxu0 0
  %534 = vmatpush1.bf16.msra.mxu0 0
  %535 = vmatprep.subr.bf16.mxu0 0
  %536 = vmatpush1.bf16.msra.mxu0 0
  %537 = vmatprep.subr.bf16.mxu0 0
  %538 = vmatpush1.bf16.msra.mxu0 0
  %539 = vmatprep.subr.bf16.mxu0 0
  %540 = vmatpush1.bf16.msra.mxu0 0
  %541 = vmatprep.subr.bf16.mxu0 0
  %542 = vmatpush1.bf16.msra.mxu0 0
  %543 = vmatprep.subr.bf16.mxu0 0
  %544 = vmatpush1.bf16.msra.mxu0 0
  %545 = vmatprep.subr.bf16.mxu0 0
  %546 = vmatpush1.bf16.msra.mxu0 0
  %547 = vmatprep.subr.bf16.mxu0 0
  %548 = vmatpush1.bf16.msra.mxu0 0
  %549 = vmatprep.mubr.bf16.mxu0 0
  %550 = vmatmul.mubr.bf16.gmra.mrb[0].mxu0 %v472
  %v551 = vpop.f32.mrb[0].mxu0
  %v552 = vadd.f32 0.0, %v551
  %v553 = vpop.f32.mrb[0].mxu0
  %v554 = vpop.f32.mrb[0].mxu0
  %v555 = vadd.f32 0.0, %v554
  %v556 = vpop.f32.mrb[0].mxu0
  %557 = vdwg.mxu0
  %v558 = vld [vmem:[%s11] sm:$0x1]
  %v560 = vlaneseq
  %v561 = vshrl.u32 %v560, 7
  %v562 = vsub.s32 0, %v561
  %v563 = vrot.slane %v558, %v562
  %564 = vrot.lane.b32.xlu0 %v563, 32
  %v565 = vpop.permute.xlu0 %564
  %v567 = vadd.f32 %v509, %v565
  %v568 = vadd.f32 %v513, %v565
  %v569 = vmul.f32 %v509, %v509
  %v570 = vmul.f32 %v513, %v513
  %v571 = vld [vmem:[%s10] sm:$0xff]
  %v572 = vld [vmem:[%s10 + $0x8] sm:$0xff]
  %v573 = vld [vmem:[%s10 + $0x10] sm:$0xff]
  %v574 = vld [vmem:[%s10 + $0x18] sm:$0xff]
  %v576 = vsel %vm151, %v569, 0
  %v579 = vsel %vm151, %v570, 0
  %581 = vmatprep.subr.mxu0 0.0
  %582 = vmatpush1.msra.mxu0 %v571
  %583 = vmatprep.subr.mxu0 0.0
  %584 = vmatpush1.msra.mxu0 %v572
  %585 = vmatprep.subr.mxu0 0.0
  %586 = vmatpush1.msra.mxu0 %v573
  %587 = vmatprep.subr.mxu0 0.0
  %588 = vmatpush1.msra.mxu0 %v574
  %589 = vmatprep.subr.mxu0 0.0
  %590 = vmatpush1.msra.mxu0 0.0
  %591 = vmatprep.subr.mxu0 0.0
  %592 = vmatpush1.msra.mxu0 0.0
  %593 = vmatprep.subr.mxu0 0.0
  %594 = vmatpush1.msra.mxu0 0.0
  %595 = vmatprep.subr.mxu0 0.0
  %596 = vmatpush1.msra.mxu0 0.0
  %597 = vmatprep.subr.mxu0 0.0
  %598 = vmatpush1.msra.mxu0 0.0
  %599 = vmatprep.subr.mxu0 0.0
  %600 = vmatpush1.msra.mxu0 0.0
  %601 = vmatprep.subr.mxu0 0.0
  %602 = vmatpush1.msra.mxu0 0.0
  %603 = vmatprep.subr.mxu0 0.0
  %604 = vmatpush1.msra.mxu0 0.0
  %605 = vmatprep.subr.mxu0 0.0
  %606 = vmatpush1.msra.mxu0 0.0
  %607 = vmatprep.subr.mxu0 0.0
  %608 = vmatpush1.msra.mxu0 0.0
  %609 = vmatprep.subr.mxu0 0.0
  %610 = vmatpush1.msra.mxu0 0.0
  %611 = vmatprep.subr.mxu0 0.0
  %612 = vmatpush1.msra.mxu0 0.0
  %613 = vmatprep.subr.mxu0 0.0
  %614 = vmatpush1.msra.mxu0 0.0
  %615 = vmatprep.subr.mxu0 0.0
  %616 = vmatpush1.msra.mxu0 0.0
  %617 = vmatprep.subr.mxu0 0.0
  %618 = vmatpush1.msra.mxu0 0.0
  %619 = vmatprep.subr.mxu0 0.0
  %620 = vmatpush1.msra.mxu0 0.0
  %621 = vmatprep.subr.mxu0 0.0
  %622 = vmatpush1.msra.mxu0 0.0
  %623 = vmatprep.subr.mxu0 0.0
  %624 = vmatpush1.msra.mxu0 0.0
  %625 = vmatprep.subr.mxu0 0.0
  %626 = vmatpush1.msra.mxu0 0.0
  %627 = vmatprep.subr.mxu0 0.0
  %628 = vmatpush1.msra.mxu0 0.0
  %629 = vmatprep.subr.mxu0 0.0
  %630 = vmatpush1.msra.mxu0 0.0
  %631 = vmatprep.subr.mxu0 0.0
  %632 = vmatpush1.msra.mxu0 0.0
  %633 = vmatprep.subr.mxu0 0.0
  %634 = vmatpush1.msra.mxu0 0.0
  %635 = vmatprep.subr.mxu0 0.0
  %636 = vmatpush1.msra.mxu0 0.0
  %637 = vmatprep.subr.mxu0 0.0
  %638 = vmatpush1.msra.mxu0 0.0
  %639 = vmatprep.subr.mxu0 0.0
  %640 = vmatpush1.msra.mxu0 0.0
  %641 = vmatprep.subr.mxu0 0.0
  %642 = vmatpush1.msra.mxu0 0.0
  %643 = vmatprep.subr.mxu0 0.0
  %644 = vmatpush1.msra.mxu0 0.0
  %645 = vmatprep.mubr.f32.mxu0 0.0
  %646 = vmatmul.mubr.f32.gmra.mrb[0].mxu0 %v576
  %v647 = vpop.f32.mrb[0].mxu0
  %v648 = vadd.f32 0.0, %v647
  %v649 = vpop.f32.mrb[0].mxu0
  %650 = vmatprep.mubr.f32.mxu0 0.0
  %651 = vmatmul.mubr.f32.gmra.mrb[0].mxu0 %v579
  %v652 = vpop.f32.mrb[0].mxu0
  %v653 = vadd.f32 0.0, %v652
  %v654 = vpop.f32.mrb[0].mxu0
  %655 = vdwg.mxu0
  %v656 = vld [vmem:[%s9] sm:$0x1]
  %v657 = vmul.f32 %v648, %v648
  %v658 = vmul.f32 %v653, %v653
  %v659 = vadd.f32 %v657, 1e-16
  %v660 = vadd.f32 %v658, 1e-16
  %v661 = vrsqrt.pop %v659
  %v662 = vmul.f32 %v659, %v661
  %vm663 = vcmp.eq.f32.partialorder %v659, inf
  %v664 = vsel %vm663, %v659, %v662
  %vm665 = vcmp.eq.f32.partialorder %v659, 0.0
  %v666 = vand.u32 %v659, 2147483648
  %v667 = vsel %vm665, %v666, %v664
  %v668 = vrsqrt.pop %v660
  %v669 = vmul.f32 %v660, %v668
  %vm670 = vcmp.eq.f32.partialorder %v660, inf
  %v671 = vsel %vm670, %v660, %v669
  %vm672 = vcmp.eq.f32.partialorder %v660, 0.0
  %v673 = vand.u32 %v660, 2147483648
  %v674 = vsel %vm672, %v673, %v671
  %v675 = vrsqrt.pop %v667
  %v676 = vmul.f32 %v667, %v675
  %vm677 = vcmp.eq.f32.partialorder %v667, inf
  %v678 = vsel %vm677, %v667, %v676
  %vm679 = vcmp.eq.f32.partialorder %v667, 0.0
  %v680 = vand.u32 %v667, 2147483648
  %v681 = vsel %vm679, %v680, %v678
  %v682 = vrsqrt.pop %v674
  %v683 = vmul.f32 %v674, %v682
  %vm684 = vcmp.eq.f32.partialorder %v674, inf
  %v685 = vsel %vm684, %v674, %v683
  %vm686 = vcmp.eq.f32.partialorder %v674, 0.0
  %v687 = vand.u32 %v674, 2147483648
  %v688 = vsel %vm686, %v687, %v685
  %v689 = vsub.f32 %v681, 1.0
  %v690 = vsub.f32 %v688, 1.0
  %v692 = vlaneseq
  %v693 = vshrl.u32 %v692, 7
  %v694 = vsub.s32 0, %v693
  %v695 = vrot.slane %v656, %v694
  %v697 = vmul.f32 %v695, %v689
  %v698 = vmul.f32 %v695, %v690
  %v699 = vadd.f32 %v697, 1.000001
  %v700 = vadd.f32 %v698, 1.000001
  %v702 = vsel %vm346, %v699, 0
  %v705 = vsel %vm346, %v700, 0
  %707 = vmatprep.subr.mxu0 0.0
  %708 = vmatpush1.msra.mxu0 %v344
  %709 = vmatprep.subr.mxu0 0.0
  %710 = vmatpush1.msra.mxu0 %v345
  %711 = vmatprep.subr.mxu0 0.0
  %712 = vmatpush1.msra.mxu0 0.0
  %713 = vmatprep.subr.mxu0 0.0
  %714 = vmatpush1.msra.mxu0 0.0
  %715 = vmatprep.subr.mxu0 0.0
  %716 = vmatpush1.msra.mxu0 0.0
  %717 = vmatprep.subr.mxu0 0.0
  %718 = vmatpush1.msra.mxu0 0.0
  %719 = vmatprep.subr.mxu0 0.0
  %720 = vmatpush1.msra.mxu0 0.0
  %721 = vmatprep.subr.mxu0 0.0
  %722 = vmatpush1.msra.mxu0 0.0
  %723 = vmatprep.subr.mxu0 0.0
  %724 = vmatpush1.msra.mxu0 0.0
  %725 = vmatprep.subr.mxu0 0.0
  %726 = vmatpush1.msra.mxu0 0.0
  %727 = vmatprep.subr.mxu0 0.0
  %728 = vmatpush1.msra.mxu0 0.0
  %729 = vmatprep.subr.mxu0 0.0
  %730 = vmatpush1.msra.mxu0 0.0
  %731 = vmatprep.subr.mxu0 0.0
  %732 = vmatpush1.msra.mxu0 0.0
  %733 = vmatprep.subr.mxu0 0.0
  %734 = vmatpush1.msra.mxu0 0.0
  %735 = vmatprep.subr.mxu0 0.0
  %736 = vmatpush1.msra.mxu0 0.0
  %737 = vmatprep.subr.mxu0 0.0
  %738 = vmatpush1.msra.mxu0 0.0
  %739 = vmatprep.subr.mxu0 0.0
  %740 = vmatpush1.msra.mxu0 0.0
  %741 = vmatprep.subr.mxu0 0.0
  %742 = vmatpush1.msra.mxu0 0.0
  %743 = vmatprep.subr.mxu0 0.0
  %744 = vmatpush1.msra.mxu0 0.0
  %745 = vmatprep.subr.mxu0 0.0
  %746 = vmatpush1.msra.mxu0 0.0
  %747 = vmatprep.subr.mxu0 0.0
  %748 = vmatpush1.msra.mxu0 0.0
  %749 = vmatprep.subr.mxu0 0.0
  %750 = vmatpush1.msra.mxu0 0.0
  %751 = vmatprep.subr.mxu0 0.0
  %752 = vmatpush1.msra.mxu0 0.0
  %753 = vmatprep.subr.mxu0 0.0
  %754 = vmatpush1.msra.mxu0 0.0
  %755 = vmatprep.subr.mxu0 0.0
  %756 = vmatpush1.msra.mxu0 0.0
  %757 = vmatprep.subr.mxu0 0.0
  %758 = vmatpush1.msra.mxu0 0.0
  %759 = vmatprep.subr.mxu0 0.0
  %760 = vmatpush1.msra.mxu0 0.0
  %761 = vmatprep.subr.mxu0 0.0
  %762 = vmatpush1.msra.mxu0 0.0
  %763 = vmatprep.subr.mxu0 0.0
  %764 = vmatpush1.msra.mxu0 0.0
  %765 = vmatprep.subr.mxu0 0.0
  %766 = vmatpush1.msra.mxu0 0.0
  %767 = vmatprep.subr.mxu0 0.0
  %768 = vmatpush1.msra.mxu0 0.0
  %769 = vmatprep.subr.mxu0 0.0
  %770 = vmatpush1.msra.mxu0 0.0
  %771 = vmatprep.mubr.f32.mxu0 0.0
  %772 = vmatmul.mubr.f32.gmra.mrb[0].mxu0 %v702
  %v773 = vpop.f32.mrb[0].mxu0
  %v774 = vadd.f32 0.0, %v773
  %v775 = vpop.f32.mrb[0].mxu0
  %776 = vmatprep.mubr.f32.mxu0 0.0
  %777 = vmatmul.mubr.f32.gmra.mrb[0].mxu0 %v705
  %v778 = vpop.f32.mrb[0].mxu0
  %v779 = vadd.f32 0.0, %v778
  %v780 = vpop.f32.mrb[0].mxu0
  %781 = vdwg.mxu0
  %v782 = vrcp.pop %v774
  %v783 = vrcp.pop %v779
  %v784 = vmul.f32 %v509, %v782
  %v785 = vmul.f32 %v513, %v783
  %v786 = vpack.c.bf16 %v785, %v784
  %v787 = vld [vmem:[%s12] sm:$0xff]
  %v788 = vld [vmem:[%s12 + $0x8] sm:$0xff]
  %v789 = vld [vmem:[%s12 + $0x10] sm:$0xff]
  %v790 = vld [vmem:[%s12 + $0x18] sm:$0xff]
  %v795 = vunpack.c.l.b16 %v787
  %v796 = vunpack.c.h.b16 %v787
  %v797 = vunpack.c.l.b16 %v788
  %v798 = vunpack.c.h.b16 %v788
  %v799 = vunpack.c.l.b16 %v789
  %v800 = vunpack.c.h.b16 %v789
  %v801 = vunpack.c.l.b16 %v790
  %v802 = vunpack.c.h.b16 %v790
  %v803 = vpack.c.b16 %v797, %v795
  %v804 = vpack.c.b16 %v798, %v796
  %v805 = vpack.c.b16 %v801, %v799
  %v806 = vpack.c.b16 %v802, %v800
  %v812 = vsel %vm151, %v786, 0
  %814 = vmatprep.subr.bf16.mxu0 %v804
  %815 = vmatpush1.bf16.msra.mxu0 %v803
  %816 = vmatprep.subr.bf16.mxu0 %v806
  %817 = vmatpush1.bf16.msra.mxu0 %v805
  %818 = vmatprep.subr.bf16.mxu0 0
  %819 = vmatpush1.bf16.msra.mxu0 0
  %820 = vmatprep.subr.bf16.mxu0 0
  %821 = vmatpush1.bf16.msra.mxu0 0
  %822 = vmatprep.subr.bf16.mxu0 0
  %823 = vmatpush1.bf16.msra.mxu0 0
  %824 = vmatprep.subr.bf16.mxu0 0
  %825 = vmatpush1.bf16.msra.mxu0 0
  %826 = vmatprep.subr.bf16.mxu0 0
  %827 = vmatpush1.bf16.msra.mxu0 0
  %828 = vmatprep.subr.bf16.mxu0 0
  %829 = vmatpush1.bf16.msra.mxu0 0
  %830 = vmatprep.subr.bf16.mxu0 0
  %831 = vmatpush1.bf16.msra.mxu0 0
  %832 = vmatprep.subr.bf16.mxu0 0
  %833 = vmatpush1.bf16.msra.mxu0 0
  %834 = vmatprep.subr.bf16.mxu0 0
  %835 = vmatpush1.bf16.msra.mxu0 0
  %836 = vmatprep.subr.bf16.mxu0 0
  %837 = vmatpush1.bf16.msra.mxu0 0
  %838 = vmatprep.subr.bf16.mxu0 0
  %839 = vmatpush1.bf16.msra.mxu0 0
  %840 = vmatprep.subr.bf16.mxu0 0
  %841 = vmatpush1.bf16.msra.mxu0 0
  %842 = vmatprep.subr.bf16.mxu0 0
  %843 = vmatpush1.bf16.msra.mxu0 0
  %844 = vmatprep.subr.bf16.mxu0 0
  %845 = vmatpush1.bf16.msra.mxu0 0
  %846 = vmatprep.mubr.bf16.mxu0 0
  %847 = vmatmul.mubr.bf16.gmra.mrb[0].mxu0 %v812
  %v848 = vpop.f32.mrb[0].mxu0
  %v849 = vadd.f32 0.0, %v848
  %v850 = vpop.f32.mrb[0].mxu0
  %v851 = vadd.f32 0.0, %v850
  %v852 = vpop.f32.mrb[0].mxu0
  %v853 = vadd.f32 0.0, %v852
  %v854 = vpop.f32.mrb[0].mxu0
  %v855 = vadd.f32 0.0, %v854
  %856 = vdwg.mxu0
  %861 = vrot.lane.b32.xlu0 %v849, 64
  %v862 = vpop.permute.xlu0 %861
  %863 = vrot.lane.b32.xlu0 %v851, 64
  %v864 = vpop.permute.xlu0 %863
  %865 = vrot.lane.b32.xlu0 %v853, 64
  %v866 = vpop.permute.xlu0 %865
  %867 = vrot.lane.b32.xlu0 %v855, 64
  %v868 = vpop.permute.xlu0 %867
  %v869 = vsel %vm96, %v862, %v864
  %v870 = vsel %vm96, %v866, %v868
  %v877 = vmul.f32 %v509, %v862
  %v878 = vmul.f32 %v511, %v869
  %v879 = vmul.f32 %v552, %v864
  %v880 = vmul.f32 %v513, %v866
  %v881 = vmul.f32 %v515, %v870
  %v882 = vmul.f32 %v555, %v868
  %v883 = vld [vmem:[%s13] sm:$0xff]
  %v884 = vld [vmem:[%s13 + $0x8] sm:$0xff]
  %v885 = vld [vmem:[%s13 + $0x10] sm:$0xff]
  %v886 = vld [vmem:[%s13 + $0x18] sm:$0xff]
  %v887 = vld [vmem:[%s13 + $0x20] sm:$0xff]
  %v888 = vld [vmem:[%s13 + $0x28] sm:$0xff]
  %v889 = vld [vmem:[%s13 + $0x30] sm:$0xff]
  %v890 = vld [vmem:[%s13 + $0x38] sm:$0xff]
  %v891 = vld [vmem:[%s13 + $0x40] sm:$0xff]
  %v892 = vld [vmem:[%s13 + $0x48] sm:$0xff]
  %v893 = vld [vmem:[%s13 + $0x50] sm:$0xff]
  %v894 = vld [vmem:[%s13 + $0x58] sm:$0xff]
  %v895 = vld [vmem:[%s13 + $0x60] sm:$0xff]
  %v896 = vld [vmem:[%s13 + $0x68] sm:$0xff]
  %v897 = vld [vmem:[%s13 + $0x70] sm:$0xff]
  %v898 = vld [vmem:[%s13 + $0x78] sm:$0xff]
  %v899 = vld [vmem:[%s13 + $0x80] sm:$0xff]
  %v900 = vld [vmem:[%s13 + $0x88] sm:$0xff]
  %v901 = vld [vmem:[%s13 + $0x90] sm:$0xff]
  %v902 = vld [vmem:[%s13 + $0x98] sm:$0xff]
  %v903 = vld [vmem:[%s13 + $0xa0] sm:$0xff]
  %v904 = vld [vmem:[%s13 + $0xa8] sm:$0xff]
  %v905 = vld [vmem:[%s13 + $0xb0] sm:$0xff]
  %v906 = vld [vmem:[%s13 + $0xb8] sm:$0xff]
  %v907 = vld [vmem:[%s13 + $0xc0] sm:$0xff]
  %v908 = vld [vmem:[%s13 + $0xc8] sm:$0xff]
  %v909 = vld [vmem:[%s13 + $0xd0] sm:$0xff]
  %v910 = vld [vmem:[%s13 + $0xd8] sm:$0xff]
  %v911 = vld [vmem:[%s13 + $0xe0] sm:$0xff]
  %v912 = vld [vmem:[%s13 + $0xe8] sm:$0xff]
  %v913 = vld [vmem:[%s13 + $0xf0] sm:$0xff]
  %v914 = vld [vmem:[%s13 + $0xf8] sm:$0xff]
  %921 = vrot.lane.b32.xlu0 %v877, 64
  %v922 = vpop.permute.xlu0 %921
  %923 = vrot.lane.b32.xlu0 %v878, 64
  %v924 = vpop.permute.xlu0 %923
  %925 = vrot.lane.b32.xlu0 %v879, 64
  %v926 = vpop.permute.xlu0 %925
  %927 = vrot.lane.b32.xlu0 %v880, 64
  %v928 = vpop.permute.xlu0 %927
  %929 = vrot.lane.b32.xlu0 %v881, 64
  %v930 = vpop.permute.xlu0 %929
  %931 = vrot.lane.b32.xlu0 %v882, 64
  %v932 = vpop.permute.xlu0 %931
  %v933 = vsel %vm96, %v922, %v924
  %v934 = vsel %vm96, %v924, %v926
  %v935 = vsel %vm96, %v928, %v930
  %v936 = vsel %vm96, %v930, %v932
  %941 = vmatprep.subr.mxu0 0.0
  %942 = vmatpush1.msra.mxu0 %v883
  %943 = vmatprep.subr.mxu0 0.0
  %944 = vmatpush1.msra.mxu0 %v884
  %945 = vmatprep.subr.mxu0 0.0
  %946 = vmatpush1.msra.mxu0 %v885
  %947 = vmatprep.subr.mxu0 0.0
  %948 = vmatpush1.msra.mxu0 %v886
  %949 = vmatprep.subr.mxu0 0.0
  %950 = vmatpush1.msra.mxu0 %v887
  %951 = vmatprep.subr.mxu0 0.0
  %952 = vmatpush1.msra.mxu0 %v888
  %953 = vmatprep.subr.mxu0 0.0
  %954 = vmatpush1.msra.mxu0 %v889
  %955 = vmatprep.subr.mxu0 0.0
  %956 = vmatpush1.msra.mxu0 %v890
  %957 = vmatprep.subr.mxu0 0.0
  %958 = vmatpush1.msra.mxu0 %v891
  %959 = vmatprep.subr.mxu0 0.0
  %960 = vmatpush1.msra.mxu0 %v892
  %961 = vmatprep.subr.mxu0 0.0
  %962 = vmatpush1.msra.mxu0 %v893
  %963 = vmatprep.subr.mxu0 0.0
  %964 = vmatpush1.msra.mxu0 %v894
  %965 = vmatprep.subr.mxu0 0.0
  %966 = vmatpush1.msra.mxu0 %v895
  %967 = vmatprep.subr.mxu0 0.0
  %968 = vmatpush1.msra.mxu0 %v896
  %969 = vmatprep.subr.mxu0 0.0
  %970 = vmatpush1.msra.mxu0 %v897
  %971 = vmatprep.subr.mxu0 0.0
  %972 = vmatpush1.msra.mxu0 %v898
  %973 = vmatprep.subr.mxu0 0.0
  %974 = vmatpush1.msra.mxu0 %v899
  %975 = vmatprep.subr.mxu0 0.0
  %976 = vmatpush1.msra.mxu0 %v900
  %977 = vmatprep.subr.mxu0 0.0
  %978 = vmatpush1.msra.mxu0 %v901
  %979 = vmatprep.subr.mxu0 0.0
  %980 = vmatpush1.msra.mxu0 %v902
  %981 = vmatprep.subr.mxu0 0.0
  %982 = vmatpush1.msra.mxu0 %v903
  %983 = vmatprep.subr.mxu0 0.0
  %984 = vmatpush1.msra.mxu0 %v904
  %985 = vmatprep.subr.mxu0 0.0
  %986 = vmatpush1.msra.mxu0 %v905
  %987 = vmatprep.subr.mxu0 0.0
  %988 = vmatpush1.msra.mxu0 %v906
  %989 = vmatprep.subr.mxu0 0.0
  %990 = vmatpush1.msra.mxu0 %v907
  %991 = vmatprep.subr.mxu0 0.0
  %992 = vmatpush1.msra.mxu0 %v908
  %993 = vmatprep.subr.mxu0 0.0
  %994 = vmatpush1.msra.mxu0 %v909
  %995 = vmatprep.subr.mxu0 0.0
  %996 = vmatpush1.msra.mxu0 %v910
  %997 = vmatprep.subr.mxu0 0.0
  %998 = vmatpush1.msra.mxu0 %v911
  %999 = vmatprep.subr.mxu0 0.0
  %1000 = vmatpush1.msra.mxu0 %v912
  %1001 = vmatprep.subr.mxu0 0.0
  %1002 = vmatpush1.msra.mxu0 %v913
  %1003 = vmatprep.subr.mxu0 0.0
  %1004 = vmatpush1.msra.mxu0 %v914
  %1005 = vmatprep.mubr.f32.mxu0 %v934
  %1006 = vmatmul.mubr.f32.gmra.mrb[0].mxu0 %v933
  %v1007 = vpop.f32.mrb[0].mxu0
  %v1008 = vadd.f32 0.0, %v1007
  %v1009 = vpop.f32.mrb[0].mxu0
  %1010 = vmatprep.mubr.f32.mxu0 %v936
  %1011 = vmatmul.mubr.f32.gmra.mrb[0].mxu0 %v935
  %v1012 = vpop.f32.mrb[0].mxu0
  %v1013 = vadd.f32 0.0, %v1012
  %v1014 = vpop.f32.mrb[0].mxu0
  %1015 = vdwg.mxu0
  %1018 = vrot.lane.b32.xlu0 %v1008, 32
  %v1019 = vpop.permute.xlu0 %1018
  %1020 = vrot.lane.b32.xlu0 %v1013, 32
  %v1021 = vpop.permute.xlu0 %1020
  %v1024 = vadd.f32 %v567, %v1019
  %v1025 = vadd.f32 %v568, %v1021
  %v1026 = vmul.f32 %v1024, 0.70710677
  %v1027 = vmul.f32 %v1025, 0.70710677
  %v1028 = vmul.f32 %v1026, %v1026
  %v1029 = vmul.f32 %v1027, %v1027
  %v1030 = vld [vmem:[%s14] sm:$0xff]
  %v1031 = vld [vmem:[%s14 + $0x8] sm:$0xff]
  %v1032 = vld [vmem:[%s14 + $0x10] sm:$0xff]
  %v1033 = vld [vmem:[%s14 + $0x18] sm:$0xff]
  %1036 = vrot.lane.b32.xlu0 %v1028, 96
  %v1037 = vpop.permute.xlu0 %1036
  %1038 = vrot.lane.b32.xlu0 %v1029, 96
  %v1039 = vpop.permute.xlu0 %1038
  %v1040 = vsel %vm151, %v1037, 0
  %v1042 = vsel %vm151, %v1039, 0
  %1044 = vmatprep.subr.mxu0 0.0
  %1045 = vmatpush1.msra.mxu0 %v1030
  %1046 = vmatprep.subr.mxu0 0.0
  %1047 = vmatpush1.msra.mxu0 %v1031
  %1048 = vmatprep.subr.mxu0 0.0
  %1049 = vmatpush1.msra.mxu0 %v1032
  %1050 = vmatprep.subr.mxu0 0.0
  %1051 = vmatpush1.msra.mxu0 %v1033
  %1052 = vmatprep.subr.mxu0 0.0
  %1053 = vmatpush1.msra.mxu0 0.0
  %1054 = vmatprep.subr.mxu0 0.0
  %1055 = vmatpush1.msra.mxu0 0.0
  %1056 = vmatprep.subr.mxu0 0.0
  %1057 = vmatpush1.msra.mxu0 0.0
  %1058 = vmatprep.subr.mxu0 0.0
  %1059 = vmatpush1.msra.mxu0 0.0
  %1060 = vmatprep.subr.mxu0 0.0
  %1061 = vmatpush1.msra.mxu0 0.0
  %1062 = vmatprep.subr.mxu0 0.0
  %1063 = vmatpush1.msra.mxu0 0.0
  %1064 = vmatprep.subr.mxu0 0.0
  %1065 = vmatpush1.msra.mxu0 0.0
  %1066 = vmatprep.subr.mxu0 0.0
  %1067 = vmatpush1.msra.mxu0 0.0
  %1068 = vmatprep.subr.mxu0 0.0
  %1069 = vmatpush1.msra.mxu0 0.0
  %1070 = vmatprep.subr.mxu0 0.0
  %1071 = vmatpush1.msra.mxu0 0.0
  %1072 = vmatprep.subr.mxu0 0.0
  %1073 = vmatpush1.msra.mxu0 0.0
  %1074 = vmatprep.subr.mxu0 0.0
  %1075 = vmatpush1.msra.mxu0 0.0
  %1076 = vmatprep.subr.mxu0 0.0
  %1077 = vmatpush1.msra.mxu0 0.0
  %1078 = vmatprep.subr.mxu0 0.0
  %1079 = vmatpush1.msra.mxu0 0.0
  %1080 = vmatprep.subr.mxu0 0.0
  %1081 = vmatpush1.msra.mxu0 0.0
  %1082 = vmatprep.subr.mxu0 0.0
  %1083 = vmatpush1.msra.mxu0 0.0
  %1084 = vmatprep.subr.mxu0 0.0
  %1085 = vmatpush1.msra.mxu0 0.0
  %1086 = vmatprep.subr.mxu0 0.0
  %1087 = vmatpush1.msra.mxu0 0.0
  %1088 = vmatprep.subr.mxu0 0.0
  %1089 = vmatpush1.msra.mxu0 0.0
  %1090 = vmatprep.subr.mxu0 0.0
  %1091 = vmatpush1.msra.mxu0 0.0
  %1092 = vmatprep.subr.mxu0 0.0
  %1093 = vmatpush1.msra.mxu0 0.0
  %1094 = vmatprep.subr.mxu0 0.0
  %1095 = vmatpush1.msra.mxu0 0.0
  %1096 = vmatprep.subr.mxu0 0.0
  %1097 = vmatpush1.msra.mxu0 0.0
  %1098 = vmatprep.subr.mxu0 0.0
  %1099 = vmatpush1.msra.mxu0 0.0
  %1100 = vmatprep.subr.mxu0 0.0
  %1101 = vmatpush1.msra.mxu0 0.0
  %1102 = vmatprep.subr.mxu0 0.0
  %1103 = vmatpush1.msra.mxu0 0.0
  %1104 = vmatprep.subr.mxu0 0.0
  %1105 = vmatpush1.msra.mxu0 0.0
  %1106 = vmatprep.subr.mxu0 0.0
  %1107 = vmatpush1.msra.mxu0 0.0
  %1108 = vmatprep.mubr.f32.mxu0 0.0
  %1109 = vmatmul.mubr.f32.gmra.mrb[0].mxu0 %v1040
  %v1110 = vpop.f32.mrb[0].mxu0
  %v1111 = vadd.f32 0.0, %v1110
  %v1112 = vpop.f32.mrb[0].mxu0
  %1113 = vmatprep.mubr.f32.mxu0 0.0
  %1114 = vmatmul.mubr.f32.gmra.mrb[0].mxu0 %v1042
  %v1115 = vpop.f32.mrb[0].mxu0
  %v1116 = vadd.f32 0.0, %v1115
  %v1117 = vpop.f32.mrb[0].mxu0
  %1118 = vdwg.mxu0
  %v1119 = vmul.f32 %v1111, %v1111
  %v1120 = vmul.f32 %v1116, %v1116
  %v1121 = vadd.f32 %v1119, 1e-16
  %v1122 = vadd.f32 %v1120, 1e-16
  %v1123 = vrsqrt.pop %v1121
  %v1124 = vmul.f32 %v1121, %v1123
  %vm1125 = vcmp.eq.f32.partialorder %v1121, inf
  %v1126 = vsel %vm1125, %v1121, %v1124
  %vm1127 = vcmp.eq.f32.partialorder %v1121, 0.0
  %v1128 = vand.u32 %v1121, 2147483648
  %v1129 = vsel %vm1127, %v1128, %v1126
  %v1130 = vrsqrt.pop %v1122
  %v1131 = vmul.f32 %v1122, %v1130
  %vm1132 = vcmp.eq.f32.partialorder %v1122, inf
  %v1133 = vsel %vm1132, %v1122, %v1131
  %vm1134 = vcmp.eq.f32.partialorder %v1122, 0.0
  %v1135 = vand.u32 %v1122, 2147483648
  %v1136 = vsel %vm1134, %v1135, %v1133
  %v1137 = vrsqrt.pop %v1129
  %v1138 = vmul.f32 %v1129, %v1137
  %vm1139 = vcmp.eq.f32.partialorder %v1129, inf
  %v1140 = vsel %vm1139, %v1129, %v1138
  %vm1141 = vcmp.eq.f32.partialorder %v1129, 0.0
  %v1142 = vand.u32 %v1129, 2147483648
  %v1143 = vsel %vm1141, %v1142, %v1140
  %v1144 = vrsqrt.pop %v1136
  %v1145 = vmul.f32 %v1136, %v1144
  %vm1146 = vcmp.eq.f32.partialorder %v1136, inf
  %v1147 = vsel %vm1146, %v1136, %v1145
  %vm1148 = vcmp.eq.f32.partialorder %v1136, 0.0
  %v1149 = vand.u32 %v1136, 2147483648
  %v1150 = vsel %vm1148, %v1149, %v1147
  %vm1151 = vcmask 31744
  %v1152 = vsel %vm1151, %v1143, 0.0
  %1153 = vadd.xlane.f32.xlu0 %v1152
  %v1154 = vpop.xlane.xlu0 %1153
  %v1155 = vsel %vm1151, %v1150, 0.0
  %1156 = vadd.xlane.f32.xlu0 %v1155
  %v1157 = vpop.xlane.xlu0 %1156
  %v1158 = vrcp.pop 4.0
  %v1159 = vmul.f32 %v1154, %v1158
  %v1160 = vmul.f32 %v1157, %v1158
  %v1161 = vadd.f32 %v1159, 1e-06
  %v1162 = vadd.f32 %v1160, 1e-06
  %v1163 = vld [vmem:[%s15] sm:$0x1]
  %v1165 = vlaneseq
  %v1166 = vshrl.u32 %v1165, 7
  %v1167 = vsub.s32 0, %v1166
  %v1168 = vrot.slane %v1163, %v1167
  %1172 = vrot.lane.b32.xlu0 %v1026, 96
  %v1173 = vpop.permute.xlu0 %1172
  %1174 = vrot.lane.b32.xlu0 %v1027, 96
  %v1175 = vpop.permute.xlu0 %1174
  %v1178 = vmul.f32 %v1168, %v1173
  %v1179 = vmul.f32 %v1168, %v1175
  %v1180 = vrcp.pop %v1161
  %v1181 = vrcp.pop %v1162
  %v1182 = vmul.f32 %v1178, %v1180
  %v1183 = vmul.f32 %v1179, %v1181
  %1184 = vst.msk [vmem:[%s16] sm:$0xff] %vm151, %v1182
  %1185 = vst.msk [vmem:[%s16 + $0x8] sm:$0xff] %vm151, %v1183
  // Predicated region
  $region66: #{cemlp_pallas.3} parent=0 // pred_check
    _
  $region67: #{cemlp_pallas.3} parent=0 // pred_check_branch
    %1187 = sbr.rel (0) target = $region69
  $region68: #{cemlp_pallas.3} parent=0 // pred_region
    _
  $region69: #{cemlp_pallas.3} parent=0 // pred_fallthru
    _
  // Predicated region
  $region70: #{cemlp_pallas.3} parent=0 // pred_check
    _
  $region71: #{cemlp_pallas.3} parent=0 // pred_check_branch
    %1189 = sbr.rel (0) target = $region73
  $region72: #{cemlp_pallas.3} parent=0 // pred_region
    _
  $region73: #{cemlp_pallas.3} parent=0 // pred_fallthru
    _

// kernel: cemlp_pallas.2
$region0: #{cemlp_pallas.2}
  #allocation0 [shape = 'u32[]', space=smem, size = 0x4, offset = 0x4, fixed_abs, tag = 'smem constant byte address 0x4 - core index']
  #allocation1 [shape = 'u32[144,128]{1,0:T(1,128)}', space=vmem, size = 0x12000, scoped, tag = 'internal scratch']
  %s0 = inlined_call_operand.vmem [shape: f32[16,32], index: 0, kind: input, shape index: {}]
  %s1 = inlined_call_operand.vmem [shape: bf16[32,64], index: 1, kind: input, shape index: {}]
  %s2 = inlined_call_operand.vmem [shape: f32[1,64], index: 2, kind: input, shape index: {}, may-alias: {2,11}]
  %s3 = inlined_call_operand.vmem [shape: f32[1,32], index: 3, kind: input, shape index: {}]
  %s4 = inlined_call_operand.vmem [shape: f32[1,32], index: 4, kind: input, shape index: {}]
  %s5 = inlined_call_operand.vmem [shape: f32[64,32], index: 5, kind: input, shape index: {}]
  %s6 = inlined_call_operand.hbm [shape: f32[64,32], index: 6, kind: input, shape index: {}]
  %s7 = inlined_call_operand.vmem [shape: f32[32,64], index: 7, kind: input, shape index: {}]
  %s8 = inlined_call_operand.vmem [shape: bf16[64,640], index: 8, kind: input, shape index: {}]
  %s9 = inlined_call_operand.vmem [shape: f32[1,32], index: 9, kind: input, shape index: {}]
  %s10 = inlined_call_operand.hbm [shape: f32[64,32], index: 10, kind: input, shape index: {}]
  %s11 = inlined_call_operand.vmem [shape: f32[1,64], index: 11, kind: input, shape index: {}, may-alias: {2,11}]
  %s12 = inlined_call_operand.vmem [shape: bf16[64,512], index: 12, kind: input, shape index: {}]
  %s13 = inlined_call_operand.vmem [shape: f32[512,64], index: 13, kind: input, shape index: {}]
  %s14 = inlined_call_operand.hbm [shape: f32[64,8], index: 14, kind: input, shape index: {}]
  %s15 = inlined_call_operand.vmem [shape: f32[1,64], index: 15, kind: input, shape index: {}]
  %s16 = inlined_call_operand.vmem [shape: f32[16,64], index: 16, kind: output, shape index: {}]
  %s17 = sld [smem:[#allocation0]]
  $region86: #{cemlp_pallas.2} parent=0
    _
  %s19 = ssub.s32 1, %s17
  %s20 = scalar_select 0, %s19, %s17
  $region1: #{cemlp_pallas.2} parent=0
    #allocation2 [shape = 'u8[32768]{0}', space=vmem, size = 0x8000, scoped, tag = 'input window, operand 6, single buffered']
    #allocation3 [shape = 's32[1]{0}', space=sflag, size = 0x4, scoped, tag = 'scoped memory for cemlp_pallas.2']
    #allocation4 [shape = 'u8[32768]{0}', space=vmem, size = 0x8000, scoped, tag = 'input window, operand 10, single buffered']
    #allocation5 [shape = 's32[1]{0}', space=sflag, size = 0x4, scoped, tag = 'scoped memory for cemlp_pallas.2']
    #allocation6 [shape = 'u8[32768]{0}', space=vmem, size = 0x8000, scoped, tag = 'input window, operand 14, single buffered']
    %21 = vsyncpa [#allocation3], 0
    %22 = vsyncpa [#allocation5], 0
    // Predicated region
    $region2: #{cemlp_pallas.2} parent=1 // pred_check
      _
    $region3: #{cemlp_pallas.2} parent=1 // pred_check_branch
      %24 = sbr.rel (0) target = $region5
    $region4: #{cemlp_pallas.2} parent=1 // pred_region
      _
    $region5: #{cemlp_pallas.2} parent=1 // pred_fallthru
      _
    // Predicated region
    $region6: #{cemlp_pallas.2} parent=1 // pred_check
      _
    $region7: #{cemlp_pallas.2} parent=1 // pred_check_branch
      %26 = sbr.rel (0) target = $region9
    $region8: #{cemlp_pallas.2} parent=1 // pred_region
      _
    $region9: #{cemlp_pallas.2} parent=1 // pred_fallthru
      _
    // Predicated region
    $region10: #{cemlp_pallas.2} parent=1 // pred_check
      _
    $region11: #{cemlp_pallas.2} parent=1 // pred_check_branch
      %28 = sbr.rel (0) target = $region13
    $region12: #{cemlp_pallas.2} parent=1 // pred_region
      _
    $region13: #{cemlp_pallas.2} parent=1 // pred_fallthru
      _
    // Predicated region
    $region14: #{cemlp_pallas.2} parent=1 // pred_check
      _
    $region15: #{cemlp_pallas.2} parent=1 // pred_check_branch
      %30 = sbr.rel (0) target = $region17
    $region16: #{cemlp_pallas.2} parent=1 // pred_region
      _
    $region17: #{cemlp_pallas.2} parent=1 // pred_fallthru
      _
    // Predicated region
    $region18: #{cemlp_pallas.2} parent=1 // pred_check
      _
    $region19: #{cemlp_pallas.2} parent=1 // pred_check_branch
      %32 = sbr.rel (0) target = $region21
    $region20: #{cemlp_pallas.2} parent=1 // pred_region
      _
    $region21: #{cemlp_pallas.2} parent=1 // pred_fallthru
      _
    // Predicated region
    $region22: #{cemlp_pallas.2} parent=1 // pred_check
      _
    $region23: #{cemlp_pallas.2} parent=1 // pred_check_branch
      %34 = sbr.rel (0) target = $region25
    $region24: #{cemlp_pallas.2} parent=1 // pred_region
      _
    $region25: #{cemlp_pallas.2} parent=1 // pred_fallthru
      _
    // Predicated region
    $region26: #{cemlp_pallas.2} parent=1 // pred_check
      _
    $region27: #{cemlp_pallas.2} parent=1 // pred_check_branch
      %36 = sbr.rel (0) target = $region29
    $region28: #{cemlp_pallas.2} parent=1 // pred_region
      %s38 = ssub.s32 1024, 1024
      %39 = vsyncadd [#allocation3], %s38
      %s40 = sshll.u32 [#allocation2], 4
      %s41 = int_to_ptr.vmem [resolvable:$true] %s40
      %46 = dma.hbm_to_vmem [thread:$0]  %s6, 1024, %s41, [#allocation3], 128, 128, 8
    $region29: #{cemlp_pallas.2} parent=1 // pred_fallthru
      _
    // Predicated region
    $region30: #{cemlp_pallas.2} parent=1 // pred_check
      _
    $region31: #{cemlp_pallas.2} parent=1 // pred_check_branch
      %48 = sbr.rel (0) target = $region33
    $region32: #{cemlp_pallas.2} parent=1 // pred_region
      _
    $region33: #{cemlp_pallas.2} parent=1 // pred_fallthru
      _
    // Predicated region
    $region34: #{cemlp_pallas.2} parent=1 // pred_check
      _
    $region35: #{cemlp_pallas.2} parent=1 // pred_check_branch
      %50 = sbr.rel (0) target = $region37
    $region36: #{cemlp_pallas.2} parent=1 // pred_region
      _
    $region37: #{cemlp_pallas.2} parent=1 // pred_fallthru
      _
    // Predicated region
    $region38: #{cemlp_pallas.2} parent=1 // pred_check
      _
    $region39: #{cemlp_pallas.2} parent=1 // pred_check_branch
      %52 = sbr.rel (0) target = $region41
    $region40: #{cemlp_pallas.2} parent=1 // pred_region
      _
    $region41: #{cemlp_pallas.2} parent=1 // pred_fallthru
      _
    // Predicated region
    $region42: #{cemlp_pallas.2} parent=1 // pred_check
      _
    $region43: #{cemlp_pallas.2} parent=1 // pred_check_branch
      %54 = sbr.rel (0) target = $region45
    $region44: #{cemlp_pallas.2} parent=1 // pred_region
      %s56 = ssub.s32 1024, 1024
      %57 = vsyncadd [#allocation5], %s56
      %s58 = sshll.u32 [#allocation4], 4
      %s59 = int_to_ptr.vmem [resolvable:$true] %s58
      %64 = dma.hbm_to_vmem [thread:$0]  %s10, 1024, %s59, [#allocation5], 128, 128, 8
    $region45: #{cemlp_pallas.2} parent=1 // pred_fallthru
      _
    // Predicated region
    $region46: #{cemlp_pallas.2} parent=1 // pred_check
      _
    $region47: #{cemlp_pallas.2} parent=1 // pred_check_branch
      %66 = sbr.rel (0) target = $region49
    $region48: #{cemlp_pallas.2} parent=1 // pred_region
      _
    $region49: #{cemlp_pallas.2} parent=1 // pred_fallthru
      _
    // Predicated region
    $region50: #{cemlp_pallas.2} parent=1 // pred_check
      _
    $region51: #{cemlp_pallas.2} parent=1 // pred_check_branch
      %68 = sbr.rel (0) target = $region53
    $region52: #{cemlp_pallas.2} parent=1 // pred_region
      _
    $region53: #{cemlp_pallas.2} parent=1 // pred_fallthru
      _
    // Predicated region
    $region54: #{cemlp_pallas.2} parent=1 // pred_check
      _
    $region55: #{cemlp_pallas.2} parent=1 // pred_check_branch
      %70 = sbr.rel (0) target = $region57
    $region56: #{cemlp_pallas.2} parent=1 // pred_region
      _
    $region57: #{cemlp_pallas.2} parent=1 // pred_fallthru
      _
    // Predicated region
    $region58: #{cemlp_pallas.2} parent=1 // pred_check
      _
    $region59: #{cemlp_pallas.2} parent=1 // pred_check_branch
      %72 = sbr.rel (0) target = $region61
    $region60: #{cemlp_pallas.2} parent=1 // pred_region
      %s74 = ssub.s32 1024, 1024
      %75 = vsyncadd [#allocation5], %s74
      %s76 = sshll.u32 [#allocation6], 4
      %s77 = int_to_ptr.vmem [resolvable:$true] %s76
      %82 = dma.hbm_to_vmem [thread:$0]  %s14, 1024, %s77, [#allocation5], 128, 128, 8
    $region61: #{cemlp_pallas.2} parent=1 // pred_fallthru
      _
    // Predicated region
    $region62: #{cemlp_pallas.2} parent=1 // pred_check
      _
    $region63: #{cemlp_pallas.2} parent=1 // pred_check_branch
      %84 = sbr.rel (0) target = $region65
    $region64: #{cemlp_pallas.2} parent=1 // pred_region
      _
    $region65: #{cemlp_pallas.2} parent=1 // pred_fallthru
      _
    // Predicated region
    $region66: #{cemlp_pallas.2} parent=1 // pred_check
      _
    $region67: #{cemlp_pallas.2} parent=1 // pred_check_branch
      %86 = sbr.rel (0) target = $region69
    $region68: #{cemlp_pallas.2} parent=1 // pred_region
      %87 = dma.done [#allocation3], 1024
    $region69: #{cemlp_pallas.2} parent=1 // pred_fallthru
      _
    // Predicated region
    $region70: #{cemlp_pallas.2} parent=1 // pred_check
      _
    $region71: #{cemlp_pallas.2} parent=1 // pred_check_branch
      %89 = sbr.rel (0) target = $region73
    $region72: #{cemlp_pallas.2} parent=1 // pred_region
      %90 = dma.done [#allocation5], 1024
    $region73: #{cemlp_pallas.2} parent=1 // pred_fallthru
      _
    // Predicated region
    $region74: #{cemlp_pallas.2} parent=1 // pred_check
      _
    $region75: #{cemlp_pallas.2} parent=1 // pred_check_branch
      %92 = sbr.rel (0) target = $region77
    $region76: #{cemlp_pallas.2} parent=1 // pred_region
      %93 = dma.done [#allocation5], 1024
    $region77: #{cemlp_pallas.2} parent=1 // pred_fallthru
      _
    %v95 = vld [vmem:[%s0] sm:$0xff]
    %v96 = vld [vmem:[%s0 + $0x8] sm:$0xff]
    %v97 = vpack.c.bf16 %v96, %v95
    %v98 = vld [vmem:[%s1] sm:$0xf]
    %v99 = vld [vmem:[%s1 + $0x4] sm:$0xf]
    %v100 = vld [vmem:[%s1 + $0x8] sm:$0xf]
    %v101 = vld [vmem:[%s1 + $0xc] sm:$0xf]
    %v102 = vld [vmem:[%s2] sm:$0x1]
    %v104 = vlaneseq
    %v105 = vshrl.u32 %v104, 7
    %v106 = vsub.s32 0, %v105
    %v107 = vrot.slane %v102, %v106
    %v113 = vunpack.c.l.b16 %v98
    %v114 = vunpack.c.l.b16 %v99
    %v115 = vunpack.c.l.b16 %v100
    %v116 = vunpack.c.l.b16 %v101
    %v117 = vpack.c.b16 %v114, %v113
    %v118 = vpack.c.b16 %v116, %v115
    %vm121 = vcmask 261120
    %v123 = vsel %vm121, %v97, 0
    %125 = vmatprep.subr.bf16.mxu0 0
    %126 = vmatpush1.bf16.msra.mxu0 %v117
    %127 = vmatprep.subr.bf16.mxu0 0
    %128 = vmatpush1.bf16.msra.mxu0 %v118
    %129 = vmatprep.subr.bf16.mxu0 0
    %130 = vmatpush1.bf16.msra.mxu0 0
    %131 = vmatprep.subr.bf16.mxu0 0
    %132 = vmatpush1.bf16.msra.mxu0 0
    %133 = vmatprep.subr.bf16.mxu0 0
    %134 = vmatpush1.bf16.msra.mxu0 0
    %135 = vmatprep.subr.bf16.mxu0 0
    %136 = vmatpush1.bf16.msra.mxu0 0
    %137 = vmatprep.subr.bf16.mxu0 0
    %138 = vmatpush1.bf16.msra.mxu0 0
    %139 = vmatprep.subr.bf16.mxu0 0
    %140 = vmatpush1.bf16.msra.mxu0 0
    %141 = vmatprep.subr.bf16.mxu0 0
    %142 = vmatpush1.bf16.msra.mxu0 0
    %143 = vmatprep.subr.bf16.mxu0 0
    %144 = vmatpush1.bf16.msra.mxu0 0
    %145 = vmatprep.subr.bf16.mxu0 0
    %146 = vmatpush1.bf16.msra.mxu0 0
    %147 = vmatprep.subr.bf16.mxu0 0
    %148 = vmatpush1.bf16.msra.mxu0 0
    %149 = vmatprep.subr.bf16.mxu0 0
    %150 = vmatpush1.bf16.msra.mxu0 0
    %151 = vmatprep.subr.bf16.mxu0 0
    %152 = vmatpush1.bf16.msra.mxu0 0
    %153 = vmatprep.subr.bf16.mxu0 0
    %154 = vmatpush1.bf16.msra.mxu0 0
    %155 = vmatprep.subr.bf16.mxu0 0
    %156 = vmatpush1.bf16.msra.mxu0 0
    %157 = vmatprep.mubr.bf16.mxu0 0
    %158 = vmatmul.mubr.bf16.gmra.mrb[0].mxu0 %v123
    %v159 = vpop.f32.mrb[0].mxu0
    %v160 = vadd.f32 %v107, %v159
    %v161 = vpop.f32.mrb[0].mxu0
    %v162 = vpop.f32.mrb[0].mxu0
    %v163 = vadd.f32 %v107, %v162
    %v164 = vpop.f32.mrb[0].mxu0
    %165 = vdwg.mxu0
    %v166 = vmul.f32 %v160, %v160
    %v167 = vmul.f32 %v163, %v163
    %v168 = vld [vmem:[%s5] sm:$0xff]
    %v169 = vld [vmem:[%s5 + $0x8] sm:$0xff]
    %v170 = vld [vmem:[%s5 + $0x10] sm:$0xff]
    %v171 = vld [vmem:[%s5 + $0x18] sm:$0xff]
    %v172 = vld [vmem:[%s5 + $0x20] sm:$0xff]
    %v173 = vld [vmem:[%s5 + $0x28] sm:$0xff]
    %v174 = vld [vmem:[%s5 + $0x30] sm:$0xff]
    %v175 = vld [vmem:[%s5 + $0x38] sm:$0xff]
    %v176 = vld [vmem:[#allocation2] sm:$0xff]
    %v177 = vld [vmem:[#allocation2 + $0x8] sm:$0xff]
    %v178 = vld [vmem:[#allocation2 + $0x10] sm:$0xff]
    %v179 = vld [vmem:[#allocation2 + $0x18] sm:$0xff]
    %v180 = vld [vmem:[#allocation2 + $0x20] sm:$0xff]
    %v181 = vld [vmem:[#allocation2 + $0x28] sm:$0xff]
    %v182 = vld [vmem:[#allocation2 + $0x30] sm:$0xff]
    %v183 = vld [vmem:[#allocation2 + $0x38] sm:$0xff]
    %vm184 = vcmask 523264
    %v186 = vsel %vm184, %v166, 0
    %v189 = vsel %vm184, %v167, 0
    %191 = vmatprep.subr.mxu0 0.0
    %192 = vmatpush1.msra.mxu0 %v176
    %193 = vmatprep.subr.mxu0 0.0
    %194 = vmatpush1.msra.mxu0 %v177
    %195 = vmatprep.subr.mxu0 0.0
    %196 = vmatpush1.msra.mxu0 %v178
    %197 = vmatprep.subr.mxu0 0.0
    %198 = vmatpush1.msra.mxu0 %v179
    %199 = vmatprep.subr.mxu0 0.0
    %200 = vmatpush1.msra.mxu0 %v180
    %201 = vmatprep.subr.mxu0 0.0
    %202 = vmatpush1.msra.mxu0 %v181
    %203 = vmatprep.subr.mxu0 0.0
    %204 = vmatpush1.msra.mxu0 %v182
    %205 = vmatprep.subr.mxu0 0.0
    %206 = vmatpush1.msra.mxu0 %v183
    %207 = vmatprep.subr.mxu0 0.0
    %208 = vmatpush1.msra.mxu0 0.0
    %209 = vmatprep.subr.mxu0 0.0
    %210 = vmatpush1.msra.mxu0 0.0
    %211 = vmatprep.subr.mxu0 0.0
    %212 = vmatpush1.msra.mxu0 0.0
    %213 = vmatprep.subr.mxu0 0.0
    %214 = vmatpush1.msra.mxu0 0.0
    %215 = vmatprep.subr.mxu0 0.0
    %216 = vmatpush1.msra.mxu0 0.0
    %217 = vmatprep.subr.mxu0 0.0
    %218 = vmatpush1.msra.mxu0 0.0
    %219 = vmatprep.subr.mxu0 0.0
    %220 = vmatpush1.msra.mxu0 0.0
    %221 = vmatprep.subr.mxu0 0.0
    %222 = vmatpush1.msra.mxu0 0.0
    %223 = vmatprep.subr.mxu0 0.0
    %224 = vmatpush1.msra.mxu0 0.0
    %225 = vmatprep.subr.mxu0 0.0
    %226 = vmatpush1.msra.mxu0 0.0
    %227 = vmatprep.subr.mxu0 0.0
    %228 = vmatpush1.msra.mxu0 0.0
    %229 = vmatprep.subr.mxu0 0.0
    %230 = vmatpush1.msra.mxu0 0.0
    %231 = vmatprep.subr.mxu0 0.0
    %232 = vmatpush1.msra.mxu0 0.0
    %233 = vmatprep.subr.mxu0 0.0
    %234 = vmatpush1.msra.mxu0 0.0
    %235 = vmatprep.subr.mxu0 0.0
    %236 = vmatpush1.msra.mxu0 0.0
    %237 = vmatprep.subr.mxu0 0.0
    %238 = vmatpush1.msra.mxu0 0.0
    %239 = vmatprep.subr.mxu0 0.0
    %240 = vmatpush1.msra.mxu0 0.0
    %241 = vmatprep.subr.mxu0 0.0
    %242 = vmatpush1.msra.mxu0 0.0
    %243 = vmatprep.subr.mxu0 0.0
    %244 = vmatpush1.msra.mxu0 0.0
    %245 = vmatprep.subr.mxu0 0.0
    %246 = vmatpush1.msra.mxu0 0.0
    %247 = vmatprep.subr.mxu0 0.0
    %248 = vmatpush1.msra.mxu0 0.0
    %249 = vmatprep.subr.mxu0 0.0
    %250 = vmatpush1.msra.mxu0 0.0
    %251 = vmatprep.subr.mxu0 0.0
    %252 = vmatpush1.msra.mxu0 0.0
    %253 = vmatprep.subr.mxu0 0.0
    %254 = vmatpush1.msra.mxu0 0.0
    %255 = vmatprep.mubr.f32.mxu0 0.0
    %256 = vmatmul.mubr.f32.gmra.mrb[0].mxu0 %v186
    %v257 = vpop.f32.mrb[0].mxu0
    %v258 = vadd.f32 0.0, %v257
    %v259 = vpop.f32.mrb[0].mxu0
    %260 = vmatprep.mubr.f32.mxu0 0.0
    %261 = vmatmul.mubr.f32.gmra.mrb[0].mxu0 %v189
    %v262 = vpop.f32.mrb[0].mxu0
    %v263 = vadd.f32 0.0, %v262
    %v264 = vpop.f32.mrb[0].mxu0
    %265 = vdwg.mxu0
    %v267 = vsel %vm184, %v160, 0
    %v270 = vsel %vm184, %v163, 0
    %272 = vmatprep.subr.mxu0 0.0
    %273 = vmatpush1.msra.mxu0 %v168
    %274 = vmatprep.subr.mxu0 0.0
    %275 = vmatpush1.msra.mxu0 %v169
    %276 = vmatprep.subr.mxu0 0.0
    %277 = vmatpush1.msra.mxu0 %v170
    %278 = vmatprep.subr.mxu0 0.0
    %279 = vmatpush1.msra.mxu0 %v171
    %280 = vmatprep.subr.mxu0 0.0
    %281 = vmatpush1.msra.mxu0 %v172
    %282 = vmatprep.subr.mxu0 0.0
    %283 = vmatpush1.msra.mxu0 %v173
    %284 = vmatprep.subr.mxu0 0.0
    %285 = vmatpush1.msra.mxu0 %v174
    %286 = vmatprep.subr.mxu0 0.0
    %287 = vmatpush1.msra.mxu0 %v175
    %288 = vmatprep.subr.mxu0 0.0
    %289 = vmatpush1.msra.mxu0 0.0
    %290 = vmatprep.subr.mxu0 0.0
    %291 = vmatpush1.msra.mxu0 0.0
    %292 = vmatprep.subr.mxu0 0.0
    %293 = vmatpush1.msra.mxu0 0.0
    %294 = vmatprep.subr.mxu0 0.0
    %295 = vmatpush1.msra.mxu0 0.0
    %296 = vmatprep.subr.mxu0 0.0
    %297 = vmatpush1.msra.mxu0 0.0
    %298 = vmatprep.subr.mxu0 0.0
    %299 = vmatpush1.msra.mxu0 0.0
    %300 = vmatprep.subr.mxu0 0.0
    %301 = vmatpush1.msra.mxu0 0.0
    %302 = vmatprep.subr.mxu0 0.0
    %303 = vmatpush1.msra.mxu0 0.0
    %304 = vmatprep.subr.mxu0 0.0
    %305 = vmatpush1.msra.mxu0 0.0
    %306 = vmatprep.subr.mxu0 0.0
    %307 = vmatpush1.msra.mxu0 0.0
    %308 = vmatprep.subr.mxu0 0.0
    %309 = vmatpush1.msra.mxu0 0.0
    %310 = vmatprep.subr.mxu0 0.0
    %311 = vmatpush1.msra.mxu0 0.0
    %312 = vmatprep.subr.mxu0 0.0
    %313 = vmatpush1.msra.mxu0 0.0
    %314 = vmatprep.subr.mxu0 0.0
    %315 = vmatpush1.msra.mxu0 0.0
    %316 = vmatprep.subr.mxu0 0.0
    %317 = vmatpush1.msra.mxu0 0.0
    %318 = vmatprep.subr.mxu0 0.0
    %319 = vmatpush1.msra.mxu0 0.0
    %320 = vmatprep.subr.mxu0 0.0
    %321 = vmatpush1.msra.mxu0 0.0
    %322 = vmatprep.subr.mxu0 0.0
    %323 = vmatpush1.msra.mxu0 0.0
    %324 = vmatprep.subr.mxu0 0.0
    %325 = vmatpush1.msra.mxu0 0.0
    %326 = vmatprep.subr.mxu0 0.0
    %327 = vmatpush1.msra.mxu0 0.0
    %328 = vmatprep.subr.mxu0 0.0
    %329 = vmatpush1.msra.mxu0 0.0
    %330 = vmatprep.subr.mxu0 0.0
    %331 = vmatpush1.msra.mxu0 0.0
    %332 = vmatprep.subr.mxu0 0.0
    %333 = vmatpush1.msra.mxu0 0.0
    %334 = vmatprep.subr.mxu0 0.0
    %335 = vmatpush1.msra.mxu0 0.0
    %336 = vmatprep.mubr.f32.mxu0 0.0
    %337 = vmatmul.mubr.f32.gmra.mrb[0].mxu0 %v267
    %v338 = vpop.f32.mrb[0].mxu0
    %v339 = vadd.f32 %v258, %v338
    %v340 = vpop.f32.mrb[0].mxu0
    %341 = vmatprep.mubr.f32.mxu0 0.0
    %342 = vmatmul.mubr.f32.gmra.mrb[0].mxu0 %v270
    %v343 = vpop.f32.mrb[0].mxu0
    %v344 = vadd.f32 %v263, %v343
    %v345 = vpop.f32.mrb[0].mxu0
    %346 = vdwg.mxu0
    %v347 = vld [vmem:[%s3] sm:$0x1]
    %v349 = vlaneseq
    %v350 = vshrl.u32 %v349, 7
    %v351 = vsub.s32 0, %v350
    %v352 = vrot.slane %v347, %v351
    %v354 = vmul.f32 %v352, %v339
    %v355 = vmul.f32 %v352, %v344
    %v356 = vld [vmem:[%s4] sm:$0x1]
    %v358 = vlaneseq
    %v359 = vshrl.u32 %v358, 7
    %v360 = vsub.s32 0, %v359
    %v361 = vrot.slane %v356, %v360
    %v363 = vadd.f32 %v354, %v361
    %v364 = vadd.f32 %v355, %v361
    %v365 = vxor.u32 %v363, 2147483648
    %v366 = vxor.u32 %v364, 2147483648
    %v367 = vmul.f32 %v365, 1.442695
    %v368 = vpow.pop %v367
    %v369 = vmul.f32 %v366, 1.442695
    %v370 = vpow.pop %v369
    %v371 = vadd.f32 %v368, 1.0
    %v372 = vadd.f32 %v370, 1.0
    %v373 = vrcp.pop %v371
    %v374 = vmul.f32 1.0, %v373
    %v375 = vrcp.pop %v372
    %v376 = vmul.f32 1.0, %v375
    %v377 = vld [vmem:[%s7] sm:$0xff]
    %v378 = vld [vmem:[%s7 + $0x8] sm:$0xff]
    %v379 = vld [vmem:[%s7 + $0x10] sm:$0xff]
    %v380 = vld [vmem:[%s7 + $0x18] sm:$0xff]
    %v382 = vsel %vm121, %v374, 0
    %v385 = vsel %vm121, %v376, 0
    %387 = vmatprep.subr.mxu0 0.0
    %388 = vmatpush1.msra.mxu0 %v377
    %389 = vmatprep.subr.mxu0 0.0
    %390 = vmatpush1.msra.mxu0 %v378
    %391 = vmatprep.subr.mxu0 0.0
    %392 = vmatpush1.msra.mxu0 %v379
    %393 = vmatprep.subr.mxu0 0.0
    %394 = vmatpush1.msra.mxu0 %v380
    %395 = vmatprep.subr.mxu0 0.0
    %396 = vmatpush1.msra.mxu0 0.0
    %397 = vmatprep.subr.mxu0 0.0
    %398 = vmatpush1.msra.mxu0 0.0
    %399 = vmatprep.subr.mxu0 0.0
    %400 = vmatpush1.msra.mxu0 0.0
    %401 = vmatprep.subr.mxu0 0.0
    %402 = vmatpush1.msra.mxu0 0.0
    %403 = vmatprep.subr.mxu0 0.0
    %404 = vmatpush1.msra.mxu0 0.0
    %405 = vmatprep.subr.mxu0 0.0
    %406 = vmatpush1.msra.mxu0 0.0
    %407 = vmatprep.subr.mxu0 0.0
    %408 = vmatpush1.msra.mxu0 0.0
    %409 = vmatprep.subr.mxu0 0.0
    %410 = vmatpush1.msra.mxu0 0.0
    %411 = vmatprep.subr.mxu0 0.0
    %412 = vmatpush1.msra.mxu0 0.0
    %413 = vmatprep.subr.mxu0 0.0
    %414 = vmatpush1.msra.mxu0 0.0
    %415 = vmatprep.subr.mxu0 0.0
    %416 = vmatpush1.msra.mxu0 0.0
    %417 = vmatprep.subr.mxu0 0.0
    %418 = vmatpush1.msra.mxu0 0.0
    %419 = vmatprep.subr.mxu0 0.0
    %420 = vmatpush1.msra.mxu0 0.0
    %421 = vmatprep.subr.mxu0 0.0
    %422 = vmatpush1.msra.mxu0 0.0
    %423 = vmatprep.subr.mxu0 0.0
    %424 = vmatpush1.msra.mxu0 0.0
    %425 = vmatprep.subr.mxu0 0.0
    %426 = vmatpush1.msra.mxu0 0.0
    %427 = vmatprep.subr.mxu0 0.0
    %428 = vmatpush1.msra.mxu0 0.0
    %429 = vmatprep.subr.mxu0 0.0
    %430 = vmatpush1.msra.mxu0 0.0
    %431 = vmatprep.subr.mxu0 0.0
    %432 = vmatpush1.msra.mxu0 0.0
    %433 = vmatprep.subr.mxu0 0.0
    %434 = vmatpush1.msra.mxu0 0.0
    %435 = vmatprep.subr.mxu0 0.0
    %436 = vmatpush1.msra.mxu0 0.0
    %437 = vmatprep.subr.mxu0 0.0
    %438 = vmatpush1.msra.mxu0 0.0
    %439 = vmatprep.subr.mxu0 0.0
    %440 = vmatpush1.msra.mxu0 0.0
    %441 = vmatprep.subr.mxu0 0.0
    %442 = vmatpush1.msra.mxu0 0.0
    %443 = vmatprep.subr.mxu0 0.0
    %444 = vmatpush1.msra.mxu0 0.0
    %445 = vmatprep.subr.mxu0 0.0
    %446 = vmatpush1.msra.mxu0 0.0
    %447 = vmatprep.subr.mxu0 0.0
    %448 = vmatpush1.msra.mxu0 0.0
    %449 = vmatprep.subr.mxu0 0.0
    %450 = vmatpush1.msra.mxu0 0.0
    %451 = vmatprep.mubr.f32.mxu0 0.0
    %452 = vmatmul.mubr.f32.gmra.mrb[0].mxu0 %v382
    %v453 = vpop.f32.mrb[0].mxu0
    %v454 = vadd.f32 0.0, %v453
    %v455 = vpop.f32.mrb[0].mxu0
    %456 = vmatprep.mubr.f32.mxu0 0.0
    %457 = vmatmul.mubr.f32.gmra.mrb[0].mxu0 %v385
    %v458 = vpop.f32.mrb[0].mxu0
    %v459 = vadd.f32 0.0, %v458
    %v460 = vpop.f32.mrb[0].mxu0
    %461 = vdwg.mxu0
    %v462 = vmul.f32 %v454, %v160
    %v463 = vmul.f32 %v459, %v163
    %v464 = vpack.c.bf16 %v463, %v462
    %v465 = vld [vmem:[%s8] sm:$0xff]
    %v466 = vld [vmem:[%s8 + $0x8] sm:$0xff]
    %v467 = vld [vmem:[%s8 + $0x10] sm:$0xf]
    %v468 = vld [vmem:[%s8 + $0x14] sm:$0xff]
    %v469 = vld [vmem:[%s8 + $0x1c] sm:$0xff]
    %v470 = vld [vmem:[%s8 + $0x24] sm:$0xf]
    %v471 = vld [vmem:[%s8 + $0x28] sm:$0xff]
    %v472 = vld [vmem:[%s8 + $0x30] sm:$0xff]
    %v473 = vld [vmem:[%s8 + $0x38] sm:$0xf]
    %v474 = vld [vmem:[%s8 + $0x3c] sm:$0xff]
    %v475 = vld [vmem:[%s8 + $0x44] sm:$0xff]
    %v476 = vld [vmem:[%s8 + $0x4c] sm:$0xf]
    %v477 = vld [vmem:[%s8 + $0x50] sm:$0xff]
    %v478 = vld [vmem:[%s8 + $0x58] sm:$0xff]
    %v479 = vld [vmem:[%s8 + $0x60] sm:$0xf]
    %v480 = vld [vmem:[%s8 + $0x64] sm:$0xff]
    %v481 = vld [vmem:[%s8 + $0x6c] sm:$0xff]
    %v482 = vld [vmem:[%s8 + $0x74] sm:$0xf]
    %v483 = vld [vmem:[%s8 + $0x78] sm:$0xff]
    %v484 = vld [vmem:[%s8 + $0x80] sm:$0xff]
    %v485 = vld [vmem:[%s8 + $0x88] sm:$0xf]
    %v486 = vld [vmem:[%s8 + $0x8c] sm:$0xff]
    %v487 = vld [vmem:[%s8 + $0x94] sm:$0xff]
    %v488 = vld [vmem:[%s8 + $0x9c] sm:$0xf]
    %v513 = vunpack.c.l.b16 %v465
    %v514 = vunpack.c.h.b16 %v465
    %v515 = vunpack.c.l.b16 %v466
    %v516 = vunpack.c.h.b16 %v466
    %v517 = vunpack.c.l.b16 %v467
    %v518 = vunpack.c.l.b16 %v468
    %v519 = vunpack.c.h.b16 %v468
    %v520 = vunpack.c.l.b16 %v469
    %v521 = vunpack.c.h.b16 %v469
    %v522 = vunpack.c.l.b16 %v470
    %v523 = vunpack.c.l.b16 %v471
    %v524 = vunpack.c.h.b16 %v471
    %v525 = vunpack.c.l.b16 %v472
    %v526 = vunpack.c.h.b16 %v472
    %v527 = vunpack.c.l.b16 %v473
    %v528 = vunpack.c.l.b16 %v474
    %v529 = vunpack.c.h.b16 %v474
    %v530 = vunpack.c.l.b16 %v475
    %v531 = vunpack.c.h.b16 %v475
    %v532 = vunpack.c.l.b16 %v476
    %v533 = vunpack.c.l.b16 %v477
    %v534 = vunpack.c.h.b16 %v477
    %v535 = vunpack.c.l.b16 %v478
    %v536 = vunpack.c.h.b16 %v478
    %v537 = vunpack.c.l.b16 %v479
    %v538 = vunpack.c.l.b16 %v480
    %v539 = vunpack.c.h.b16 %v480
    %v540 = vunpack.c.l.b16 %v481
    %v541 = vunpack.c.h.b16 %v481
    %v542 = vunpack.c.l.b16 %v482
    %v543 = vunpack.c.l.b16 %v483
    %v544 = vunpack.c.h.b16 %v483
    %v545 = vunpack.c.l.b16 %v484
    %v546 = vunpack.c.h.b16 %v484
    %v547 = vunpack.c.l.b16 %v485
    %v548 = vunpack.c.l.b16 %v486
    %v549 = vunpack.c.h.b16 %v486
    %v550 = vunpack.c.l.b16 %v487
    %v551 = vunpack.c.h.b16 %v487
    %v552 = vunpack.c.l.b16 %v488
    %v553 = vpack.c.b16 %v518, %v513
    %v554 = vpack.c.b16 %v519, %v514
    %v555 = vpack.c.b16 %v520, %v515
    %v556 = vpack.c.b16 %v521, %v516
    %v557 = vpack.c.b16 %v522, %v517
    %v558 = vpack.c.b16 %v528, %v523
    %v559 = vpack.c.b16 %v529, %v524
    %v560 = vpack.c.b16 %v530, %v525
    %v561 = vpack.c.b16 %v531, %v526
    %v562 = vpack.c.b16 %v532, %v527
    %v563 = vpack.c.b16 %v538, %v533
    %v564 = vpack.c.b16 %v539, %v534
    %v565 = vpack.c.b16 %v540, %v535
    %v566 = vpack.c.b16 %v541, %v536
    %v567 = vpack.c.b16 %v542, %v537
    %v568 = vpack.c.b16 %v548, %v543
    %v569 = vpack.c.b16 %v549, %v544
    %v570 = vpack.c.b16 %v550, %v545
    %v571 = vpack.c.b16 %v551, %v546
    %v572 = vpack.c.b16 %v552, %v547
    %v594 = vsel %vm184, %v464, 0
    %596 = vmatprep.subr.bf16.mxu0 %v554
    %597 = vmatpush1.bf16.msra.mxu0 %v553
    %598 = vmatprep.subr.bf16.mxu0 %v559
    %599 = vmatpush1.bf16.msra.mxu0 %v558
    %600 = vmatprep.subr.bf16.mxu0 %v564
    %601 = vmatpush1.bf16.msra.mxu0 %v563
    %602 = vmatprep.subr.bf16.mxu0 %v569
    %603 = vmatpush1.bf16.msra.mxu0 %v568
    %604 = vmatprep.subr.bf16.mxu0 0
    %605 = vmatpush1.bf16.msra.mxu0 0
    %606 = vmatprep.subr.bf16.mxu0 0
    %607 = vmatpush1.bf16.msra.mxu0 0
    %608 = vmatprep.subr.bf16.mxu0 0
    %609 = vmatpush1.bf16.msra.mxu0 0
    %610 = vmatprep.subr.bf16.mxu0 0
    %611 = vmatpush1.bf16.msra.mxu0 0
    %612 = vmatprep.subr.bf16.mxu0 0
    %613 = vmatpush1.bf16.msra.mxu0 0
    %614 = vmatprep.subr.bf16.mxu0 0
    %615 = vmatpush1.bf16.msra.mxu0 0
    %616 = vmatprep.subr.bf16.mxu0 0
    %617 = vmatpush1.bf16.msra.mxu0 0
    %618 = vmatprep.subr.bf16.mxu0 0
    %619 = vmatpush1.bf16.msra.mxu0 0
    %620 = vmatprep.subr.bf16.mxu0 0
    %621 = vmatpush1.bf16.msra.mxu0 0
    %622 = vmatprep.subr.bf16.mxu0 0
    %623 = vmatpush1.bf16.msra.mxu0 0
    %624 = vmatprep.subr.bf16.mxu0 0
    %625 = vmatpush1.bf16.msra.mxu0 0
    %626 = vmatprep.subr.bf16.mxu0 0
    %627 = vmatpush1.bf16.msra.mxu0 0
    %628 = vmatprep.mubr.bf16.mxu0 0
    %629 = vmatmul.mubr.bf16.gmra.mrb[0].mxu0 %v594
    %v630 = vpop.f32.mrb[0].mxu0
    %v631 = vadd.f32 0.0, %v630
    %v632 = vpop.f32.mrb[0].mxu0
    %v633 = vadd.f32 0.0, %v632
    %v634 = vpop.f32.mrb[0].mxu0
    %v635 = vadd.f32 0.0, %v634
    %v636 = vpop.f32.mrb[0].mxu0
    %v637 = vadd.f32 0.0, %v636
    %638 = vdwg.mxu0
    %639 = vmatprep.subr.bf16.mxu0 %v556
    %640 = vmatpush1.bf16.msra.mxu0 %v555
    %641 = vmatprep.subr.bf16.mxu0 %v561
    %642 = vmatpush1.bf16.msra.mxu0 %v560
    %643 = vmatprep.subr.bf16.mxu0 %v566
    %644 = vmatpush1.bf16.msra.mxu0 %v565
    %645 = vmatprep.subr.bf16.mxu0 %v571
    %646 = vmatpush1.bf16.msra.mxu0 %v570
    %647 = vmatprep.subr.bf16.mxu0 0
    %648 = vmatpush1.bf16.msra.mxu0 0
    %649 = vmatprep.subr.bf16.mxu0 0
    %650 = vmatpush1.bf16.msra.mxu0 0
    %651 = vmatprep.subr.bf16.mxu0 0
    %652 = vmatpush1.bf16.msra.mxu0 0
    %653 = vmatprep.subr.bf16.mxu0 0
    %654 = vmatpush1.bf16.msra.mxu0 0
    %655 = vmatprep.subr.bf16.mxu0 0
    %656 = vmatpush1.bf16.msra.mxu0 0
    %657 = vmatprep.subr.bf16.mxu0 0
    %658 = vmatpush1.bf16.msra.mxu0 0
    %659 = vmatprep.subr.bf16.mxu0 0
    %660 = vmatpush1.bf16.msra.mxu0 0
    %661 = vmatprep.subr.bf16.mxu0 0
    %662 = vmatpush1.bf16.msra.mxu0 0
    %663 = vmatprep.subr.bf16.mxu0 0
    %664 = vmatpush1.bf16.msra.mxu0 0
    %665 = vmatprep.subr.bf16.mxu0 0
    %666 = vmatpush1.bf16.msra.mxu0 0
    %667 = vmatprep.subr.bf16.mxu0 0
    %668 = vmatpush1.bf16.msra.mxu0 0
    %669 = vmatprep.subr.bf16.mxu0 0
    %670 = vmatpush1.bf16.msra.mxu0 0
    %671 = vmatprep.mubr.bf16.mxu0 0
    %672 = vmatmul.mubr.bf16.gmra.mrb[0].mxu0 %v594
    %v673 = vpop.f32.mrb[0].mxu0
    %v674 = vadd.f32 0.0, %v673
    %v675 = vpop.f32.mrb[0].mxu0
    %v676 = vadd.f32 0.0, %v675
    %v677 = vpop.f32.mrb[0].mxu0
    %v678 = vadd.f32 0.0, %v677
    %v679 = vpop.f32.mrb[0].mxu0
    %v680 = vadd.f32 0.0, %v679
    %681 = vdwg.mxu0
    %682 = vmatprep.subr.bf16.mxu0 0
    %683 = vmatpush1.bf16.msra.mxu0 %v557
    %684 = vmatprep.subr.bf16.mxu0 0
    %685 = vmatpush1.bf16.msra.mxu0 %v562
    %686 = vmatprep.subr.bf16.mxu0 0
    %687 = vmatpush1.bf16.msra.mxu0 %v567
    %688 = vmatprep.subr.bf16.mxu0 0
    %689 = vmatpush1.bf16.msra.mxu0 %v572
    %690 = vmatprep.subr.bf16.mxu0 0
    %691 = vmatpush1.bf16.msra.mxu0 0
    %692 = vmatprep.subr.bf16.mxu0 0
    %693 = vmatpush1.bf16.msra.mxu0 0
    %694 = vmatprep.subr.bf16.mxu0 0
    %695 = vmatpush1.bf16.msra.mxu0 0
    %696 = vmatprep.subr.bf16.mxu0 0
    %697 = vmatpush1.bf16.msra.mxu0 0
    %698 = vmatprep.subr.bf16.mxu0 0
    %699 = vmatpush1.bf16.msra.mxu0 0
    %700 = vmatprep.subr.bf16.mxu0 0
    %701 = vmatpush1.bf16.msra.mxu0 0
    %702 = vmatprep.subr.bf16.mxu0 0
    %703 = vmatpush1.bf16.msra.mxu0 0
    %704 = vmatprep.subr.bf16.mxu0 0
    %705 = vmatpush1.bf16.msra.mxu0 0
    %706 = vmatprep.subr.bf16.mxu0 0
    %707 = vmatpush1.bf16.msra.mxu0 0
    %708 = vmatprep.subr.bf16.mxu0 0
    %709 = vmatpush1.bf16.msra.mxu0 0
    %710 = vmatprep.subr.bf16.mxu0 0
    %711 = vmatpush1.bf16.msra.mxu0 0
    %712 = vmatprep.subr.bf16.mxu0 0
    %713 = vmatpush1.bf16.msra.mxu0 0
    %714 = vmatprep.mubr.bf16.mxu0 0
    %715 = vmatmul.mubr.bf16.gmra.mrb[0].mxu0 %v594
    %v716 = vpop.f32.mrb[0].mxu0
    %v717 = vadd.f32 0.0, %v716
    %v718 = vpop.f32.mrb[0].mxu0
    %v719 = vpop.f32.mrb[0].mxu0
    %v720 = vadd.f32 0.0, %v719
    %v721 = vpop.f32.mrb[0].mxu0
    %722 = vdwg.mxu0
    %v723 = vld [vmem:[%s11] sm:$0x1]
    %v725 = vlaneseq
    %v726 = vshrl.u32 %v725, 7
    %v727 = vsub.s32 0, %v726
    %v728 = vrot.slane %v723, %v727
    %729 = vrot.lane.b32.xlu0 %v728, 64
    %v730 = vpop.permute.xlu0 %729
    %v732 = vadd.f32 %v631, %v730
    %v733 = vadd.f32 %v635, %v730
    %v734 = vmul.f32 %v631, %v631
    %v735 = vmul.f32 %v635, %v635
    %v736 = vld [vmem:[#allocation4] sm:$0xff]
    %v737 = vld [vmem:[#allocation4 + $0x8] sm:$0xff]
    %v738 = vld [vmem:[#allocation4 + $0x10] sm:$0xff]
    %v739 = vld [vmem:[#allocation4 + $0x18] sm:$0xff]
    %v740 = vld [vmem:[#allocation4 + $0x20] sm:$0xff]
    %v741 = vld [vmem:[#allocation4 + $0x28] sm:$0xff]
    %v742 = vld [vmem:[#allocation4 + $0x30] sm:$0xff]
    %v743 = vld [vmem:[#allocation4 + $0x38] sm:$0xff]
    %v745 = vsel %vm184, %v734, 0
    %v748 = vsel %vm184, %v735, 0
    %750 = vmatprep.subr.mxu0 0.0
    %751 = vmatpush1.msra.mxu0 %v736
    %752 = vmatprep.subr.mxu0 0.0
    %753 = vmatpush1.msra.mxu0 %v737
    %754 = vmatprep.subr.mxu0 0.0
    %755 = vmatpush1.msra.mxu0 %v738
    %756 = vmatprep.subr.mxu0 0.0
    %757 = vmatpush1.msra.mxu0 %v739
    %758 = vmatprep.subr.mxu0 0.0
    %759 = vmatpush1.msra.mxu0 %v740
    %760 = vmatprep.subr.mxu0 0.0
    %761 = vmatpush1.msra.mxu0 %v741
    %762 = vmatprep.subr.mxu0 0.0
    %763 = vmatpush1.msra.mxu0 %v742
    %764 = vmatprep.subr.mxu0 0.0
    %765 = vmatpush1.msra.mxu0 %v743
    %766 = vmatprep.subr.mxu0 0.0
    %767 = vmatpush1.msra.mxu0 0.0
    %768 = vmatprep.subr.mxu0 0.0
    %769 = vmatpush1.msra.mxu0 0.0
    %770 = vmatprep.subr.mxu0 0.0
    %771 = vmatpush1.msra.mxu0 0.0
    %772 = vmatprep.subr.mxu0 0.0
    %773 = vmatpush1.msra.mxu0 0.0
    %774 = vmatprep.subr.mxu0 0.0
    %775 = vmatpush1.msra.mxu0 0.0
    %776 = vmatprep.subr.mxu0 0.0
    %777 = vmatpush1.msra.mxu0 0.0
    %778 = vmatprep.subr.mxu0 0.0
    %779 = vmatpush1.msra.mxu0 0.0
    %780 = vmatprep.subr.mxu0 0.0
    %781 = vmatpush1.msra.mxu0 0.0
    %782 = vmatprep.subr.mxu0 0.0
    %783 = vmatpush1.msra.mxu0 0.0
    %784 = vmatprep.subr.mxu0 0.0
    %785 = vmatpush1.msra.mxu0 0.0
    %786 = vmatprep.subr.mxu0 0.0
    %787 = vmatpush1.msra.mxu0 0.0
    %788 = vmatprep.subr.mxu0 0.0
    %789 = vmatpush1.msra.mxu0 0.0
    %790 = vmatprep.subr.mxu0 0.0
    %791 = vmatpush1.msra.mxu0 0.0
    %792 = vmatprep.subr.mxu0 0.0
    %793 = vmatpush1.msra.mxu0 0.0
    %794 = vmatprep.subr.mxu0 0.0
    %795 = vmatpush1.msra.mxu0 0.0
    %796 = vmatprep.subr.mxu0 0.0
    %797 = vmatpush1.msra.mxu0 0.0
    %798 = vmatprep.subr.mxu0 0.0
    %799 = vmatpush1.msra.mxu0 0.0
    %800 = vmatprep.subr.mxu0 0.0
    %801 = vmatpush1.msra.mxu0 0.0
    %802 = vmatprep.subr.mxu0 0.0
    %803 = vmatpush1.msra.mxu0 0.0
    %804 = vmatprep.subr.mxu0 0.0
    %805 = vmatpush1.msra.mxu0 0.0
    %806 = vmatprep.subr.mxu0 0.0
    %807 = vmatpush1.msra.mxu0 0.0
    %808 = vmatprep.subr.mxu0 0.0
    %809 = vmatpush1.msra.mxu0 0.0
    %810 = vmatprep.subr.mxu0 0.0
    %811 = vmatpush1.msra.mxu0 0.0
    %812 = vmatprep.subr.mxu0 0.0
    %813 = vmatpush1.msra.mxu0 0.0
    %814 = vmatprep.mubr.f32.mxu0 0.0
    %815 = vmatmul.mubr.f32.gmra.mrb[0].mxu0 %v745
    %v816 = vpop.f32.mrb[0].mxu0
    %v817 = vadd.f32 0.0, %v816
    %v818 = vpop.f32.mrb[0].mxu0
    %819 = vmatprep.mubr.f32.mxu0 0.0
    %820 = vmatmul.mubr.f32.gmra.mrb[0].mxu0 %v748
    %v821 = vpop.f32.mrb[0].mxu0
    %v822 = vadd.f32 0.0, %v821
    %v823 = vpop.f32.mrb[0].mxu0
    %824 = vdwg.mxu0
    %v825 = vld [vmem:[%s9] sm:$0x1]
    %v826 = vmul.f32 %v817, %v817
    %v827 = vmul.f32 %v822, %v822
    %v828 = vadd.f32 %v826, 1e-16
    %v829 = vadd.f32 %v827, 1e-16
    %v830 = vrsqrt.pop %v828
    %v831 = vmul.f32 %v828, %v830
    %vm832 = vcmp.eq.f32.partialorder %v828, inf
    %v833 = vsel %vm832, %v828, %v831
    %vm834 = vcmp.eq.f32.partialorder %v828, 0.0
    %v835 = vand.u32 %v828, 2147483648
    %v836 = vsel %vm834, %v835, %v833
    %v837 = vrsqrt.pop %v829
    %v838 = vmul.f32 %v829, %v837
    %vm839 = vcmp.eq.f32.partialorder %v829, inf
    %v840 = vsel %vm839, %v829, %v838
    %vm841 = vcmp.eq.f32.partialorder %v829, 0.0
    %v842 = vand.u32 %v829, 2147483648
    %v843 = vsel %vm841, %v842, %v840
    %v844 = vrsqrt.pop %v836
    %v845 = vmul.f32 %v836, %v844
    %vm846 = vcmp.eq.f32.partialorder %v836, inf
    %v847 = vsel %vm846, %v836, %v845
    %vm848 = vcmp.eq.f32.partialorder %v836, 0.0
    %v849 = vand.u32 %v836, 2147483648
    %v850 = vsel %vm848, %v849, %v847
    %v851 = vrsqrt.pop %v843
    %v852 = vmul.f32 %v843, %v851
    %vm853 = vcmp.eq.f32.partialorder %v843, inf
    %v854 = vsel %vm853, %v843, %v852
    %vm855 = vcmp.eq.f32.partialorder %v843, 0.0
    %v856 = vand.u32 %v843, 2147483648
    %v857 = vsel %vm855, %v856, %v854
    %v858 = vsub.f32 %v850, 1.0
    %v859 = vsub.f32 %v857, 1.0
    %v861 = vlaneseq
    %v862 = vshrl.u32 %v861, 7
    %v863 = vsub.s32 0, %v862
    %v864 = vrot.slane %v825, %v863
    %v866 = vmul.f32 %v864, %v858
    %v867 = vmul.f32 %v864, %v859
    %v868 = vadd.f32 %v866, 1.000001
    %v869 = vadd.f32 %v867, 1.000001
    %v871 = vsel %vm121, %v868, 0
    %v874 = vsel %vm121, %v869, 0
    %876 = vmatprep.subr.mxu0 0.0
    %877 = vmatpush1.msra.mxu0 %v377
    %878 = vmatprep.subr.mxu0 0.0
    %879 = vmatpush1.msra.mxu0 %v378
    %880 = vmatprep.subr.mxu0 0.0
    %881 = vmatpush1.msra.mxu0 %v379
    %882 = vmatprep.subr.mxu0 0.0
    %883 = vmatpush1.msra.mxu0 %v380
    %884 = vmatprep.subr.mxu0 0.0
    %885 = vmatpush1.msra.mxu0 0.0
    %886 = vmatprep.subr.mxu0 0.0
    %887 = vmatpush1.msra.mxu0 0.0
    %888 = vmatprep.subr.mxu0 0.0
    %889 = vmatpush1.msra.mxu0 0.0
    %890 = vmatprep.subr.mxu0 0.0
    %891 = vmatpush1.msra.mxu0 0.0
    %892 = vmatprep.subr.mxu0 0.0
    %893 = vmatpush1.msra.mxu0 0.0
    %894 = vmatprep.subr.mxu0 0.0
    %895 = vmatpush1.msra.mxu0 0.0
    %896 = vmatprep.subr.mxu0 0.0
    %897 = vmatpush1.msra.mxu0 0.0
    %898 = vmatprep.subr.mxu0 0.0
    %899 = vmatpush1.msra.mxu0 0.0
    %900 = vmatprep.subr.mxu0 0.0
    %901 = vmatpush1.msra.mxu0 0.0
    %902 = vmatprep.subr.mxu0 0.0
    %903 = vmatpush1.msra.mxu0 0.0
    %904 = vmatprep.subr.mxu0 0.0
    %905 = vmatpush1.msra.mxu0 0.0
    %906 = vmatprep.subr.mxu0 0.0
    %907 = vmatpush1.msra.mxu0 0.0
    %908 = vmatprep.subr.mxu0 0.0
    %909 = vmatpush1.msra.mxu0 0.0
    %910 = vmatprep.subr.mxu0 0.0
    %911 = vmatpush1.msra.mxu0 0.0
    %912 = vmatprep.subr.mxu0 0.0
    %913 = vmatpush1.msra.mxu0 0.0
    %914 = vmatprep.subr.mxu0 0.0
    %915 = vmatpush1.msra.mxu0 0.0
    %916 = vmatprep.subr.mxu0 0.0
    %917 = vmatpush1.msra.mxu0 0.0
    %918 = vmatprep.subr.mxu0 0.0
    %919 = vmatpush1.msra.mxu0 0.0
    %920 = vmatprep.subr.mxu0 0.0
    %921 = vmatpush1.msra.mxu0 0.0
    %922 = vmatprep.subr.mxu0 0.0
    %923 = vmatpush1.msra.mxu0 0.0
    %924 = vmatprep.subr.mxu0 0.0
    %925 = vmatpush1.msra.mxu0 0.0
    %926 = vmatprep.subr.mxu0 0.0
    %927 = vmatpush1.msra.mxu0 0.0
    %928 = vmatprep.subr.mxu0 0.0
    %929 = vmatpush1.msra.mxu0 0.0
    %930 = vmatprep.subr.mxu0 0.0
    %931 = vmatpush1.msra.mxu0 0.0
    %932 = vmatprep.subr.mxu0 0.0
    %933 = vmatpush1.msra.mxu0 0.0
    %934 = vmatprep.subr.mxu0 0.0
    %935 = vmatpush1.msra.mxu0 0.0
    %936 = vmatprep.subr.mxu0 0.0
    %937 = vmatpush1.msra.mxu0 0.0
    %938 = vmatprep.subr.mxu0 0.0
    %939 = vmatpush1.msra.mxu0 0.0
    %940 = vmatprep.mubr.f32.mxu0 0.0
    %941 = vmatmul.mubr.f32.gmra.mrb[0].mxu0 %v871
    %v942 = vpop.f32.mrb[0].mxu0
    %v943 = vadd.f32 0.0, %v942
    %v944 = vpop.f32.mrb[0].mxu0
    %945 = vmatprep.mubr.f32.mxu0 0.0
    %946 = vmatmul.mubr.f32.gmra.mrb[0].mxu0 %v874
    %v947 = vpop.f32.mrb[0].mxu0
    %v948 = vadd.f32 0.0, %v947
    %v949 = vpop.f32.mrb[0].mxu0
    %950 = vdwg.mxu0
    %v951 = vrcp.pop %v943
    %v952 = vrcp.pop %v948
    %v953 = vmul.f32 %v631, %v951
    %v954 = vmul.f32 %v635, %v952
    %v955 = vpack.c.bf16 %v954, %v953
    %v956 = vld [vmem:[%s12] sm:$0xff]
    %v957 = vld [vmem:[%s12 + $0x8] sm:$0xff]
    %v958 = vld [vmem:[%s12 + $0x10] sm:$0xff]
    %v959 = vld [vmem:[%s12 + $0x18] sm:$0xff]
    %v960 = vld [vmem:[%s12 + $0x20] sm:$0xff]
    %v961 = vld [vmem:[%s12 + $0x28] sm:$0xff]
    %v962 = vld [vmem:[%s12 + $0x30] sm:$0xff]
    %v963 = vld [vmem:[%s12 + $0x38] sm:$0xff]
    %v964 = vld [vmem:[%s12 + $0x40] sm:$0xff]
    %v965 = vld [vmem:[%s12 + $0x48] sm:$0xff]
    %v966 = vld [vmem:[%s12 + $0x50] sm:$0xff]
    %v967 = vld [vmem:[%s12 + $0x58] sm:$0xff]
    %v968 = vld [vmem:[%s12 + $0x60] sm:$0xff]
    %v969 = vld [vmem:[%s12 + $0x68] sm:$0xff]
    %v970 = vld [vmem:[%s12 + $0x70] sm:$0xff]
    %v971 = vld [vmem:[%s12 + $0x78] sm:$0xff]
    %v988 = vunpack.c.l.b16 %v956
    %v989 = vunpack.c.h.b16 %v956
    %v990 = vunpack.c.l.b16 %v957
    %v991 = vunpack.c.h.b16 %v957
    %v992 = vunpack.c.l.b16 %v958
    %v993 = vunpack.c.h.b16 %v958
    %v994 = vunpack.c.l.b16 %v959
    %v995 = vunpack.c.h.b16 %v959
    %v996 = vunpack.c.l.b16 %v960
    %v997 = vunpack.c.h.b16 %v960
    %v998 = vunpack.c.l.b16 %v961
    %v999 = vunpack.c.h.b16 %v961
    %v1000 = vunpack.c.l.b16 %v962
    %v1001 = vunpack.c.h.b16 %v962
    %v1002 = vunpack.c.l.b16 %v963
    %v1003 = vunpack.c.h.b16 %v963
    %v1004 = vunpack.c.l.b16 %v964
    %v1005 = vunpack.c.h.b16 %v964
    %v1006 = vunpack.c.l.b16 %v965
    %v1007 = vunpack.c.h.b16 %v965
    %v1008 = vunpack.c.l.b16 %v966
    %v1009 = vunpack.c.h.b16 %v966
    %v1010 = vunpack.c.l.b16 %v967
    %v1011 = vunpack.c.h.b16 %v967
    %v1012 = vunpack.c.l.b16 %v968
    %v1013 = vunpack.c.h.b16 %v968
    %v1014 = vunpack.c.l.b16 %v969
    %v1015 = vunpack.c.h.b16 %v969
    %v1016 = vunpack.c.l.b16 %v970
    %v1017 = vunpack.c.h.b16 %v970
    %v1018 = vunpack.c.l.b16 %v971
    %v1019 = vunpack.c.h.b16 %v971
    %v1020 = vpack.c.b16 %v992, %v988
    %v1021 = vpack.c.b16 %v993, %v989
    %v1022 = vpack.c.b16 %v994, %v990
    %v1023 = vpack.c.b16 %v995, %v991
    %v1024 = vpack.c.b16 %v1000, %v996
    %v1025 = vpack.c.b16 %v1001, %v997
    %v1026 = vpack.c.b16 %v1002, %v998
    %v1027 = vpack.c.b16 %v1003, %v999
    %v1028 = vpack.c.b16 %v1008, %v1004
    %v1029 = vpack.c.b16 %v1009, %v1005
    %v1030 = vpack.c.b16 %v1010, %v1006
    %v1031 = vpack.c.b16 %v1011, %v1007
    %v1032 = vpack.c.b16 %v1016, %v1012
    %v1033 = vpack.c.b16 %v1017, %v1013
    %v1034 = vpack.c.b16 %v1018, %v1014
    %v1035 = vpack.c.b16 %v1019, %v1015
    %v1053 = vsel %vm184, %v955, 0
    %1055 = vmatprep.subr.bf16.mxu0 %v1021
    %1056 = vmatpush1.bf16.msra.mxu0 %v1020
    %1057 = vmatprep.subr.bf16.mxu0 %v1025
    %1058 = vmatpush1.bf16.msra.mxu0 %v1024
    %1059 = vmatprep.subr.bf16.mxu0 %v1029
    %1060 = vmatpush1.bf16.msra.mxu0 %v1028
    %1061 = vmatprep.subr.bf16.mxu0 %v1033
    %1062 = vmatpush1.bf16.msra.mxu0 %v1032
    %1063 = vmatprep.subr.bf16.mxu0 0
    %1064 = vmatpush1.bf16.msra.mxu0 0
    %1065 = vmatprep.subr.bf16.mxu0 0
    %1066 = vmatpush1.bf16.msra.mxu0 0
    %1067 = vmatprep.subr.bf16.mxu0 0
    %1068 = vmatpush1.bf16.msra.mxu0 0
    %1069 = vmatprep.subr.bf16.mxu0 0
    %1070 = vmatpush1.bf16.msra.mxu0 0
    %1071 = vmatprep.subr.bf16.mxu0 0
    %1072 = vmatpush1.bf16.msra.mxu0 0
    %1073 = vmatprep.subr.bf16.mxu0 0
    %1074 = vmatpush1.bf16.msra.mxu0 0
    %1075 = vmatprep.subr.bf16.mxu0 0
    %1076 = vmatpush1.bf16.msra.mxu0 0
    %1077 = vmatprep.subr.bf16.mxu0 0
    %1078 = vmatpush1.bf16.msra.mxu0 0
    %1079 = vmatprep.subr.bf16.mxu0 0
    %1080 = vmatpush1.bf16.msra.mxu0 0
    %1081 = vmatprep.subr.bf16.mxu0 0
    %1082 = vmatpush1.bf16.msra.mxu0 0
    %1083 = vmatprep.subr.bf16.mxu0 0
    %1084 = vmatpush1.bf16.msra.mxu0 0
    %1085 = vmatprep.subr.bf16.mxu0 0
    %1086 = vmatpush1.bf16.msra.mxu0 0
    %1087 = vmatprep.mubr.bf16.mxu0 0
    %1088 = vmatmul.mubr.bf16.gmra.mrb[0].mxu0 %v1053
    %v1089 = vpop.f32.mrb[0].mxu0
    %v1090 = vadd.f32 0.0, %v1089
    %v1091 = vpop.f32.mrb[0].mxu0
    %v1092 = vadd.f32 0.0, %v1091
    %v1093 = vpop.f32.mrb[0].mxu0
    %v1094 = vadd.f32 0.0, %v1093
    %v1095 = vpop.f32.mrb[0].mxu0
    %v1096 = vadd.f32 0.0, %v1095
    %1097 = vdwg.mxu0
    %1098 = vmatprep.subr.bf16.mxu0 %v1023
    %1099 = vmatpush1.bf16.msra.mxu0 %v1022
    %1100 = vmatprep.subr.bf16.mxu0 %v1027
    %1101 = vmatpush1.bf16.msra.mxu0 %v1026
    %1102 = vmatprep.subr.bf16.mxu0 %v1031
    %1103 = vmatpush1.bf16.msra.mxu0 %v1030
    %1104 = vmatprep.subr.bf16.mxu0 %v1035
    %1105 = vmatpush1.bf16.msra.mxu0 %v1034
    %1106 = vmatprep.subr.bf16.mxu0 0
    %1107 = vmatpush1.bf16.msra.mxu0 0
    %1108 = vmatprep.subr.bf16.mxu0 0
    %1109 = vmatpush1.bf16.msra.mxu0 0
    %1110 = vmatprep.subr.bf16.mxu0 0
    %1111 = vmatpush1.bf16.msra.mxu0 0
    %1112 = vmatprep.subr.bf16.mxu0 0
    %1113 = vmatpush1.bf16.msra.mxu0 0
    %1114 = vmatprep.subr.bf16.mxu0 0
    %1115 = vmatpush1.bf16.msra.mxu0 0
    %1116 = vmatprep.subr.bf16.mxu0 0
    %1117 = vmatpush1.bf16.msra.mxu0 0
    %1118 = vmatprep.subr.bf16.mxu0 0
    %1119 = vmatpush1.bf16.msra.mxu0 0
    %1120 = vmatprep.subr.bf16.mxu0 0
    %1121 = vmatpush1.bf16.msra.mxu0 0
    %1122 = vmatprep.subr.bf16.mxu0 0
    %1123 = vmatpush1.bf16.msra.mxu0 0
    %1124 = vmatprep.subr.bf16.mxu0 0
    %1125 = vmatpush1.bf16.msra.mxu0 0
    %1126 = vmatprep.subr.bf16.mxu0 0
    %1127 = vmatpush1.bf16.msra.mxu0 0
    %1128 = vmatprep.subr.bf16.mxu0 0
    %1129 = vmatpush1.bf16.msra.mxu0 0
    %1130 = vmatprep.mubr.bf16.mxu0 0
    %1131 = vmatmul.mubr.bf16.gmra.mrb[0].mxu0 %v1053
    %v1132 = vpop.f32.mrb[0].mxu0
    %v1133 = vadd.f32 0.0, %v1132
    %v1134 = vpop.f32.mrb[0].mxu0
    %v1135 = vadd.f32 0.0, %v1134
    %v1136 = vpop.f32.mrb[0].mxu0
    %v1137 = vadd.f32 0.0, %v1136
    %v1138 = vpop.f32.mrb[0].mxu0
    %v1139 = vadd.f32 0.0, %v1138
    %1140 = vdwg.mxu0
    %v1141 = vmul.f32 %v633, %v1090
    %v1142 = vmul.f32 %v674, %v1092
    %v1143 = vmul.f32 %v676, %v1133
    %v1144 = vmul.f32 %v717, %v1135
    %v1145 = vmul.f32 %v637, %v1094
    %v1146 = vmul.f32 %v678, %v1096
    %v1147 = vmul.f32 %v680, %v1137
    %v1148 = vmul.f32 %v720, %v1139
    %v1149 = vld [vmem:[%s13] sm:$0xff]
    %v1150 = vld [vmem:[%s13 + $0x8] sm:$0xff]
    %v1151 = vld [vmem:[%s13 + $0x10] sm:$0xff]
    %v1152 = vld [vmem:[%s13 + $0x18] sm:$0xff]
    %v1153 = vld [vmem:[%s13 + $0x20] sm:$0xff]
    %v1154 = vld [vmem:[%s13 + $0x28] sm:$0xff]
    %v1155 = vld [vmem:[%s13 + $0x30] sm:$0xff]
    %v1156 = vld [vmem:[%s13 + $0x38] sm:$0xff]
    %v1157 = vld [vmem:[%s13 + $0x40] sm:$0xff]
    %v1158 = vld [vmem:[%s13 + $0x48] sm:$0xff]
    %v1159 = vld [vmem:[%s13 + $0x50] sm:$0xff]
    %v1160 = vld [vmem:[%s13 + $0x58] sm:$0xff]
    %v1161 = vld [vmem:[%s13 + $0x60] sm:$0xff]
    %v1162 = vld [vmem:[%s13 + $0x68] sm:$0xff]
    %v1163 = vld [vmem:[%s13 + $0x70] sm:$0xff]
    %v1164 = vld [vmem:[%s13 + $0x78] sm:$0xff]
    %v1165 = vld [vmem:[%s13 + $0x80] sm:$0xff]
    %v1166 = vld [vmem:[%s13 + $0x88] sm:$0xff]
    %v1167 = vld [vmem:[%s13 + $0x90] sm:$0xff]
    %v1168 = vld [vmem:[%s13 + $0x98] sm:$0xff]
    %v1169 = vld [vmem:[%s13 + $0xa0] sm:$0xff]
    %v1170 = vld [vmem:[%s13 + $0xa8] sm:$0xff]
    %v1171 = vld [vmem:[%s13 + $0xb0] sm:$0xff]
    %v1172 = vld [vmem:[%s13 + $0xb8] sm:$0xff]
    %v1173 = vld [vmem:[%s13 + $0xc0] sm:$0xff]
    %v1174 = vld [vmem:[%s13 + $0xc8] sm:$0xff]
    %v1175 = vld [vmem:[%s13 + $0xd0] sm:$0xff]
    %v1176 = vld [vmem:[%s13 + $0xd8] sm:$0xff]
    %v1177 = vld [vmem:[%s13 + $0xe0] sm:$0xff]
    %v1178 = vld [vmem:[%s13 + $0xe8] sm:$0xff]
    %v1179 = vld [vmem:[%s13 + $0xf0] sm:$0xff]
    %v1180 = vld [vmem:[%s13 + $0xf8] sm:$0xff]
    %v1181 = vld [vmem:[%s13 + $0x100] sm:$0xff]
    %v1182 = vld [vmem:[%s13 + $0x108] sm:$0xff]
    %v1183 = vld [vmem:[%s13 + $0x110] sm:$0xff]
    %v1184 = vld [vmem:[%s13 + $0x118] sm:$0xff]
    %v1185 = vld [vmem:[%s13 + $0x120] sm:$0xff]
    %v1186 = vld [vmem:[%s13 + $0x128] sm:$0xff]
    %v1187 = vld [vmem:[%s13 + $0x130] sm:$0xff]
    %v1188 = vld [vmem:[%s13 + $0x138] sm:$0xff]
    %v1189 = vld [vmem:[%s13 + $0x140] sm:$0xff]
    %v1190 = vld [vmem:[%s13 + $0x148] sm:$0xff]
    %v1191 = vld [vmem:[%s13 + $0x150] sm:$0xff]
    %v1192 = vld [vmem:[%s13 + $0x158] sm:$0xff]
    %v1193 = vld [vmem:[%s13 + $0x160] sm:$0xff]
    %v1194 = vld [vmem:[%s13 + $0x168] sm:$0xff]
    %v1195 = vld [vmem:[%s13 + $0x170] sm:$0xff]
    %v1196 = vld [vmem:[%s13 + $0x178] sm:$0xff]
    %v1197 = vld [vmem:[%s13 + $0x180] sm:$0xff]
    %v1198 = vld [vmem:[%s13 + $0x188] sm:$0xff]
    %v1199 = vld [vmem:[%s13 + $0x190] sm:$0xff]
    %v1200 = vld [vmem:[%s13 + $0x198] sm:$0xff]
    %v1201 = vld [vmem:[%s13 + $0x1a0] sm:$0xff]
    %v1202 = vld [vmem:[%s13 + $0x1a8] sm:$0xff]
    %v1203 = vld [vmem:[%s13 + $0x1b0] sm:$0xff]
    %v1204 = vld [vmem:[%s13 + $0x1b8] sm:$0xff]
    %v1205 = vld [vmem:[%s13 + $0x1c0] sm:$0xff]
    %v1206 = vld [vmem:[%s13 + $0x1c8] sm:$0xff]
    %v1207 = vld [vmem:[%s13 + $0x1d0] sm:$0xff]
    %v1208 = vld [vmem:[%s13 + $0x1d8] sm:$0xff]
    %v1209 = vld [vmem:[%s13 + $0x1e0] sm:$0xff]
    %v1210 = vld [vmem:[%s13 + $0x1e8] sm:$0xff]
    %v1211 = vld [vmem:[%s13 + $0x1f0] sm:$0xff]
    %v1212 = vld [vmem:[%s13 + $0x1f8] sm:$0xff]
    %1213 = vmatprep.subr.mxu0 0.0
    %1214 = vmatpush1.msra.mxu0 %v1149
    %1215 = vmatprep.subr.mxu0 0.0
    %1216 = vmatpush1.msra.mxu0 %v1150
    %1217 = vmatprep.subr.mxu0 0.0
    %1218 = vmatpush1.msra.mxu0 %v1151
    %1219 = vmatprep.subr.mxu0 0.0
    %1220 = vmatpush1.msra.mxu0 %v1152
    %1221 = vmatprep.subr.mxu0 0.0
    %1222 = vmatpush1.msra.mxu0 %v1153
    %1223 = vmatprep.subr.mxu0 0.0
    %1224 = vmatpush1.msra.mxu0 %v1154
    %1225 = vmatprep.subr.mxu0 0.0
    %1226 = vmatpush1.msra.mxu0 %v1155
    %1227 = vmatprep.subr.mxu0 0.0
    %1228 = vmatpush1.msra.mxu0 %v1156
    %1229 = vmatprep.subr.mxu0 0.0
    %1230 = vmatpush1.msra.mxu0 %v1157
    %1231 = vmatprep.subr.mxu0 0.0
    %1232 = vmatpush1.msra.mxu0 %v1158
    %1233 = vmatprep.subr.mxu0 0.0
    %1234 = vmatpush1.msra.mxu0 %v1159
    %1235 = vmatprep.subr.mxu0 0.0
    %1236 = vmatpush1.msra.mxu0 %v1160
    %1237 = vmatprep.subr.mxu0 0.0
    %1238 = vmatpush1.msra.mxu0 %v1161
    %1239 = vmatprep.subr.mxu0 0.0
    %1240 = vmatpush1.msra.mxu0 %v1162
    %1241 = vmatprep.subr.mxu0 0.0
    %1242 = vmatpush1.msra.mxu0 %v1163
    %1243 = vmatprep.subr.mxu0 0.0
    %1244 = vmatpush1.msra.mxu0 %v1164
    %1245 = vmatprep.subr.mxu0 0.0
    %1246 = vmatpush1.msra.mxu0 %v1165
    %1247 = vmatprep.subr.mxu0 0.0
    %1248 = vmatpush1.msra.mxu0 %v1166
    %1249 = vmatprep.subr.mxu0 0.0
    %1250 = vmatpush1.msra.mxu0 %v1167
    %1251 = vmatprep.subr.mxu0 0.0
    %1252 = vmatpush1.msra.mxu0 %v1168
    %1253 = vmatprep.subr.mxu0 0.0
    %1254 = vmatpush1.msra.mxu0 %v1169
    %1255 = vmatprep.subr.mxu0 0.0
    %1256 = vmatpush1.msra.mxu0 %v1170
    %1257 = vmatprep.subr.mxu0 0.0
    %1258 = vmatpush1.msra.mxu0 %v1171
    %1259 = vmatprep.subr.mxu0 0.0
    %1260 = vmatpush1.msra.mxu0 %v1172
    %1261 = vmatprep.subr.mxu0 0.0
    %1262 = vmatpush1.msra.mxu0 %v1173
    %1263 = vmatprep.subr.mxu0 0.0
    %1264 = vmatpush1.msra.mxu0 %v1174
    %1265 = vmatprep.subr.mxu0 0.0
    %1266 = vmatpush1.msra.mxu0 %v1175
    %1267 = vmatprep.subr.mxu0 0.0
    %1268 = vmatpush1.msra.mxu0 %v1176
    %1269 = vmatprep.subr.mxu0 0.0
    %1270 = vmatpush1.msra.mxu0 %v1177
    %1271 = vmatprep.subr.mxu0 0.0
    %1272 = vmatpush1.msra.mxu0 %v1178
    %1273 = vmatprep.subr.mxu0 0.0
    %1274 = vmatpush1.msra.mxu0 %v1179
    %1275 = vmatprep.subr.mxu0 0.0
    %1276 = vmatpush1.msra.mxu0 %v1180
    %1277 = vmatprep.mubr.f32.mxu0 %v1142
    %1278 = vmatmul.mubr.f32.gmra.mrb[0].mxu0 %v1141
    %v1279 = vpop.f32.mrb[0].mxu0
    %v1280 = vadd.f32 0.0, %v1279
    %v1281 = vpop.f32.mrb[0].mxu0
    %1282 = vmatprep.mubr.f32.mxu0 %v1146
    %1283 = vmatmul.mubr.f32.gmra.mrb[0].mxu0 %v1145
    %v1284 = vpop.f32.mrb[0].mxu0
    %v1285 = vadd.f32 0.0, %v1284
    %v1286 = vpop.f32.mrb[0].mxu0
    %1287 = vdwg.mxu0
    %1288 = vmatprep.subr.mxu0 0.0
    %1289 = vmatpush1.msra.mxu0 %v1181
    %1290 = vmatprep.subr.mxu0 0.0
    %1291 = vmatpush1.msra.mxu0 %v1182
    %1292 = vmatprep.subr.mxu0 0.0
    %1293 = vmatpush1.msra.mxu0 %v1183
    %1294 = vmatprep.subr.mxu0 0.0
    %1295 = vmatpush1.msra.mxu0 %v1184
    %1296 = vmatprep.subr.mxu0 0.0
    %1297 = vmatpush1.msra.mxu0 %v1185
    %1298 = vmatprep.subr.mxu0 0.0
    %1299 = vmatpush1.msra.mxu0 %v1186
    %1300 = vmatprep.subr.mxu0 0.0
    %1301 = vmatpush1.msra.mxu0 %v1187
    %1302 = vmatprep.subr.mxu0 0.0
    %1303 = vmatpush1.msra.mxu0 %v1188
    %1304 = vmatprep.subr.mxu0 0.0
    %1305 = vmatpush1.msra.mxu0 %v1189
    %1306 = vmatprep.subr.mxu0 0.0
    %1307 = vmatpush1.msra.mxu0 %v1190
    %1308 = vmatprep.subr.mxu0 0.0
    %1309 = vmatpush1.msra.mxu0 %v1191
    %1310 = vmatprep.subr.mxu0 0.0
    %1311 = vmatpush1.msra.mxu0 %v1192
    %1312 = vmatprep.subr.mxu0 0.0
    %1313 = vmatpush1.msra.mxu0 %v1193
    %1314 = vmatprep.subr.mxu0 0.0
    %1315 = vmatpush1.msra.mxu0 %v1194
    %1316 = vmatprep.subr.mxu0 0.0
    %1317 = vmatpush1.msra.mxu0 %v1195
    %1318 = vmatprep.subr.mxu0 0.0
    %1319 = vmatpush1.msra.mxu0 %v1196
    %1320 = vmatprep.subr.mxu0 0.0
    %1321 = vmatpush1.msra.mxu0 %v1197
    %1322 = vmatprep.subr.mxu0 0.0
    %1323 = vmatpush1.msra.mxu0 %v1198
    %1324 = vmatprep.subr.mxu0 0.0
    %1325 = vmatpush1.msra.mxu0 %v1199
    %1326 = vmatprep.subr.mxu0 0.0
    %1327 = vmatpush1.msra.mxu0 %v1200
    %1328 = vmatprep.subr.mxu0 0.0
    %1329 = vmatpush1.msra.mxu0 %v1201
    %1330 = vmatprep.subr.mxu0 0.0
    %1331 = vmatpush1.msra.mxu0 %v1202
    %1332 = vmatprep.subr.mxu0 0.0
    %1333 = vmatpush1.msra.mxu0 %v1203
    %1334 = vmatprep.subr.mxu0 0.0
    %1335 = vmatpush1.msra.mxu0 %v1204
    %1336 = vmatprep.subr.mxu0 0.0
    %1337 = vmatpush1.msra.mxu0 %v1205
    %1338 = vmatprep.subr.mxu0 0.0
    %1339 = vmatpush1.msra.mxu0 %v1206
    %1340 = vmatprep.subr.mxu0 0.0
    %1341 = vmatpush1.msra.mxu0 %v1207
    %1342 = vmatprep.subr.mxu0 0.0
    %1343 = vmatpush1.msra.mxu0 %v1208
    %1344 = vmatprep.subr.mxu0 0.0
    %1345 = vmatpush1.msra.mxu0 %v1209
    %1346 = vmatprep.subr.mxu0 0.0
    %1347 = vmatpush1.msra.mxu0 %v1210
    %1348 = vmatprep.subr.mxu0 0.0
    %1349 = vmatpush1.msra.mxu0 %v1211
    %1350 = vmatprep.subr.mxu0 0.0
    %1351 = vmatpush1.msra.mxu0 %v1212
    %1352 = vmatprep.mubr.f32.mxu0 %v1144
    %1353 = vmatmul.mubr.f32.gmra.mrb[0].mxu0 %v1143
    %v1354 = vpop.f32.mrb[0].mxu0
    %v1355 = vadd.f32 %v1280, %v1354
    %v1356 = vpop.f32.mrb[0].mxu0
    %1357 = vmatprep.mubr.f32.mxu0 %v1148
    %1358 = vmatmul.mubr.f32.gmra.mrb[0].mxu0 %v1147
    %v1359 = vpop.f32.mrb[0].mxu0
    %v1360 = vadd.f32 %v1285, %v1359
    %v1361 = vpop.f32.mrb[0].mxu0
    %1362 = vdwg.mxu0
    %1365 = vrot.lane.b32.xlu0 %v1355, 64
    %v1366 = vpop.permute.xlu0 %1365
    %1367 = vrot.lane.b32.xlu0 %v1360, 64
    %v1368 = vpop.permute.xlu0 %1367
    %v1371 = vadd.f32 %v732, %v1366
    %v1372 = vadd.f32 %v733, %v1368
    %v1373 = vmul.f32 %v1371, 0.70710677
    %v1374 = vmul.f32 %v1372, 0.70710677
    %v1375 = vmul.f32 %v1373, %v1373
    %v1376 = vmul.f32 %v1374, %v1374
    %v1377 = vld [vmem:[#allocation6] sm:$0xff]
    %v1378 = vld [vmem:[#allocation6 + $0x8] sm:$0xff]
    %v1379 = vld [vmem:[#allocation6 + $0x10] sm:$0xff]
    %v1380 = vld [vmem:[#allocation6 + $0x18] sm:$0xff]
    %v1381 = vld [vmem:[#allocation6 + $0x20] sm:$0xff]
    %v1382 = vld [vmem:[#allocation6 + $0x28] sm:$0xff]
    %v1383 = vld [vmem:[#allocation6 + $0x30] sm:$0xff]
    %v1384 = vld [vmem:[#allocation6 + $0x38] sm:$0xff]
    %1387 = vrot.lane.b32.xlu0 %v1375, 64
    %v1388 = vpop.permute.xlu0 %1387
    %1389 = vrot.lane.b32.xlu0 %v1376, 64
    %v1390 = vpop.permute.xlu0 %1389
    %v1391 = vsel %vm184, %v1388, 0
    %v1393 = vsel %vm184, %v1390, 0
    %1395 = vmatprep.subr.mxu0 0.0
    %1396 = vmatpush1.msra.mxu0 %v1377
    %1397 = vmatprep.subr.mxu0 0.0
    %1398 = vmatpush1.msra.mxu0 %v1378
    %1399 = vmatprep.subr.mxu0 0.0
    %1400 = vmatpush1.msra.mxu0 %v1379
    %1401 = vmatprep.subr.mxu0 0.0
    %1402 = vmatpush1.msra.mxu0 %v1380
    %1403 = vmatprep.subr.mxu0 0.0
    %1404 = vmatpush1.msra.mxu0 %v1381
    %1405 = vmatprep.subr.mxu0 0.0
    %1406 = vmatpush1.msra.mxu0 %v1382
    %1407 = vmatprep.subr.mxu0 0.0
    %1408 = vmatpush1.msra.mxu0 %v1383
    %1409 = vmatprep.subr.mxu0 0.0
    %1410 = vmatpush1.msra.mxu0 %v1384
    %1411 = vmatprep.subr.mxu0 0.0
    %1412 = vmatpush1.msra.mxu0 0.0
    %1413 = vmatprep.subr.mxu0 0.0
    %1414 = vmatpush1.msra.mxu0 0.0
    %1415 = vmatprep.subr.mxu0 0.0
    %1416 = vmatpush1.msra.mxu0 0.0
    %1417 = vmatprep.subr.mxu0 0.0
    %1418 = vmatpush1.msra.mxu0 0.0
    %1419 = vmatprep.subr.mxu0 0.0
    %1420 = vmatpush1.msra.mxu0 0.0
    %1421 = vmatprep.subr.mxu0 0.0
    %1422 = vmatpush1.msra.mxu0 0.0
    %1423 = vmatprep.subr.mxu0 0.0
    %1424 = vmatpush1.msra.mxu0 0.0
    %1425 = vmatprep.subr.mxu0 0.0
    %1426 = vmatpush1.msra.mxu0 0.0
    %1427 = vmatprep.subr.mxu0 0.0
    %1428 = vmatpush1.msra.mxu0 0.0
    %1429 = vmatprep.subr.mxu0 0.0
    %1430 = vmatpush1.msra.mxu0 0.0
    %1431 = vmatprep.subr.mxu0 0.0
    %1432 = vmatpush1.msra.mxu0 0.0
    %1433 = vmatprep.subr.mxu0 0.0
    %1434 = vmatpush1.msra.mxu0 0.0
    %1435 = vmatprep.subr.mxu0 0.0
    %1436 = vmatpush1.msra.mxu0 0.0
    %1437 = vmatprep.subr.mxu0 0.0
    %1438 = vmatpush1.msra.mxu0 0.0
    %1439 = vmatprep.subr.mxu0 0.0
    %1440 = vmatpush1.msra.mxu0 0.0
    %1441 = vmatprep.subr.mxu0 0.0
    %1442 = vmatpush1.msra.mxu0 0.0
    %1443 = vmatprep.subr.mxu0 0.0
    %1444 = vmatpush1.msra.mxu0 0.0
    %1445 = vmatprep.subr.mxu0 0.0
    %1446 = vmatpush1.msra.mxu0 0.0
    %1447 = vmatprep.subr.mxu0 0.0
    %1448 = vmatpush1.msra.mxu0 0.0
    %1449 = vmatprep.subr.mxu0 0.0
    %1450 = vmatpush1.msra.mxu0 0.0
    %1451 = vmatprep.subr.mxu0 0.0
    %1452 = vmatpush1.msra.mxu0 0.0
    %1453 = vmatprep.subr.mxu0 0.0
    %1454 = vmatpush1.msra.mxu0 0.0
    %1455 = vmatprep.subr.mxu0 0.0
    %1456 = vmatpush1.msra.mxu0 0.0
    %1457 = vmatprep.subr.mxu0 0.0
    %1458 = vmatpush1.msra.mxu0 0.0
    %1459 = vmatprep.mubr.f32.mxu0 0.0
    %1460 = vmatmul.mubr.f32.gmra.mrb[0].mxu0 %v1391
    %v1461 = vpop.f32.mrb[0].mxu0
    %v1462 = vadd.f32 0.0, %v1461
    %v1463 = vpop.f32.mrb[0].mxu0
    %1464 = vmatprep.mubr.f32.mxu0 0.0
    %1465 = vmatmul.mubr.f32.gmra.mrb[0].mxu0 %v1393
    %v1466 = vpop.f32.mrb[0].mxu0
    %v1467 = vadd.f32 0.0, %v1466
    %v1468 = vpop.f32.mrb[0].mxu0
    %1469 = vdwg.mxu0
    %v1470 = vmul.f32 %v1462, %v1462
    %v1471 = vmul.f32 %v1467, %v1467
    %v1472 = vadd.f32 %v1470, 1e-16
    %v1473 = vadd.f32 %v1471, 1e-16
    %v1474 = vrsqrt.pop %v1472
    %v1475 = vmul.f32 %v1472, %v1474
    %vm1476 = vcmp.eq.f32.partialorder %v1472, inf
    %v1477 = vsel %vm1476, %v1472, %v1475
    %vm1478 = vcmp.eq.f32.partialorder %v1472, 0.0
    %v1479 = vand.u32 %v1472, 2147483648
    %v1480 = vsel %vm1478, %v1479, %v1477
    %v1481 = vrsqrt.pop %v1473
    %v1482 = vmul.f32 %v1473, %v1481
    %vm1483 = vcmp.eq.f32.partialorder %v1473, inf
    %v1484 = vsel %vm1483, %v1473, %v1482
    %vm1485 = vcmp.eq.f32.partialorder %v1473, 0.0
    %v1486 = vand.u32 %v1473, 2147483648
    %v1487 = vsel %vm1485, %v1486, %v1484
    %v1488 = vrsqrt.pop %v1480
    %v1489 = vmul.f32 %v1480, %v1488
    %vm1490 = vcmp.eq.f32.partialorder %v1480, inf
    %v1491 = vsel %vm1490, %v1480, %v1489
    %vm1492 = vcmp.eq.f32.partialorder %v1480, 0.0
    %v1493 = vand.u32 %v1480, 2147483648
    %v1494 = vsel %vm1492, %v1493, %v1491
    %v1495 = vrsqrt.pop %v1487
    %v1496 = vmul.f32 %v1487, %v1495
    %vm1497 = vcmp.eq.f32.partialorder %v1487, inf
    %v1498 = vsel %vm1497, %v1487, %v1496
    %vm1499 = vcmp.eq.f32.partialorder %v1487, 0.0
    %v1500 = vand.u32 %v1487, 2147483648
    %v1501 = vsel %vm1499, %v1500, %v1498
    %vm1502 = vcmask 64512
    %v1503 = vsel %vm1502, %v1494, 0.0
    %1504 = vadd.xlane.f32.xlu0 %v1503
    %v1505 = vpop.xlane.xlu0 %1504
    %v1506 = vsel %vm1502, %v1501, 0.0
    %1507 = vadd.xlane.f32.xlu0 %v1506
    %v1508 = vpop.xlane.xlu0 %1507
    %v1509 = vrcp.pop 8.0
    %v1510 = vmul.f32 %v1505, %v1509
    %v1511 = vmul.f32 %v1508, %v1509
    %v1512 = vadd.f32 %v1510, 1e-06
    %v1513 = vadd.f32 %v1511, 1e-06
    %v1514 = vld [vmem:[%s15] sm:$0x1]
    %v1516 = vlaneseq
    %v1517 = vshrl.u32 %v1516, 7
    %v1518 = vsub.s32 0, %v1517
    %v1519 = vrot.slane %v1514, %v1518
    %1523 = vrot.lane.b32.xlu0 %v1373, 64
    %v1524 = vpop.permute.xlu0 %1523
    %1525 = vrot.lane.b32.xlu0 %v1374, 64
    %v1526 = vpop.permute.xlu0 %1525
    %v1529 = vmul.f32 %v1519, %v1524
    %v1530 = vmul.f32 %v1519, %v1526
    %v1531 = vrcp.pop %v1512
    %v1532 = vrcp.pop %v1513
    %v1533 = vmul.f32 %v1529, %v1531
    %v1534 = vmul.f32 %v1530, %v1532
    %1535 = vst.msk [vmem:[%s16] sm:$0xff] %vm184, %v1533
    %1536 = vst.msk [vmem:[%s16 + $0x8] sm:$0xff] %vm184, %v1534
    // Predicated region
    $region78: #{cemlp_pallas.2} parent=1 // pred_check
      _
    $region79: #{cemlp_pallas.2} parent=1 // pred_check_branch
      %1538 = sbr.rel (0) target = $region81
    $region80: #{cemlp_pallas.2} parent=1 // pred_region
      _
    $region81: #{cemlp_pallas.2} parent=1 // pred_fallthru
      _
    // Predicated region
    $region82: #{cemlp_pallas.2} parent=1 // pred_check
      _
    $region83: #{cemlp_pallas.2} parent=1 // pred_check_branch
      %1540 = sbr.rel (0) target = $region85
    $region84: #{cemlp_pallas.2} parent=1 // pred_region
      _
    $region85: #{cemlp_pallas.2} parent=1 // pred_fallthru
      _
    %1541 = vsyncpa [#allocation3], 1
    %1542 = vsyncpa [#allocation5], 1

</llo_original>
